<compile_context>
chip_gen: v6e
topology: v6e:2x2x1
jax: 0.10.0
libtpu: 0.0.40
codegen_flags: <defaults>
</compile_context>

<pallas_src>
import functools

import jax
import jax.numpy as jnp
from jax import lax
from jax.experimental import pallas as pl
from jax.experimental.pallas import tpu as pltpu


def _tap_matmul(pieces, w_ref, mm_dtype, im2col):
    """Multiply T spatial taps by their stacked weights.

    pieces: T arrays of shape [Bt, Ho, Wo, K] (same K); w_ref: [T*K, N].
    Returns the f32 [Bt*Ho*Wo, N] result.

    im2col=True : lane-concatenate the taps -> ONE [M, T*K] @ [T*K, N] MXU dot.
    im2col=False: compatibility fallback (per-tap dots, same math) for Mosaic
                  builds lacking unaligned lane concatenation.
    """
    k = pieces[0].shape[-1]
    if im2col:
        p = jnp.concatenate(pieces, axis=-1)
        p = p.reshape(-1, len(pieces) * k)
        return jnp.dot(p.astype(mm_dtype), w_ref[...],
                       preferred_element_type=jnp.float32)
    acc = None
    for t, piece in enumerate(pieces):
        r = jnp.dot(piece.reshape(-1, k).astype(mm_dtype),
                    w_ref[t * k:(t + 1) * k, :],
                    preferred_element_type=jnp.float32)
        acc = r if acc is None else acc + r
    return acc


def _resd_kernel(x4_ref, xpool_ref, w1_ref, w2_ref, ws_ref, bs_ref, gamma_ref,
                 out_ref, pad_ref, *, im2col):
    """Processes `Bt` batch elements per grid step.

    x4_ref   : [Bt, Ho+1, Wo+1, 4*Cin]  phase-folded, zero-padded input (f32):
               x4[n, i, j, (2*qh+qw)*Cin + c] == x_pad[n, 2i+qh, 2j+qw, c]
    xpool_ref: [Bt, Ho*Wo, Cin]  2x2 average-pooled (unpadded) input (f32)
    w1_ref   : [16*Cin, Cout]  4x4/s2 conv weights, im2col row order (a,b,qh,qw,c)
    w2_ref   : [9*Cout, Cout]  3x3/s1 conv weights, im2col row order (kh,kw,c)
    ws_ref   : [Cin, Cout]     1x1 shortcut weight (identity if fin == fout)
    bs_ref   : [1, Cout]       shortcut bias       (zeros    if fin == fout)
    gamma_ref: [1, 1] SMEM     residual gain
    out_ref  : [Bt, Ho*Wo, Cout]
    pad_ref  : [Bt, Ho+2, Wo+2, Cout] f32 scratch (zero-padded conv2 input)
    """
    Bt, Hp1, Wp1, C4 = x4_ref.shape
    Ho, Wo = Hp1 - 1, Wp1 - 1
    Cin = C4 // 4
    Cout = out_ref.shape[-1]
    M = Bt * Ho * Wo
    mm_dtype = w1_ref.dtype            # f32, or bf16 for MXU-native operands

    x4 = x4_ref[...]                   # [Bt, Ho+1, Wo+1, 4*Cin]

    # ---- residual: Conv4x4/s2/p1 == 2x2/s1 conv on the phase-folded input;
    #      its 4 taps are unit-stride slices packed into one im2col matmul.
    p1 = [x4[:, a:a + Ho, b:b + Wo, :] for a in range(2) for b in range(2)]
    acc1 = _tap_matmul(p1, w1_ref, mm_dtype, im2col)           # [M, Cout] f32
    r1 = jnp.where(acc1 > 0, acc1, 0.2 * acc1)                 # LeakyReLU(0.2)

    # ---- stage r1 with a 1-pixel zero border for the 3x3 conv.  Only the
    #      border is zeroed; the interior is fully overwritten every step.
    zrow = jnp.zeros((Bt, 1, Wo + 2, Cout), pad_ref.dtype)
    zcol = jnp.zeros((Bt, Ho + 2, 1, Cout), pad_ref.dtype)
    pad_ref[:, 0:1, :, :] = zrow
    pad_ref[:, Ho + 1:Ho + 2, :, :] = zrow
    pad_ref[:, :, 0:1, :] = zcol
    pad_ref[:, :, Wo + 1:Wo + 2, :] = zcol
    pad_ref[:, 1:Ho + 1, 1:Wo + 1, :] = r1.reshape(Bt, Ho, Wo, Cout)

    # ---- residual: Conv3x3/s1/p1 as one im2col matmul (K = 9*Cout).
    p2 = [pad_ref[:, kh:kh + Ho, kw:kw + Wo, :]
          for kh in range(3) for kw in range(3)]
    acc2 = _tap_matmul(p2, w2_ref, mm_dtype, im2col)           # [M, Cout] f32
    r2 = jnp.where(acc2 > 0, acc2, 0.2 * acc2)                 # LeakyReLU(0.2)

    # ---- shortcut: avg_pool2d(2) then 1x1 conv (+ bias).  Pool and 1x1 conv
    #      commute; the pooled operand is prepared once in the wrapper.
    s = jnp.dot(xpool_ref[...].reshape(M, Cin).astype(mm_dtype), ws_ref[...],
                preferred_element_type=jnp.float32) + bs_ref[...]

    out = s + gamma_ref[0, 0] * r2
    out_ref[...] = out.reshape(Bt, Ho * Wo, Cout).astype(out_ref.dtype)


def resd_forward(x_nchw, w1, w2, ws, bs, gamma, *,
                 batch_tile=None, matmul_dtype=jnp.float32, im2col=True):
    """Pallas forward of resD (downsample=True).

    x_nchw: [B, Cin, H, W]; w1: [Cout, Cin, 4, 4]; w2: [Cout, Cout, 3, 3];
    ws: [Cout, Cin, 1, 1]; bs: [Cout]; gamma: scalar.
    (If fin == fout pass ws = identity and bs = zeros.)
    Returns [B, Cout, H//2, W//2] (NCHW, like the PyTorch module).
    """
    B, Cin, H, W = x_nchw.shape
    Cout = w1.shape[0]
    assert H % 2 == 0 and W % 2 == 0, "resD downsample path assumes even H, W"
    Ho, Wo = H // 2, W // 2

    # Batch elements per grid step: target an MXU M dim (Bt*Ho*Wo) >= 128.
    if batch_tile is None:
        target = max(1, -(-128 // (Ho * Wo)))
        batch_tile = 1
        for bt in range(min(B, target), 0, -1):
            if B % bt == 0:
                batch_tile = bt
                break
    assert B % batch_tile == 0, (B, batch_tile)
    Bt = batch_tile

    # ---- wrapper-side layout plumbing (runs once, outside the kernel) ------
    x = jnp.transpose(x_nchw, (0, 2, 3, 1)).astype(jnp.float32)       # NHWC
    xpad = jnp.pad(x, ((0, 0), (1, 1), (1, 1), (0, 0)))               # pad = 1
    # Phase fold: x4[n, i, j, (2*qh+qw)*Cin + c] = xpad[n, 2i+qh, 2j+qw, c]
    x4 = xpad.reshape(B, Ho + 1, 2, Wo + 1, 2, Cin)
    x4 = jnp.transpose(x4, (0, 1, 3, 2, 4, 5)).reshape(B, Ho + 1, Wo + 1, 4 * Cin)
    # Pooled shortcut operand (avg_pool2d commutes with the 1x1 conv).
    xpool = x.reshape(B, Ho, 2, Wo, 2, Cin).mean(axis=(2, 4))
    xpool = xpool.reshape(B, Ho * Wo, Cin)

    # Conv weights in stacked im2col layout (rows: tap-major, then channel);
    # matmul operands optionally bf16 (accumulation stays f32 in the kernel).
    w1c = jnp.transpose(w1, (2, 3, 1, 0)).reshape(2, 2, 2, 2, Cin, Cout)
    w1c = jnp.transpose(w1c, (0, 2, 1, 3, 4, 5))          # (a, b, qh, qw, c, o)
    w1c = w1c.reshape(16 * Cin, Cout).astype(matmul_dtype)
    w2c = jnp.transpose(w2, (2, 3, 1, 0)).reshape(9 * Cout, Cout).astype(matmul_dtype)
    wsc = jnp.transpose(ws[:, :, 0, 0], (1, 0)).astype(matmul_dtype)   # [Cin, Cout]
    bsc = bs.reshape(1, Cout).astype(jnp.float32)
    gk = jnp.asarray(gamma, jnp.float32).reshape(1, 1)

    out = pl.pallas_call(
        functools.partial(_resd_kernel, im2col=im2col),
        out_shape=jax.ShapeDtypeStruct((B, Ho * Wo, Cout), jnp.float32),
        grid_spec=pltpu.PrefetchScalarGridSpec(
            num_scalar_prefetch=0,
            grid=(B // Bt,),
            in_specs=[
                pl.BlockSpec((Bt, Ho + 1, Wo + 1, 4 * Cin),
                             lambda i: (i, 0, 0, 0)),                # activations
                pl.BlockSpec((Bt, Ho * Wo, Cin), lambda i: (i, 0, 0)),  # pooled x
                pl.BlockSpec((16 * Cin, Cout), lambda i: (0, 0)),    # w1 resident
                pl.BlockSpec((9 * Cout, Cout), lambda i: (0, 0)),    # w2 resident
                pl.BlockSpec((Cin, Cout), lambda i: (0, 0)),         # ws resident
                pl.BlockSpec((1, Cout), lambda i: (0, 0)),           # bias resident
                pl.BlockSpec(memory_space=pltpu.MemorySpace.SMEM),   # gamma scalar
            ],
            out_specs=pl.BlockSpec((Bt, Ho * Wo, Cout), lambda i: (i, 0, 0)),
            scratch_shapes=[
                pltpu.VMEM((Bt, Ho + 2, Wo + 2, Cout), jnp.float32)],
        ),
        compiler_params=pltpu.CompilerParams(
            dimension_semantics=("parallel",)),      # batch-parallel (megacore)
    )(x4, xpool, w1c, w2c, wsc, bsc, gk)

    out = out.reshape(B, Ho, Wo, Cout)               # layout plumbing in wrapper
    return jnp.transpose(out, (0, 3, 1, 2))          # back to NCHW


def resd_reference(x, w1, w2, ws, bs, gamma):
    """Pure-JAX (XLA conv) reference of resD.forward for correctness checks."""
    dn = ('NCHW', 'OIHW', 'NCHW')
    r = lax.conv_general_dilated(x, w1, window_strides=(2, 2),
                                 padding=((1, 1), (1, 1)), dimension_numbers=dn)
    r = jnp.where(r > 0, r, 0.2 * r)
    r = lax.conv_general_dilated(r, w2, window_strides=(1, 1),
                                 padding=((1, 1), (1, 1)), dimension_numbers=dn)
    r = jnp.where(r > 0, r, 0.2 * r)
    s = lax.conv_general_dilated(x, ws, window_strides=(1, 1),
                                 padding=((0, 0), (0, 0)), dimension_numbers=dn)
    s = s + bs[None, :, None, None]
    Bn, C, Hh, Ww = s.shape
    s = s.reshape(Bn, C, Hh // 2, 2, Ww // 2, 2).mean(axis=(3, 5))  # avg_pool2d(2)
    return s + gamma * r


if __name__ == "__main__":
    key = jax.random.PRNGKey(0)
    B, Cin, Cout, H, W = 2, 4, 8, 16, 16    # fin=4 != fout=8 -> learned shortcut

    k1, k2, k3, k4, k5 = jax.random.split(key, 5)
    x = jax.random.normal(k1, (B, Cin, H, W), dtype=jnp.float32)
    w1 = jax.random.normal(k2, (Cout, Cin, 4, 4), dtype=jnp.float32) * 0.1
    w2 = jax.random.normal(k3, (Cout, Cout, 3, 3), dtype=jnp.float32) * 0.1
    ws = jax.random.normal(k4, (Cout, Cin, 1, 1), dtype=jnp.float32) * 0.1
    bs = jax.random.normal(k5, (Cout,), dtype=jnp.float32) * 0.1
    # The module initializes gamma to 0 (residual branch gated off); use a
    # nonzero value so the residual path is actually exercised by the test.
    gamma = jnp.float32(0.7)

    ref = jax.block_until_ready(resd_reference(x, w1, w2, ws, bs, gamma))

    def run(**kw):
        fn = jax.jit(functools.partial(resd_forward, **kw))
        return jax.block_until_ready(fn(x, w1, w2, ws, bs, gamma))

    # Preferred path: one im2col matmul per conv.  Fall back to per-tap dots
    # only if this Mosaic build lacks unaligned lane concatenation.
    try:
        out = run()
        im2col = True
    except Exception:  # TODO(synk): drop once unaligned lane concat is universal
        im2col = False
        out = run(im2col=False)

    assert out.shape == (B, Cout, H // 2, W // 2), out.shape
    assert bool(jnp.all(jnp.isfinite(out)))
    err = float(jnp.max(jnp.abs(out - ref)))
    assert err < 1e-4, f"f32 mismatch vs XLA conv reference: {err}"

    # batch_tile=1 exercises the multi-step grid (pipelining / megacore) path.
    out_bt1 = run(batch_tile=1, im2col=im2col)
    err_bt1 = float(jnp.max(jnp.abs(out_bt1 - ref)))
    assert err_bt1 < 1e-4, f"batch_tile=1 mismatch: {err_bt1}"

    # bf16 MXU-operand variant (MXU is natively bf16); accumulation is f32, so
    # only operand-rounding error vs the f32 reference is expected.
    out_bf = run(matmul_dtype=jnp.bfloat16, im2col=im2col)
    err_bf = float(jnp.max(jnp.abs(out_bf - ref)))
    assert err_bf < 0.3, f"bf16 matmul-operand variant diverged: {err_bf}"

    print("KERNEL_OK")
</pallas_src>

<mosaic_0001>
module attributes {stable_mosaic.version = 11 : i64} {
  func.func @_resd_kernel(%arg0: i32, %arg1: memref<2x9x9x16xf32, #tpu.memory_space<vmem>>, %arg2: memref<2x64x4xf32, #tpu.memory_space<vmem>>, %arg3: memref<64x8xf32, #tpu.memory_space<vmem>>, %arg4: memref<72x8xf32, #tpu.memory_space<vmem>>, %arg5: memref<4x8xf32, #tpu.memory_space<vmem>>, %arg6: memref<1x8xf32, #tpu.memory_space<vmem>>, %arg7: memref<1x1xf32, #tpu.memory_space<smem>>, %arg8: memref<2x64x8xf32, #tpu.memory_space<vmem>>, %arg9: memref<2x10x10x8xf32, #tpu.memory_space<vmem>>) attributes {dimension_semantics = [#tpu.dimension_semantics<parallel>], iteration_bounds = array<i64: 1>, scalar_prefetch = 0 : i64, scratch_operands = 1 : i64, tpu.core_type = #tpu.core_type<tc>, window_params = [{transform_indices = @transform_0, window_bounds = array<i64: 2, 9, 9, 16>}, {transform_indices = @transform_1, window_bounds = array<i64: 2, 64, 4>}, {pipeline_mode = #tpu.pipeline_mode<synchronous>, transform_indices = @transform_2, window_bounds = array<i64: 64, 8>}, {pipeline_mode = #tpu.pipeline_mode<synchronous>, transform_indices = @transform_3, window_bounds = array<i64: 72, 8>}, {pipeline_mode = #tpu.pipeline_mode<synchronous>, transform_indices = @transform_4, window_bounds = array<i64: 4, 8>}, {pipeline_mode = #tpu.pipeline_mode<synchronous>, transform_indices = @transform_5, window_bounds = array<i64: 1, 8>}, {transform_indices = @transform_6, window_bounds = array<i64: 1, 1>}, {transform_indices = @transform_7, window_bounds = array<i64: 2, 64, 8>}]} {
    %c0 = arith.constant 0 : index
    %c0_0 = arith.constant 0 : index
    %c0_1 = arith.constant 0 : index
    %c0_2 = arith.constant 0 : index
    %0 = vector.load %arg1[%c0, %c0_0, %c0_1, %c0_2] : memref<2x9x9x16xf32, #tpu.memory_space<vmem>>, vector<2x9x9x16xf32>
    %1 = vector.extract_strided_slice %0 {offsets = [0, 0, 0, 0], sizes = [2, 8, 8, 16], strides = [1, 1, 1, 1]} : vector<2x9x9x16xf32> to vector<2x8x8x16xf32>
    %2 = vector.extract_strided_slice %0 {offsets = [0, 0, 1, 0], sizes = [2, 8, 8, 16], strides = [1, 1, 1, 1]} : vector<2x9x9x16xf32> to vector<2x8x8x16xf32>
    %3 = vector.extract_strided_slice %0 {offsets = [0, 1, 0, 0], sizes = [2, 8, 8, 16], strides = [1, 1, 1, 1]} : vector<2x9x9x16xf32> to vector<2x8x8x16xf32>
    %4 = vector.extract_strided_slice %0 {offsets = [0, 1, 1, 0], sizes = [2, 8, 8, 16], strides = [1, 1, 1, 1]} : vector<2x9x9x16xf32> to vector<2x8x8x16xf32>
    %5 = tpu.concatenate %1, %2, %3, %4 in 3 : vector<2x8x8x16xf32>, vector<2x8x8x16xf32>, vector<2x8x8x16xf32>, vector<2x8x8x16xf32> -> vector<2x8x8x64xf32>
    %6 = vector.shape_cast %5 : vector<2x8x8x64xf32> to vector<128x64xf32>
    %c0_3 = arith.constant 0 : index
    %c0_4 = arith.constant 0 : index
    %7 = vector.load %arg3[%c0_3, %c0_4] : memref<64x8xf32, #tpu.memory_space<vmem>>, vector<64x8xf32>
    %cst = arith.constant dense<0.000000e+00> : vector<128x8xf32>
    %8 = tpu.matmul %6, %7, %cst {dimension_numbers = #tpu.dot_dimension_numbers<[1], [0], [0], [1], [0, 0, 1, 1], [], []>} : vector<128x64xf32>, vector<64x8xf32>, vector<128x8xf32> -> vector<128x8xf32>
    %cst_5 = arith.constant 0.000000e+00 : f32
    %9 = vector.broadcast %cst_5 : f32 to vector<128x8xf32>
    %10 = arith.cmpf ogt, %8, %9 : vector<128x8xf32>
    %cst_6 = arith.constant 2.000000e-01 : f32
    %11 = vector.broadcast %cst_6 : f32 to vector<128x8xf32>
    %12 = arith.mulf %11, %8 : vector<128x8xf32>
    %13 = arith.select %10, %8, %12 : vector<128x8xi1>, vector<128x8xf32>
    %cst_7 = arith.constant 0.000000e+00 : f32
    %14 = vector.broadcast %cst_7 : f32 to vector<2x1x10x8xf32>
    %cst_8 = arith.constant 0.000000e+00 : f32
    %15 = vector.broadcast %cst_8 : f32 to vector<2x10x1x8xf32>
    %c0_9 = arith.constant 0 : index
    %c0_10 = arith.constant 0 : index
    %c0_11 = arith.constant 0 : index
    %c0_12 = arith.constant 0 : index
    %16 = vector.load %arg9[%c0_9, %c0_10, %c0_11, %c0_12] : memref<2x10x10x8xf32, #tpu.memory_space<vmem>>, vector<2x1x10x8xf32>
    tpu.vector_store %arg9[%c0_9, %c0_10, %c0_11, %c0_12], %14 {strides = array<i32>} : memref<2x10x10x8xf32, #tpu.memory_space<vmem>>, vector<2x1x10x8xf32>,
    %c0_13 = arith.constant 0 : index
    %c9 = arith.constant 9 : index
    %c0_14 = arith.constant 0 : index
    %c0_15 = arith.constant 0 : index
    %17 = vector.load %arg9[%c0_13, %c9, %c0_14, %c0_15] : memref<2x10x10x8xf32, #tpu.memory_space<vmem>>, vector<2x1x10x8xf32>
    tpu.vector_store %arg9[%c0_13, %c9, %c0_14, %c0_15], %14 {strides = array<i32>} : memref<2x10x10x8xf32, #tpu.memory_space<vmem>>, vector<2x1x10x8xf32>,
    %c0_16 = arith.constant 0 : index
    %c0_17 = arith.constant 0 : index
    %c0_18 = arith.constant 0 : index
    %c0_19 = arith.constant 0 : index
    %18 = vector.load %arg9[%c0_16, %c0_17, %c0_18, %c0_19] : memref<2x10x10x8xf32, #tpu.memory_space<vmem>>, vector<2x10x1x8xf32>
    tpu.vector_store %arg9[%c0_16, %c0_17, %c0_18, %c0_19], %15 {strides = array<i32>} : memref<2x10x10x8xf32, #tpu.memory_space<vmem>>, vector<2x10x1x8xf32>,
    %c0_20 = arith.constant 0 : index
    %c0_21 = arith.constant 0 : index
    %c9_22 = arith.constant 9 : index
    %c0_23 = arith.constant 0 : index
    %19 = vector.load %arg9[%c0_20, %c0_21, %c9_22, %c0_23] : memref<2x10x10x8xf32, #tpu.memory_space<vmem>>, vector<2x10x1x8xf32>
    tpu.vector_store %arg9[%c0_20, %c0_21, %c9_22, %c0_23], %15 {strides = array<i32>} : memref<2x10x10x8xf32, #tpu.memory_space<vmem>>, vector<2x10x1x8xf32>,
    %20 = vector.shape_cast %13 : vector<128x8xf32> to vector<2x8x8x8xf32>
    %c0_24 = arith.constant 0 : index
    %c1 = arith.constant 1 : index
    %c1_25 = arith.constant 1 : index
    %c0_26 = arith.constant 0 : index
    %21 = vector.load %arg9[%c0_24, %c1, %c1_25, %c0_26] : memref<2x10x10x8xf32, #tpu.memory_space<vmem>>, vector<2x8x8x8xf32>
    tpu.vector_store %arg9[%c0_24, %c1, %c1_25, %c0_26], %20 {strides = array<i32>} : memref<2x10x10x8xf32, #tpu.memory_space<vmem>>, vector<2x8x8x8xf32>,
    %c0_27 = arith.constant 0 : index
    %c0_28 = arith.constant 0 : index
    %c0_29 = arith.constant 0 : index
    %c0_30 = arith.constant 0 : index
    %22 = vector.load %arg9[%c0_27, %c0_28, %c0_29, %c0_30] : memref<2x10x10x8xf32, #tpu.memory_space<vmem>>, vector<2x8x8x8xf32>
    %c0_31 = arith.constant 0 : index
    %c0_32 = arith.constant 0 : index
    %c1_33 = arith.constant 1 : index
    %c0_34 = arith.constant 0 : index
    %23 = vector.load %arg9[%c0_31, %c0_32, %c1_33, %c0_34] : memref<2x10x10x8xf32, #tpu.memory_space<vmem>>, vector<2x8x8x8xf32>
    %c0_35 = arith.constant 0 : index
    %c0_36 = arith.constant 0 : index
    %c2 = arith.constant 2 : index
    %c0_37 = arith.constant 0 : index
    %24 = vector.load %arg9[%c0_35, %c0_36, %c2, %c0_37] : memref<2x10x10x8xf32, #tpu.memory_space<vmem>>, vector<2x8x8x8xf32>
    %c0_38 = arith.constant 0 : index
    %c1_39 = arith.constant 1 : index
    %c0_40 = arith.constant 0 : index
    %c0_41 = arith.constant 0 : index
    %25 = vector.load %arg9[%c0_38, %c1_39, %c0_40, %c0_41] : memref<2x10x10x8xf32, #tpu.memory_space<vmem>>, vector<2x8x8x8xf32>
    %c0_42 = arith.constant 0 : index
    %c1_43 = arith.constant 1 : index
    %c1_44 = arith.constant 1 : index
    %c0_45 = arith.constant 0 : index
    %26 = vector.load %arg9[%c0_42, %c1_43, %c1_44, %c0_45] : memref<2x10x10x8xf32, #tpu.memory_space<vmem>>, vector<2x8x8x8xf32>
    %c0_46 = arith.constant 0 : index
    %c1_47 = arith.constant 1 : index
    %c2_48 = arith.constant 2 : index
    %c0_49 = arith.constant 0 : index
    %27 = vector.load %arg9[%c0_46, %c1_47, %c2_48, %c0_49] : memref<2x10x10x8xf32, #tpu.memory_space<vmem>>, vector<2x8x8x8xf32>
    %c0_50 = arith.constant 0 : index
    %c2_51 = arith.constant 2 : index
    %c0_52 = arith.constant 0 : index
    %c0_53 = arith.constant 0 : index
    %28 = vector.load %arg9[%c0_50, %c2_51, %c0_52, %c0_53] : memref<2x10x10x8xf32, #tpu.memory_space<vmem>>, vector<2x8x8x8xf32>
    %c0_54 = arith.constant 0 : index
    %c2_55 = arith.constant 2 : index
    %c1_56 = arith.constant 1 : index
    %c0_57 = arith.constant 0 : index
    %29 = vector.load %arg9[%c0_54, %c2_55, %c1_56, %c0_57] : memref<2x10x10x8xf32, #tpu.memory_space<vmem>>, vector<2x8x8x8xf32>
    %c0_58 = arith.constant 0 : index
    %c2_59 = arith.constant 2 : index
    %c2_60 = arith.constant 2 : index
    %c0_61 = arith.constant 0 : index
    %30 = vector.load %arg9[%c0_58, %c2_59, %c2_60, %c0_61] : memref<2x10x10x8xf32, #tpu.memory_space<vmem>>, vector<2x8x8x8xf32>
    %31 = tpu.concatenate %22, %23, %24, %25, %26, %27, %28, %29, %30 in 3 : vector<2x8x8x8xf32>, vector<2x8x8x8xf32>, vector<2x8x8x8xf32>, vector<2x8x8x8xf32>, vector<2x8x8x8xf32>, vector<2x8x8x8xf32>, vector<2x8x8x8xf32>, vector<2x8x8x8xf32>, vector<2x8x8x8xf32> -> vector<2x8x8x72xf32>
    %32 = vector.shape_cast %31 : vector<2x8x8x72xf32> to vector<128x72xf32>
    %c0_62 = arith.constant 0 : index
    %c0_63 = arith.constant 0 : index
    %33 = vector.load %arg4[%c0_62, %c0_63] : memref<72x8xf32, #tpu.memory_space<vmem>>, vector<72x8xf32>
    %cst_64 = arith.constant dense<0.000000e+00> : vector<128x8xf32>
    %34 = tpu.matmul %32, %33, %cst_64 {dimension_numbers = #tpu.dot_dimension_numbers<[1], [0], [0], [1], [0, 0, 1, 1], [], []>} : vector<128x72xf32>, vector<72x8xf32>, vector<128x8xf32> -> vector<128x8xf32>
    %cst_65 = arith.constant 0.000000e+00 : f32
    %35 = vector.broadcast %cst_65 : f32 to vector<128x8xf32>
    %36 = arith.cmpf ogt, %34, %35 : vector<128x8xf32>
    %cst_66 = arith.constant 2.000000e-01 : f32
    %37 = vector.broadcast %cst_66 : f32 to vector<128x8xf32>
    %38 = arith.mulf %37, %34 : vector<128x8xf32>
    %39 = arith.select %36, %34, %38 : vector<128x8xi1>, vector<128x8xf32>
    %c0_67 = arith.constant 0 : index
    %c0_68 = arith.constant 0 : index
    %c0_69 = arith.constant 0 : index
    %40 = vector.load %arg2[%c0_67, %c0_68, %c0_69] : memref<2x64x4xf32, #tpu.memory_space<vmem>>, vector<2x64x4xf32>
    %41 = vector.shape_cast %40 : vector<2x64x4xf32> to vector<128x4xf32>
    %c0_70 = arith.constant 0 : index
    %c0_71 = arith.constant 0 : index
    %42 = vector.load %arg5[%c0_70, %c0_71] : memref<4x8xf32, #tpu.memory_space<vmem>>, vector<4x8xf32>
    %cst_72 = arith.constant dense<0.000000e+00> : vector<128x8xf32>
    %43 = tpu.matmul %41, %42, %cst_72 {dimension_numbers = #tpu.dot_dimension_numbers<[1], [0], [0], [1], [0, 0, 1, 1], [], []>} : vector<128x4xf32>, vector<4x8xf32>, vector<128x8xf32> -> vector<128x8xf32>
    %c0_73 = arith.constant 0 : index
    %c0_74 = arith.constant 0 : index
    %44 = vector.load %arg6[%c0_73, %c0_74] : memref<1x8xf32, #tpu.memory_space<vmem>>, vector<1x8xf32>
    %45 = vector.broadcast %44 : vector<1x8xf32> to vector<128x8xf32>
    %46 = arith.addf %43, %45 : vector<128x8xf32>
    %c0_75 = arith.constant 0 : index
    %c0_76 = arith.constant 0 : index
    %47 = memref.load %arg7[%c0_75, %c0_76] : memref<1x1xf32, #tpu.memory_space<smem>>
    %48 = vector.broadcast %47 : f32 to vector<128x8xf32>
    %49 = arith.mulf %48, %39 : vector<128x8xf32>
    %50 = arith.addf %46, %49 : vector<128x8xf32>
    %51 = vector.shape_cast %50 : vector<128x8xf32> to vector<2x64x8xf32>
    %c0_77 = arith.constant 0 : index
    %c0_78 = arith.constant 0 : index
    %c0_79 = arith.constant 0 : index
    %52 = vector.load %arg8[%c0_77, %c0_78, %c0_79] : memref<2x64x8xf32, #tpu.memory_space<vmem>>, vector<2x64x8xf32>
    tpu.vector_store %arg8[%c0_77, %c0_78, %c0_79], %51 {strides = array<i32>} : memref<2x64x8xf32, #tpu.memory_space<vmem>>, vector<2x64x8xf32>,
    return
  }
  func.func @transform_0(%arg0: i32) -> (i32, i32, i32, i32) {
    %c0_i32 = arith.constant 0 : i32
    %c0_i32_0 = arith.constant 0 : i32
    %c0_i32_1 = arith.constant 0 : i32
    %c0_i32_2 = arith.constant 0 : i32
    return %arg0, %c0_i32, %c0_i32_0, %c0_i32_1 : i32, i32, i32, i32
  }
  func.func @transform_1(%arg0: i32) -> (i32, i32, i32) {
    %c0_i32 = arith.constant 0 : i32
    %c0_i32_0 = arith.constant 0 : i32
    %c0_i32_1 = arith.constant 0 : i32
    return %arg0, %c0_i32, %c0_i32_0 : i32, i32, i32
  }
  func.func @transform_2(%arg0: i32) -> (i32, i32) {
    %c0_i32 = arith.constant 0 : i32
    %c0_i32_0 = arith.constant 0 : i32
    %c0_i32_1 = arith.constant 0 : i32
    return %c0_i32, %c0_i32_0 : i32, i32
  }
  func.func @transform_3(%arg0: i32) -> (i32, i32) {
    %c0_i32 = arith.constant 0 : i32
    %c0_i32_0 = arith.constant 0 : i32
    %c0_i32_1 = arith.constant 0 : i32
    return %c0_i32, %c0_i32_0 : i32, i32
  }
  func.func @transform_4(%arg0: i32) -> (i32, i32) {
    %c0_i32 = arith.constant 0 : i32
    %c0_i32_0 = arith.constant 0 : i32
    %c0_i32_1 = arith.constant 0 : i32
    return %c0_i32, %c0_i32_0 : i32, i32
  }
  func.func @transform_5(%arg0: i32) -> (i32, i32) {
    %c0_i32 = arith.constant 0 : i32
    %c0_i32_0 = arith.constant 0 : i32
    %c0_i32_1 = arith.constant 0 : i32
    return %c0_i32, %c0_i32_0 : i32, i32
  }
  func.func @transform_6(%arg0: i32) -> (i32, i32) {
    %c0_i32 = arith.constant 0 : i32
    %c0_i32_0 = arith.constant 0 : i32
    %c0_i32_1 = arith.constant 0 : i32
    return %c0_i32, %c0_i32_0 : i32, i32
  }
  func.func @transform_7(%arg0: i32) -> (i32, i32, i32) {
    %c0_i32 = arith.constant 0 : i32
    %c0_i32_0 = arith.constant 0 : i32
    %c0_i32_1 = arith.constant 0 : i32
    return %arg0, %c0_i32, %c0_i32_0 : i32, i32, i32
  }
}

module attributes {stable_mosaic.version = 11 : i64} {
  func.func @_resd_kernel(%arg0: i32, %arg1: memref<2x9x9x16xf32, #tpu.memory_space<vmem>>, %arg2: memref<2x64x4xf32, #tpu.memory_space<vmem>>, %arg3: memref<64x8xf32, #tpu.memory_space<vmem>>, %arg4: memref<72x8xf32, #tpu.memory_space<vmem>>, %arg5: memref<4x8xf32, #tpu.memory_space<vmem>>, %arg6: memref<1x8xf32, #tpu.memory_space<vmem>>, %arg7: memref<1x1xf32, #tpu.memory_space<smem>>, %arg8: memref<2x64x8xf32, #tpu.memory_space<vmem>>, %arg9: memref<2x10x10x8xf32, #tpu.memory_space<vmem>>) attributes {dimension_semantics = [#tpu.dimension_semantics<parallel>], iteration_bounds = array<i64: 1>, scalar_prefetch = 0 : i64, scratch_operands = 1 : i64, tpu.core_type = #tpu.core_type<tc>, window_params = [{transform_indices = @transform_0, window_bounds = array<i64: 2, 9, 9, 16>}, {transform_indices = @transform_1, window_bounds = array<i64: 2, 64, 4>}, {pipeline_mode = #tpu.pipeline_mode<synchronous>, transform_indices = @transform_2, window_bounds = array<i64: 64, 8>}, {pipeline_mode = #tpu.pipeline_mode<synchronous>, transform_indices = @transform_3, window_bounds = array<i64: 72, 8>}, {pipeline_mode = #tpu.pipeline_mode<synchronous>, transform_indices = @transform_4, window_bounds = array<i64: 4, 8>}, {pipeline_mode = #tpu.pipeline_mode<synchronous>, transform_indices = @transform_5, window_bounds = array<i64: 1, 8>}, {transform_indices = @transform_6, window_bounds = array<i64: 1, 1>}, {transform_indices = @transform_7, window_bounds = array<i64: 2, 64, 8>}]} {
    %c0 = arith.constant 0 : index
    %c0_0 = arith.constant 0 : index
    %c0_1 = arith.constant 0 : index
    %c0_2 = arith.constant 0 : index
    %0 = vector.load %arg1[%c0, %c0_0, %c0_1, %c0_2] : memref<2x9x9x16xf32, #tpu.memory_space<vmem>>, vector<2x9x9x16xf32>
    %1 = vector.extract_strided_slice %0 {offsets = [0, 0, 0, 0], sizes = [2, 8, 8, 16], strides = [1, 1, 1, 1]} : vector<2x9x9x16xf32> to vector<2x8x8x16xf32>
    %2 = vector.extract_strided_slice %0 {offsets = [0, 0, 1, 0], sizes = [2, 8, 8, 16], strides = [1, 1, 1, 1]} : vector<2x9x9x16xf32> to vector<2x8x8x16xf32>
    %3 = vector.extract_strided_slice %0 {offsets = [0, 1, 0, 0], sizes = [2, 8, 8, 16], strides = [1, 1, 1, 1]} : vector<2x9x9x16xf32> to vector<2x8x8x16xf32>
    %4 = vector.extract_strided_slice %0 {offsets = [0, 1, 1, 0], sizes = [2, 8, 8, 16], strides = [1, 1, 1, 1]} : vector<2x9x9x16xf32> to vector<2x8x8x16xf32>
    %5 = vector.shape_cast %1 : vector<2x8x8x16xf32> to vector<128x16xf32>
    %c0_3 = arith.constant 0 : index
    %c0_4 = arith.constant 0 : index
    %6 = vector.load %arg3[%c0_3, %c0_4] : memref<64x8xf32, #tpu.memory_space<vmem>>, vector<16x8xf32>
    %cst = arith.constant dense<0.000000e+00> : vector<128x8xf32>
    %7 = tpu.matmul %5, %6, %cst {dimension_numbers = #tpu.dot_dimension_numbers<[1], [0], [0], [1], [0, 0, 1, 1], [], []>} : vector<128x16xf32>, vector<16x8xf32>, vector<128x8xf32> -> vector<128x8xf32>
    %8 = vector.shape_cast %2 : vector<2x8x8x16xf32> to vector<128x16xf32>
    %c16 = arith.constant 16 : index
    %c0_5 = arith.constant 0 : index
    %9 = vector.load %arg3[%c16, %c0_5] : memref<64x8xf32, #tpu.memory_space<vmem>>, vector<16x8xf32>
    %cst_6 = arith.constant dense<0.000000e+00> : vector<128x8xf32>
    %10 = tpu.matmul %8, %9, %cst_6 {dimension_numbers = #tpu.dot_dimension_numbers<[1], [0], [0], [1], [0, 0, 1, 1], [], []>} : vector<128x16xf32>, vector<16x8xf32>, vector<128x8xf32> -> vector<128x8xf32>
    %11 = arith.addf %7, %10 : vector<128x8xf32>
    %12 = vector.shape_cast %3 : vector<2x8x8x16xf32> to vector<128x16xf32>
    %c32 = arith.constant 32 : index
    %c0_7 = arith.constant 0 : index
    %13 = vector.load %arg3[%c32, %c0_7] : memref<64x8xf32, #tpu.memory_space<vmem>>, vector<16x8xf32>
    %cst_8 = arith.constant dense<0.000000e+00> : vector<128x8xf32>
    %14 = tpu.matmul %12, %13, %cst_8 {dimension_numbers = #tpu.dot_dimension_numbers<[1], [0], [0], [1], [0, 0, 1, 1], [], []>} : vector<128x16xf32>, vector<16x8xf32>, vector<128x8xf32> -> vector<128x8xf32>
    %15 = arith.addf %11, %14 : vector<128x8xf32>
    %16 = vector.shape_cast %4 : vector<2x8x8x16xf32> to vector<128x16xf32>
    %c48 = arith.constant 48 : index
    %c0_9 = arith.constant 0 : index
    %17 = vector.load %arg3[%c48, %c0_9] : memref<64x8xf32, #tpu.memory_space<vmem>>, vector<16x8xf32>
    %cst_10 = arith.constant dense<0.000000e+00> : vector<128x8xf32>
    %18 = tpu.matmul %16, %17, %cst_10 {dimension_numbers = #tpu.dot_dimension_numbers<[1], [0], [0], [1], [0, 0, 1, 1], [], []>} : vector<128x16xf32>, vector<16x8xf32>, vector<128x8xf32> -> vector<128x8xf32>
    %19 = arith.addf %15, %18 : vector<128x8xf32>
    %cst_11 = arith.constant 0.000000e+00 : f32
    %20 = vector.broadcast %cst_11 : f32 to vector<128x8xf32>
    %21 = arith.cmpf ogt, %19, %20 : vector<128x8xf32>
    %cst_12 = arith.constant 2.000000e-01 : f32
    %22 = vector.broadcast %cst_12 : f32 to vector<128x8xf32>
    %23 = arith.mulf %22, %19 : vector<128x8xf32>
    %24 = arith.select %21, %19, %23 : vector<128x8xi1>, vector<128x8xf32>
    %cst_13 = arith.constant 0.000000e+00 : f32
    %25 = vector.broadcast %cst_13 : f32 to vector<2x1x10x8xf32>
    %cst_14 = arith.constant 0.000000e+00 : f32
    %26 = vector.broadcast %cst_14 : f32 to vector<2x10x1x8xf32>
    %c0_15 = arith.constant 0 : index
    %c0_16 = arith.constant 0 : index
    %c0_17 = arith.constant 0 : index
    %c0_18 = arith.constant 0 : index
    %27 = vector.load %arg9[%c0_15, %c0_16, %c0_17, %c0_18] : memref<2x10x10x8xf32, #tpu.memory_space<vmem>>, vector<2x1x10x8xf32>
    tpu.vector_store %arg9[%c0_15, %c0_16, %c0_17, %c0_18], %25 {strides = array<i32>} : memref<2x10x10x8xf32, #tpu.memory_space<vmem>>, vector<2x1x10x8xf32>,
    %c0_19 = arith.constant 0 : index
    %c9 = arith.constant 9 : index
    %c0_20 = arith.constant 0 : index
    %c0_21 = arith.constant 0 : index
    %28 = vector.load %arg9[%c0_19, %c9, %c0_20, %c0_21] : memref<2x10x10x8xf32, #tpu.memory_space<vmem>>, vector<2x1x10x8xf32>
    tpu.vector_store %arg9[%c0_19, %c9, %c0_20, %c0_21], %25 {strides = array<i32>} : memref<2x10x10x8xf32, #tpu.memory_space<vmem>>, vector<2x1x10x8xf32>,
    %c0_22 = arith.constant 0 : index
    %c0_23 = arith.constant 0 : index
    %c0_24 = arith.constant 0 : index
    %c0_25 = arith.constant 0 : index
    %29 = vector.load %arg9[%c0_22, %c0_23, %c0_24, %c0_25] : memref<2x10x10x8xf32, #tpu.memory_space<vmem>>, vector<2x10x1x8xf32>
    tpu.vector_store %arg9[%c0_22, %c0_23, %c0_24, %c0_25], %26 {strides = array<i32>} : memref<2x10x10x8xf32, #tpu.memory_space<vmem>>, vector<2x10x1x8xf32>,
    %c0_26 = arith.constant 0 : index
    %c0_27 = arith.constant 0 : index
    %c9_28 = arith.constant 9 : index
    %c0_29 = arith.constant 0 : index
    %30 = vector.load %arg9[%c0_26, %c0_27, %c9_28, %c0_29] : memref<2x10x10x8xf32, #tpu.memory_space<vmem>>, vector<2x10x1x8xf32>
    tpu.vector_store %arg9[%c0_26, %c0_27, %c9_28, %c0_29], %26 {strides = array<i32>} : memref<2x10x10x8xf32, #tpu.memory_space<vmem>>, vector<2x10x1x8xf32>,
    %31 = vector.shape_cast %24 : vector<128x8xf32> to vector<2x8x8x8xf32>
    %c0_30 = arith.constant 0 : index
    %c1 = arith.constant 1 : index
    %c1_31 = arith.constant 1 : index
    %c0_32 = arith.constant 0 : index
    %32 = vector.load %arg9[%c0_30, %c1, %c1_31, %c0_32] : memref<2x10x10x8xf32, #tpu.memory_space<vmem>>, vector<2x8x8x8xf32>
    tpu.vector_store %arg9[%c0_30, %c1, %c1_31, %c0_32], %31 {strides = array<i32>} : memref<2x10x10x8xf32, #tpu.memory_space<vmem>>, vector<2x8x8x8xf32>,
    %c0_33 = arith.constant 0 : index
    %c0_34 = arith.constant 0 : index
    %c0_35 = arith.constant 0 : index
    %c0_36 = arith.constant 0 : index
    %33 = vector.load %arg9[%c0_33, %c0_34, %c0_35, %c0_36] : memref<2x10x10x8xf32, #tpu.memory_space<vmem>>, vector<2x8x8x8xf32>
    %c0_37 = arith.constant 0 : index
    %c0_38 = arith.constant 0 : index
    %c1_39 = arith.constant 1 : index
    %c0_40 = arith.constant 0 : index
    %34 = vector.load %arg9[%c0_37, %c0_38, %c1_39, %c0_40] : memref<2x10x10x8xf32, #tpu.memory_space<vmem>>, vector<2x8x8x8xf32>
    %c0_41 = arith.constant 0 : index
    %c0_42 = arith.constant 0 : index
    %c2 = arith.constant 2 : index
    %c0_43 = arith.constant 0 : index
    %35 = vector.load %arg9[%c0_41, %c0_42, %c2, %c0_43] : memref<2x10x10x8xf32, #tpu.memory_space<vmem>>, vector<2x8x8x8xf32>
    %c0_44 = arith.constant 0 : index
    %c1_45 = arith.constant 1 : index
    %c0_46 = arith.constant 0 : index
    %c0_47 = arith.constant 0 : index
    %36 = vector.load %arg9[%c0_44, %c1_45, %c0_46, %c0_47] : memref<2x10x10x8xf32, #tpu.memory_space<vmem>>, vector<2x8x8x8xf32>
    %c0_48 = arith.constant 0 : index
    %c1_49 = arith.constant 1 : index
    %c1_50 = arith.constant 1 : index
    %c0_51 = arith.constant 0 : index
    %37 = vector.load %arg9[%c0_48, %c1_49, %c1_50, %c0_51] : memref<2x10x10x8xf32, #tpu.memory_space<vmem>>, vector<2x8x8x8xf32>
    %c0_52 = arith.constant 0 : index
    %c1_53 = arith.constant 1 : index
    %c2_54 = arith.constant 2 : index
    %c0_55 = arith.constant 0 : index
    %38 = vector.load %arg9[%c0_52, %c1_53, %c2_54, %c0_55] : memref<2x10x10x8xf32, #tpu.memory_space<vmem>>, vector<2x8x8x8xf32>
    %c0_56 = arith.constant 0 : index
    %c2_57 = arith.constant 2 : index
    %c0_58 = arith.constant 0 : index
    %c0_59 = arith.constant 0 : index
    %39 = vector.load %arg9[%c0_56, %c2_57, %c0_58, %c0_59] : memref<2x10x10x8xf32, #tpu.memory_space<vmem>>, vector<2x8x8x8xf32>
    %c0_60 = arith.constant 0 : index
    %c2_61 = arith.constant 2 : index
    %c1_62 = arith.constant 1 : index
    %c0_63 = arith.constant 0 : index
    %40 = vector.load %arg9[%c0_60, %c2_61, %c1_62, %c0_63] : memref<2x10x10x8xf32, #tpu.memory_space<vmem>>, vector<2x8x8x8xf32>
    %c0_64 = arith.constant 0 : index
    %c2_65 = arith.constant 2 : index
    %c2_66 = arith.constant 2 : index
    %c0_67 = arith.constant 0 : index
    %41 = vector.load %arg9[%c0_64, %c2_65, %c2_66, %c0_67] : memref<2x10x10x8xf32, #tpu.memory_space<vmem>>, vector<2x8x8x8xf32>
    %42 = vector.shape_cast %33 : vector<2x8x8x8xf32> to vector<128x8xf32>
    %c0_68 = arith.constant 0 : index
    %c0_69 = arith.constant 0 : index
    %43 = vector.load %arg4[%c0_68, %c0_69] : memref<72x8xf32, #tpu.memory_space<vmem>>, vector<8x8xf32>
    %cst_70 = arith.constant dense<0.000000e+00> : vector<128x8xf32>
    %44 = tpu.matmul %42, %43, %cst_70 {dimension_numbers = #tpu.dot_dimension_numbers<[1], [0], [0], [1], [0, 0, 1, 1], [], []>} : vector<128x8xf32>, vector<8x8xf32>, vector<128x8xf32> -> vector<128x8xf32>
    %45 = vector.shape_cast %34 : vector<2x8x8x8xf32> to vector<128x8xf32>
    %c8 = arith.constant 8 : index
    %c0_71 = arith.constant 0 : index
    %46 = vector.load %arg4[%c8, %c0_71] : memref<72x8xf32, #tpu.memory_space<vmem>>, vector<8x8xf32>
    %cst_72 = arith.constant dense<0.000000e+00> : vector<128x8xf32>
    %47 = tpu.matmul %45, %46, %cst_72 {dimension_numbers = #tpu.dot_dimension_numbers<[1], [0], [0], [1], [0, 0, 1, 1], [], []>} : vector<128x8xf32>, vector<8x8xf32>, vector<128x8xf32> -> vector<128x8xf32>
    %48 = arith.addf %44, %47 : vector<128x8xf32>
    %49 = vector.shape_cast %35 : vector<2x8x8x8xf32> to vector<128x8xf32>
    %c16_73 = arith.constant 16 : index
    %c0_74 = arith.constant 0 : index
    %50 = vector.load %arg4[%c16_73, %c0_74] : memref<72x8xf32, #tpu.memory_space<vmem>>, vector<8x8xf32>
    %cst_75 = arith.constant dense<0.000000e+00> : vector<128x8xf32>
    %51 = tpu.matmul %49, %50, %cst_75 {dimension_numbers = #tpu.dot_dimension_numbers<[1], [0], [0], [1], [0, 0, 1, 1], [], []>} : vector<128x8xf32>, vector<8x8xf32>, vector<128x8xf32> -> vector<128x8xf32>
    %52 = arith.addf %48, %51 : vector<128x8xf32>
    %53 = vector.shape_cast %36 : vector<2x8x8x8xf32> to vector<128x8xf32>
    %c24 = arith.constant 24 : index
    %c0_76 = arith.constant 0 : index
    %54 = vector.load %arg4[%c24, %c0_76] : memref<72x8xf32, #tpu.memory_space<vmem>>, vector<8x8xf32>
    %cst_77 = arith.constant dense<0.000000e+00> : vector<128x8xf32>
    %55 = tpu.matmul %53, %54, %cst_77 {dimension_numbers = #tpu.dot_dimension_numbers<[1], [0], [0], [1], [0, 0, 1, 1], [], []>} : vector<128x8xf32>, vector<8x8xf32>, vector<128x8xf32> -> vector<128x8xf32>
    %56 = arith.addf %52, %55 : vector<128x8xf32>
    %57 = vector.shape_cast %37 : vector<2x8x8x8xf32> to vector<128x8xf32>
    %c32_78 = arith.constant 32 : index
    %c0_79 = arith.constant 0 : index
    %58 = vector.load %arg4[%c32_78, %c0_79] : memref<72x8xf32, #tpu.memory_space<vmem>>, vector<8x8xf32>
    %cst_80 = arith.constant dense<0.000000e+00> : vector<128x8xf32>
    %59 = tpu.matmul %57, %58, %cst_80 {dimension_numbers = #tpu.dot_dimension_numbers<[1], [0], [0], [1], [0, 0, 1, 1], [], []>} : vector<128x8xf32>, vector<8x8xf32>, vector<128x8xf32> -> vector<128x8xf32>
    %60 = arith.addf %56, %59 : vector<128x8xf32>
    %61 = vector.shape_cast %38 : vector<2x8x8x8xf32> to vector<128x8xf32>
    %c40 = arith.constant 40 : index
    %c0_81 = arith.constant 0 : index
    %62 = vector.load %arg4[%c40, %c0_81] : memref<72x8xf32, #tpu.memory_space<vmem>>, vector<8x8xf32>
    %cst_82 = arith.constant dense<0.000000e+00> : vector<128x8xf32>
    %63 = tpu.matmul %61, %62, %cst_82 {dimension_numbers = #tpu.dot_dimension_numbers<[1], [0], [0], [1], [0, 0, 1, 1], [], []>} : vector<128x8xf32>, vector<8x8xf32>, vector<128x8xf32> -> vector<128x8xf32>
    %64 = arith.addf %60, %63 : vector<128x8xf32>
    %65 = vector.shape_cast %39 : vector<2x8x8x8xf32> to vector<128x8xf32>
    %c48_83 = arith.constant 48 : index
    %c0_84 = arith.constant 0 : index
    %66 = vector.load %arg4[%c48_83, %c0_84] : memref<72x8xf32, #tpu.memory_space<vmem>>, vector<8x8xf32>
    %cst_85 = arith.constant dense<0.000000e+00> : vector<128x8xf32>
    %67 = tpu.matmul %65, %66, %cst_85 {dimension_numbers = #tpu.dot_dimension_numbers<[1], [0], [0], [1], [0, 0, 1, 1], [], []>} : vector<128x8xf32>, vector<8x8xf32>, vector<128x8xf32> -> vector<128x8xf32>
    %68 = arith.addf %64, %67 : vector<128x8xf32>
    %69 = vector.shape_cast %40 : vector<2x8x8x8xf32> to vector<128x8xf32>
    %c56 = arith.constant 56 : index
    %c0_86 = arith.constant 0 : index
    %70 = vector.load %arg4[%c56, %c0_86] : memref<72x8xf32, #tpu.memory_space<vmem>>, vector<8x8xf32>
    %cst_87 = arith.constant dense<0.000000e+00> : vector<128x8xf32>
    %71 = tpu.matmul %69, %70, %cst_87 {dimension_numbers = #tpu.dot_dimension_numbers<[1], [0], [0], [1], [0, 0, 1, 1], [], []>} : vector<128x8xf32>, vector<8x8xf32>, vector<128x8xf32> -> vector<128x8xf32>
    %72 = arith.addf %68, %71 : vector<128x8xf32>
    %73 = vector.shape_cast %41 : vector<2x8x8x8xf32> to vector<128x8xf32>
    %c64 = arith.constant 64 : index
    %c0_88 = arith.constant 0 : index
    %74 = vector.load %arg4[%c64, %c0_88] : memref<72x8xf32, #tpu.memory_space<vmem>>, vector<8x8xf32>
    %cst_89 = arith.constant dense<0.000000e+00> : vector<128x8xf32>
    %75 = tpu.matmul %73, %74, %cst_89 {dimension_numbers = #tpu.dot_dimension_numbers<[1], [0], [0], [1], [0, 0, 1, 1], [], []>} : vector<128x8xf32>, vector<8x8xf32>, vector<128x8xf32> -> vector<128x8xf32>
    %76 = arith.addf %72, %75 : vector<128x8xf32>
    %cst_90 = arith.constant 0.000000e+00 : f32
    %77 = vector.broadcast %cst_90 : f32 to vector<128x8xf32>
    %78 = arith.cmpf ogt, %76, %77 : vector<128x8xf32>
    %cst_91 = arith.constant 2.000000e-01 : f32
    %79 = vector.broadcast %cst_91 : f32 to vector<128x8xf32>
    %80 = arith.mulf %79, %76 : vector<128x8xf32>
    %81 = arith.select %78, %76, %80 : vector<128x8xi1>, vector<128x8xf32>
    %c0_92 = arith.constant 0 : index
    %c0_93 = arith.constant 0 : index
    %c0_94 = arith.constant 0 : index
    %82 = vector.load %arg2[%c0_92, %c0_93, %c0_94] : memref<2x64x4xf32, #tpu.memory_space<vmem>>, vector<2x64x4xf32>
    %83 = vector.shape_cast %82 : vector<2x64x4xf32> to vector<128x4xf32>
    %c0_95 = arith.constant 0 : index
    %c0_96 = arith.constant 0 : index
    %84 = vector.load %arg5[%c0_95, %c0_96] : memref<4x8xf32, #tpu.memory_space<vmem>>, vector<4x8xf32>
    %cst_97 = arith.constant dense<0.000000e+00> : vector<128x8xf32>
    %85 = tpu.matmul %83, %84, %cst_97 {dimension_numbers = #tpu.dot_dimension_numbers<[1], [0], [0], [1], [0, 0, 1, 1], [], []>} : vector<128x4xf32>, vector<4x8xf32>, vector<128x8xf32> -> vector<128x8xf32>
    %c0_98 = arith.constant 0 : index
    %c0_99 = arith.constant 0 : index
    %86 = vector.load %arg6[%c0_98, %c0_99] : memref<1x8xf32, #tpu.memory_space<vmem>>, vector<1x8xf32>
    %87 = vector.broadcast %86 : vector<1x8xf32> to vector<128x8xf32>
    %88 = arith.addf %85, %87 : vector<128x8xf32>
    %c0_100 = arith.constant 0 : index
    %c0_101 = arith.constant 0 : index
    %89 = memref.load %arg7[%c0_100, %c0_101] : memref<1x1xf32, #tpu.memory_space<smem>>
    %90 = vector.broadcast %89 : f32 to vector<128x8xf32>
    %91 = arith.mulf %90, %81 : vector<128x8xf32>
    %92 = arith.addf %88, %91 : vector<128x8xf32>
    %93 = vector.shape_cast %92 : vector<128x8xf32> to vector<2x64x8xf32>
    %c0_102 = arith.constant 0 : index
    %c0_103 = arith.constant 0 : index
    %c0_104 = arith.constant 0 : index
    %94 = vector.load %arg8[%c0_102, %c0_103, %c0_104] : memref<2x64x8xf32, #tpu.memory_space<vmem>>, vector<2x64x8xf32>
    tpu.vector_store %arg8[%c0_102, %c0_103, %c0_104], %93 {strides = array<i32>} : memref<2x64x8xf32, #tpu.memory_space<vmem>>, vector<2x64x8xf32>,
    return
  }
  func.func @transform_0(%arg0: i32) -> (i32, i32, i32, i32) {
    %c0_i32 = arith.constant 0 : i32
    %c0_i32_0 = arith.constant 0 : i32
    %c0_i32_1 = arith.constant 0 : i32
    %c0_i32_2 = arith.constant 0 : i32
    return %arg0, %c0_i32, %c0_i32_0, %c0_i32_1 : i32, i32, i32, i32
  }
  func.func @transform_1(%arg0: i32) -> (i32, i32, i32) {
    %c0_i32 = arith.constant 0 : i32
    %c0_i32_0 = arith.constant 0 : i32
    %c0_i32_1 = arith.constant 0 : i32
    return %arg0, %c0_i32, %c0_i32_0 : i32, i32, i32
  }
  func.func @transform_2(%arg0: i32) -> (i32, i32) {
    %c0_i32 = arith.constant 0 : i32
    %c0_i32_0 = arith.constant 0 : i32
    %c0_i32_1 = arith.constant 0 : i32
    return %c0_i32, %c0_i32_0 : i32, i32
  }
  func.func @transform_3(%arg0: i32) -> (i32, i32) {
    %c0_i32 = arith.constant 0 : i32
    %c0_i32_0 = arith.constant 0 : i32
    %c0_i32_1 = arith.constant 0 : i32
    return %c0_i32, %c0_i32_0 : i32, i32
  }
  func.func @transform_4(%arg0: i32) -> (i32, i32) {
    %c0_i32 = arith.constant 0 : i32
    %c0_i32_0 = arith.constant 0 : i32
    %c0_i32_1 = arith.constant 0 : i32
    return %c0_i32, %c0_i32_0 : i32, i32
  }
  func.func @transform_5(%arg0: i32) -> (i32, i32) {
    %c0_i32 = arith.constant 0 : i32
    %c0_i32_0 = arith.constant 0 : i32
    %c0_i32_1 = arith.constant 0 : i32
    return %c0_i32, %c0_i32_0 : i32, i32
  }
  func.func @transform_6(%arg0: i32) -> (i32, i32) {
    %c0_i32 = arith.constant 0 : i32
    %c0_i32_0 = arith.constant 0 : i32
    %c0_i32_1 = arith.constant 0 : i32
    return %c0_i32, %c0_i32_0 : i32, i32
  }
  func.func @transform_7(%arg0: i32) -> (i32, i32, i32) {
    %c0_i32 = arith.constant 0 : i32
    %c0_i32_0 = arith.constant 0 : i32
    %c0_i32_1 = arith.constant 0 : i32
    return %arg0, %c0_i32, %c0_i32_0 : i32, i32, i32
  }
}

</mosaic_0001>

<llo_original>
// kernel: resd_forward.1
$region0: #{resd_forward.1}
  #allocation0 [shape = 'u32[]', space=smem, size = 0x4, offset = 0x4, fixed_abs, tag = 'smem constant byte address 0x4 - core index']
  #allocation1 [shape = 'u32[144,128]{1,0:T(1,128)}', space=vmem, size = 0x12000, scoped, tag = 'internal scratch']
  #allocation2 [shape = 'f32[2,10,10,8]{3,2,1,0:T(8,128)}', space=vmem, size = 0x28000, scoped, tag = 'scratch operand']
  #allocation3 [shape = 'f32[1,1]{1,0:T(1,128)S(6)}', space=smem, size = 0x200, scoped, tag = 'scoped memory for resd_forward.1']
  %s0 = inlined_call_operand.vmem [shape: f32[2,9,9,16], index: 0, kind: input, shape index: {}]
  %s1 = inlined_call_operand.vmem [shape: f32[2,64,4], index: 1, kind: input, shape index: {}]
  %s2 = inlined_call_operand.vmem [shape: f32[64,8], index: 2, kind: input, shape index: {}]
  %s3 = inlined_call_operand.vmem [shape: f32[72,8], index: 3, kind: input, shape index: {}]
  %s4 = inlined_call_operand.vmem [shape: f32[4,8], index: 4, kind: input, shape index: {}]
  %s5 = inlined_call_operand.vmem [shape: f32[1,8], index: 5, kind: input, shape index: {}]
  %s6 = inlined_call_operand.<no memory space> [shape: f32[1,1], index: 6, kind: input, shape index: {}]
  %s7 = inlined_call_operand.vmem [shape: f32[2,64,8], index: 7, kind: output, shape index: {}]
  %s8 = sld [smem:[#allocation0]]
  $region38: #{resd_forward.1} parent=0
    _
  %s10 = ssub.s32 1, %s8
  %s11 = scalar_select 0, %s10, %s8
  %12 = sst [smem:[#allocation3]] %s6
  // Predicated region
  $region2: #{resd_forward.1} parent=0 // pred_check
    _
  $region3: #{resd_forward.1} parent=0 // pred_check_branch
    %14 = sbr.rel (0) target = $region5
  $region4: #{resd_forward.1} parent=0 // pred_region
    _
  $region5: #{resd_forward.1} parent=0 // pred_fallthru
    _
  // Predicated region
  $region6: #{resd_forward.1} parent=0 // pred_check
    _
  $region7: #{resd_forward.1} parent=0 // pred_check_branch
    %16 = sbr.rel (0) target = $region9
  $region8: #{resd_forward.1} parent=0 // pred_region
    _
  $region9: #{resd_forward.1} parent=0 // pred_fallthru
    _
  // Predicated region
  $region10: #{resd_forward.1} parent=0 // pred_check
    _
  $region11: #{resd_forward.1} parent=0 // pred_check_branch
    %18 = sbr.rel (0) target = $region13
  $region12: #{resd_forward.1} parent=0 // pred_region
    _
  $region13: #{resd_forward.1} parent=0 // pred_fallthru
    _
  // Predicated region
  $region14: #{resd_forward.1} parent=0 // pred_check
    _
  $region15: #{resd_forward.1} parent=0 // pred_check_branch
    %20 = sbr.rel (0) target = $region17
  $region16: #{resd_forward.1} parent=0 // pred_region
    _
  $region17: #{resd_forward.1} parent=0 // pred_fallthru
    _
  // Predicated region
  $region18: #{resd_forward.1} parent=0 // pred_check
    _
  $region19: #{resd_forward.1} parent=0 // pred_check_branch
    %22 = sbr.rel (0) target = $region21
  $region20: #{resd_forward.1} parent=0 // pred_region
    _
  $region21: #{resd_forward.1} parent=0 // pred_fallthru
    _
  // Predicated region
  $region22: #{resd_forward.1} parent=0 // pred_check
    _
  $region23: #{resd_forward.1} parent=0 // pred_check_branch
    %24 = sbr.rel (0) target = $region25
  $region24: #{resd_forward.1} parent=0 // pred_region
    _
  $region25: #{resd_forward.1} parent=0 // pred_fallthru
    _
  // Predicated region
  $region26: #{resd_forward.1} parent=0 // pred_check
    _
  $region27: #{resd_forward.1} parent=0 // pred_check_branch
    %26 = sbr.rel (0) target = $region29
  $region28: #{resd_forward.1} parent=0 // pred_region
    _
  $region29: #{resd_forward.1} parent=0 // pred_fallthru
    _
  %v27 = vld [vmem:[%s0] sm:$0xff]
  %v28 = vld [vmem:[%s0 + $0x8] sm:$0x1]
  %v29 = vld [vmem:[%s0 + $0x10] sm:$0xff]
  %v30 = vld [vmem:[%s0 + $0x18] sm:$0x1]
  %v31 = vld [vmem:[%s0 + $0x20] sm:$0xff]
  %v32 = vld [vmem:[%s0 + $0x28] sm:$0x1]
  %v33 = vld [vmem:[%s0 + $0x30] sm:$0xff]
  %v34 = vld [vmem:[%s0 + $0x38] sm:$0x1]
  %v35 = vld [vmem:[%s0 + $0x40] sm:$0xff]
  %v36 = vld [vmem:[%s0 + $0x48] sm:$0x1]
  %v37 = vld [vmem:[%s0 + $0x50] sm:$0xff]
  %v38 = vld [vmem:[%s0 + $0x58] sm:$0x1]
  %v39 = vld [vmem:[%s0 + $0x60] sm:$0xff]
  %v40 = vld [vmem:[%s0 + $0x68] sm:$0x1]
  %v41 = vld [vmem:[%s0 + $0x70] sm:$0xff]
  %v42 = vld [vmem:[%s0 + $0x78] sm:$0x1]
  %v43 = vld [vmem:[%s0 + $0x80] sm:$0xff]
  %v44 = vld [vmem:[%s0 + $0x88] sm:$0x1]
  %v45 = vld [vmem:[%s0 + $0x90] sm:$0xff]
  %v46 = vld [vmem:[%s0 + $0x98] sm:$0x1]
  %v47 = vld [vmem:[%s0 + $0xa0] sm:$0xff]
  %v48 = vld [vmem:[%s0 + $0xa8] sm:$0x1]
  %v49 = vld [vmem:[%s0 + $0xb0] sm:$0xff]
  %v50 = vld [vmem:[%s0 + $0xb8] sm:$0x1]
  %v51 = vld [vmem:[%s0 + $0xc0] sm:$0xff]
  %v52 = vld [vmem:[%s0 + $0xc8] sm:$0x1]
  %v53 = vld [vmem:[%s0 + $0xd0] sm:$0xff]
  %v54 = vld [vmem:[%s0 + $0xd8] sm:$0x1]
  %v55 = vld [vmem:[%s0 + $0xe0] sm:$0xff]
  %v56 = vld [vmem:[%s0 + $0xe8] sm:$0x1]
  %v57 = vld [vmem:[%s0 + $0xf0] sm:$0xff]
  %v58 = vld [vmem:[%s0 + $0xf8] sm:$0x1]
  %v59 = vld [vmem:[%s0 + $0x100] sm:$0xff]
  %v60 = vld [vmem:[%s0 + $0x108] sm:$0x1]
  %v61 = vld [vmem:[%s0 + $0x110] sm:$0xff]
  %v62 = vld [vmem:[%s0 + $0x118] sm:$0x1]
  %vm95 = vcmask 1046528
  %v96 = vrot.slane %v27, 1
  %v97 = vrot.slane %v28, 1
  %v98 = vsel %vm95, %v96, %v97
  %v99 = vrot.slane %v29, 1
  %v100 = vrot.slane %v30, 1
  %v101 = vsel %vm95, %v99, %v100
  %v102 = vrot.slane %v31, 1
  %v103 = vrot.slane %v32, 1
  %v104 = vsel %vm95, %v102, %v103
  %v105 = vrot.slane %v33, 1
  %v106 = vrot.slane %v34, 1
  %v107 = vsel %vm95, %v105, %v106
  %v108 = vrot.slane %v35, 1
  %v109 = vrot.slane %v36, 1
  %v110 = vsel %vm95, %v108, %v109
  %v111 = vrot.slane %v37, 1
  %v112 = vrot.slane %v38, 1
  %v113 = vsel %vm95, %v111, %v112
  %v114 = vrot.slane %v39, 1
  %v115 = vrot.slane %v40, 1
  %v116 = vsel %vm95, %v114, %v115
  %v117 = vrot.slane %v41, 1
  %v118 = vrot.slane %v42, 1
  %v119 = vsel %vm95, %v117, %v118
  %v120 = vrot.slane %v45, 1
  %v121 = vrot.slane %v46, 1
  %v122 = vsel %vm95, %v120, %v121
  %v123 = vrot.slane %v47, 1
  %v124 = vrot.slane %v48, 1
  %v125 = vsel %vm95, %v123, %v124
  %v126 = vrot.slane %v49, 1
  %v127 = vrot.slane %v50, 1
  %v128 = vsel %vm95, %v126, %v127
  %v129 = vrot.slane %v51, 1
  %v130 = vrot.slane %v52, 1
  %v131 = vsel %vm95, %v129, %v130
  %v132 = vrot.slane %v53, 1
  %v133 = vrot.slane %v54, 1
  %v134 = vsel %vm95, %v132, %v133
  %v135 = vrot.slane %v55, 1
  %v136 = vrot.slane %v56, 1
  %v137 = vsel %vm95, %v135, %v136
  %v138 = vrot.slane %v57, 1
  %v139 = vrot.slane %v58, 1
  %v140 = vsel %vm95, %v138, %v139
  %v141 = vrot.slane %v59, 1
  %v142 = vrot.slane %v60, 1
  %v143 = vsel %vm95, %v141, %v142
  %144 = vrot.lane.b32.xlu0 %v98, 16
  %v145 = vpop.permute.xlu0 %144
  %146 = vrot.lane.b32.xlu0 %v101, 16
  %v147 = vpop.permute.xlu0 %146
  %148 = vrot.lane.b32.xlu0 %v104, 16
  %v149 = vpop.permute.xlu0 %148
  %150 = vrot.lane.b32.xlu0 %v107, 16
  %v151 = vpop.permute.xlu0 %150
  %152 = vrot.lane.b32.xlu0 %v110, 16
  %v153 = vpop.permute.xlu0 %152
  %154 = vrot.lane.b32.xlu0 %v113, 16
  %v155 = vpop.permute.xlu0 %154
  %156 = vrot.lane.b32.xlu0 %v116, 16
  %v157 = vpop.permute.xlu0 %156
  %158 = vrot.lane.b32.xlu0 %v119, 16
  %v159 = vpop.permute.xlu0 %158
  %160 = vrot.lane.b32.xlu0 %v122, 16
  %v161 = vpop.permute.xlu0 %160
  %162 = vrot.lane.b32.xlu0 %v125, 16
  %v163 = vpop.permute.xlu0 %162
  %164 = vrot.lane.b32.xlu0 %v128, 16
  %v165 = vpop.permute.xlu0 %164
  %166 = vrot.lane.b32.xlu0 %v131, 16
  %v167 = vpop.permute.xlu0 %166
  %168 = vrot.lane.b32.xlu0 %v134, 16
  %v169 = vpop.permute.xlu0 %168
  %170 = vrot.lane.b32.xlu0 %v137, 16
  %v171 = vpop.permute.xlu0 %170
  %172 = vrot.lane.b32.xlu0 %v140, 16
  %v173 = vpop.permute.xlu0 %172
  %174 = vrot.lane.b32.xlu0 %v143, 16
  %v175 = vpop.permute.xlu0 %174
  %194 = vrot.lane.b32.xlu0 %v29, 32
  %v195 = vpop.permute.xlu0 %194
  %196 = vrot.lane.b32.xlu0 %v31, 32
  %v197 = vpop.permute.xlu0 %196
  %198 = vrot.lane.b32.xlu0 %v33, 32
  %v199 = vpop.permute.xlu0 %198
  %200 = vrot.lane.b32.xlu0 %v35, 32
  %v201 = vpop.permute.xlu0 %200
  %202 = vrot.lane.b32.xlu0 %v37, 32
  %v203 = vpop.permute.xlu0 %202
  %204 = vrot.lane.b32.xlu0 %v39, 32
  %v205 = vpop.permute.xlu0 %204
  %206 = vrot.lane.b32.xlu0 %v41, 32
  %v207 = vpop.permute.xlu0 %206
  %208 = vrot.lane.b32.xlu0 %v43, 32
  %v209 = vpop.permute.xlu0 %208
  %210 = vrot.lane.b32.xlu0 %v47, 32
  %v211 = vpop.permute.xlu0 %210
  %212 = vrot.lane.b32.xlu0 %v49, 32
  %v213 = vpop.permute.xlu0 %212
  %214 = vrot.lane.b32.xlu0 %v51, 32
  %v215 = vpop.permute.xlu0 %214
  %216 = vrot.lane.b32.xlu0 %v53, 32
  %v217 = vpop.permute.xlu0 %216
  %218 = vrot.lane.b32.xlu0 %v55, 32
  %v219 = vpop.permute.xlu0 %218
  %220 = vrot.lane.b32.xlu0 %v57, 32
  %v221 = vpop.permute.xlu0 %220
  %222 = vrot.lane.b32.xlu0 %v59, 32
  %v223 = vpop.permute.xlu0 %222
  %224 = vrot.lane.b32.xlu0 %v61, 32
  %v225 = vpop.permute.xlu0 %224
  %v244 = vrot.slane %v43, 1
  %v245 = vrot.slane %v44, 1
  %v246 = vsel %vm95, %v244, %v245
  %v247 = vrot.slane %v61, 1
  %v248 = vrot.slane %v62, 1
  %v249 = vsel %vm95, %v247, %v248
  %250 = vrot.lane.b32.xlu0 %v101, 48
  %v251 = vpop.permute.xlu0 %250
  %252 = vrot.lane.b32.xlu0 %v104, 48
  %v253 = vpop.permute.xlu0 %252
  %254 = vrot.lane.b32.xlu0 %v107, 48
  %v255 = vpop.permute.xlu0 %254
  %256 = vrot.lane.b32.xlu0 %v110, 48
  %v257 = vpop.permute.xlu0 %256
  %258 = vrot.lane.b32.xlu0 %v113, 48
  %v259 = vpop.permute.xlu0 %258
  %260 = vrot.lane.b32.xlu0 %v116, 48
  %v261 = vpop.permute.xlu0 %260
  %262 = vrot.lane.b32.xlu0 %v119, 48
  %v263 = vpop.permute.xlu0 %262
  %264 = vrot.lane.b32.xlu0 %v246, 48
  %v265 = vpop.permute.xlu0 %264
  %266 = vrot.lane.b32.xlu0 %v125, 48
  %v267 = vpop.permute.xlu0 %266
  %268 = vrot.lane.b32.xlu0 %v128, 48
  %v269 = vpop.permute.xlu0 %268
  %270 = vrot.lane.b32.xlu0 %v131, 48
  %v271 = vpop.permute.xlu0 %270
  %272 = vrot.lane.b32.xlu0 %v134, 48
  %v273 = vpop.permute.xlu0 %272
  %274 = vrot.lane.b32.xlu0 %v137, 48
  %v275 = vpop.permute.xlu0 %274
  %276 = vrot.lane.b32.xlu0 %v140, 48
  %v277 = vpop.permute.xlu0 %276
  %278 = vrot.lane.b32.xlu0 %v143, 48
  %v279 = vpop.permute.xlu0 %278
  %280 = vrot.lane.b32.xlu0 %v249, 48
  %v281 = vpop.permute.xlu0 %280
  %vm298 = vcmask 130048
  %v299 = vsel %vm298, %v27, %v145
  %v300 = vsel %vm298, %v29, %v147
  %v301 = vsel %vm298, %v31, %v149
  %v302 = vsel %vm298, %v33, %v151
  %v303 = vsel %vm298, %v35, %v153
  %v304 = vsel %vm298, %v37, %v155
  %v305 = vsel %vm298, %v39, %v157
  %v306 = vsel %vm298, %v41, %v159
  %v307 = vsel %vm298, %v45, %v161
  %v308 = vsel %vm298, %v47, %v163
  %v309 = vsel %vm298, %v49, %v165
  %v310 = vsel %vm298, %v51, %v167
  %v311 = vsel %vm298, %v53, %v169
  %v312 = vsel %vm298, %v55, %v171
  %v313 = vsel %vm298, %v57, %v173
  %v314 = vsel %vm298, %v59, %v175
  %vm315 = vcmask 261120
  %v316 = vsel %vm315, %v299, %v195
  %v317 = vsel %vm315, %v300, %v197
  %v318 = vsel %vm315, %v301, %v199
  %v319 = vsel %vm315, %v302, %v201
  %v320 = vsel %vm315, %v303, %v203
  %v321 = vsel %vm315, %v304, %v205
  %v322 = vsel %vm315, %v305, %v207
  %v323 = vsel %vm315, %v306, %v209
  %v324 = vsel %vm315, %v307, %v211
  %v325 = vsel %vm315, %v308, %v213
  %v326 = vsel %vm315, %v309, %v215
  %v327 = vsel %vm315, %v310, %v217
  %v328 = vsel %vm315, %v311, %v219
  %v329 = vsel %vm315, %v312, %v221
  %v330 = vsel %vm315, %v313, %v223
  %v331 = vsel %vm315, %v314, %v225
  %vm332 = vcmask 392192
  %v333 = vsel %vm332, %v316, %v251
  %v334 = vsel %vm332, %v317, %v253
  %v335 = vsel %vm332, %v318, %v255
  %v336 = vsel %vm332, %v319, %v257
  %v337 = vsel %vm332, %v320, %v259
  %v338 = vsel %vm332, %v321, %v261
  %v339 = vsel %vm332, %v322, %v263
  %v340 = vsel %vm332, %v323, %v265
  %v341 = vsel %vm332, %v324, %v267
  %v342 = vsel %vm332, %v325, %v269
  %v343 = vsel %vm332, %v326, %v271
  %v344 = vsel %vm332, %v327, %v273
  %v345 = vsel %vm332, %v328, %v275
  %v346 = vsel %vm332, %v329, %v277
  %v347 = vsel %vm332, %v330, %v279
  %v348 = vsel %vm332, %v331, %v281
  %v349 = vld [vmem:[%s2] sm:$0xff]
  %v350 = vld [vmem:[%s2 + $0x8] sm:$0xff]
  %v351 = vld [vmem:[%s2 + $0x10] sm:$0xff]
  %v352 = vld [vmem:[%s2 + $0x18] sm:$0xff]
  %v353 = vld [vmem:[%s2 + $0x20] sm:$0xff]
  %v354 = vld [vmem:[%s2 + $0x28] sm:$0xff]
  %v355 = vld [vmem:[%s2 + $0x30] sm:$0xff]
  %v356 = vld [vmem:[%s2 + $0x38] sm:$0xff]
  %vm357 = vcmask 523264
  %v359 = vsel %vm357, %v333, 0
  %v362 = vsel %vm357, %v334, 0
  %v365 = vsel %vm357, %v335, 0
  %v368 = vsel %vm357, %v336, 0
  %v371 = vsel %vm357, %v337, 0
  %v374 = vsel %vm357, %v338, 0
  %v377 = vsel %vm357, %v339, 0
  %v380 = vsel %vm357, %v340, 0
  %v383 = vsel %vm357, %v341, 0
  %v386 = vsel %vm357, %v342, 0
  %v389 = vsel %vm357, %v343, 0
  %v392 = vsel %vm357, %v344, 0
  %v395 = vsel %vm357, %v345, 0
  %v398 = vsel %vm357, %v346, 0
  %v401 = vsel %vm357, %v347, 0
  %v404 = vsel %vm357, %v348, 0
  %406 = vmatprep.subr.mxu0 0.0
  %407 = vmatpush1.msra.mxu0 0.0
  %408 = vmatprep.subr.mxu0 0.0
  %409 = vmatpush1.msra.mxu0 0.0
  %410 = vmatprep.subr.mxu0 0.0
  %411 = vmatpush1.msra.mxu0 0.0
  %412 = vmatprep.subr.mxu0 0.0
  %413 = vmatpush1.msra.mxu0 0.0
  %414 = vmatprep.subr.mxu0 0.0
  %415 = vmatpush1.msra.mxu0 0.0
  %416 = vmatprep.subr.mxu0 0.0
  %417 = vmatpush1.msra.mxu0 0.0
  %418 = vmatprep.subr.mxu0 0.0
  %419 = vmatpush1.msra.mxu0 0.0
  %420 = vmatprep.subr.mxu0 0.0
  %421 = vmatpush1.msra.mxu0 0.0
  %422 = vmatprep.subr.mxu0 0.0
  %423 = vmatpush1.msra.mxu0 %v356
  %424 = vmatprep.subr.mxu0 0.0
  %425 = vmatpush1.msra.mxu0 %v355
  %426 = vmatprep.subr.mxu0 0.0
  %427 = vmatpush1.msra.mxu0 %v354
  %428 = vmatprep.subr.mxu0 0.0
  %429 = vmatpush1.msra.mxu0 %v353
  %430 = vmatprep.subr.mxu0 0.0
  %431 = vmatpush1.msra.mxu0 %v352
  %432 = vmatprep.subr.mxu0 0.0
  %433 = vmatpush1.msra.mxu0 %v351
  %434 = vmatprep.subr.mxu0 0.0
  %435 = vmatpush1.msra.mxu0 %v350
  %436 = vmatprep.subr.mxu0 0.0
  %437 = vmatpush1.msra.mxu0 %v349
  %438 = vmatprep.subr.mxu0 0.0
  %439 = vmatpush2.msra.mxu0 0.0
  %440 = vmatprep.subr.mxu0 0.0
  %441 = vmatpush2.msra.mxu0 0.0
  %442 = vmatprep.subr.mxu0 0.0
  %443 = vmatpush2.msra.mxu0 0.0
  %444 = vmatprep.subr.mxu0 0.0
  %445 = vmatpush2.msra.mxu0 0.0
  %446 = vmatprep.subr.mxu0 0.0
  %447 = vmatpush2.msra.mxu0 0.0
  %448 = vmatprep.subr.mxu0 0.0
  %449 = vmatpush2.msra.mxu0 0.0
  %450 = vmatprep.subr.mxu0 0.0
  %451 = vmatpush2.msra.mxu0 0.0
  %452 = vmatprep.subr.mxu0 0.0
  %453 = vmatpush2.msra.mxu0 0.0
  %454 = vmatprep.subr.mxu0 0.0
  %455 = vmatpush2.msra.mxu0 0.0
  %456 = vmatprep.subr.mxu0 0.0
  %457 = vmatpush2.msra.mxu0 0.0
  %458 = vmatprep.subr.mxu0 0.0
  %459 = vmatpush2.msra.mxu0 0.0
  %460 = vmatprep.subr.mxu0 0.0
  %461 = vmatpush2.msra.mxu0 0.0
  %462 = vmatprep.subr.mxu0 0.0
  %463 = vmatpush2.msra.mxu0 0.0
  %464 = vmatprep.subr.mxu0 0.0
  %465 = vmatpush2.msra.mxu0 0.0
  %466 = vmatprep.subr.mxu0 0.0
  %467 = vmatpush2.msra.mxu0 0.0
  %468 = vmatprep.subr.mxu0 0.0
  %469 = vmatpush2.msra.mxu0 0.0
  %470 = vmatprep.mubr.f32.mxu0 0.0
  %471 = vmatmul.mubr.f32.gmra.mxu0 %v359
  %v472 = vpop.f32.mrf.mxu0
  %v473 = vadd.f32 0.0, %v472
  %v474 = vpop.f32.mrf.mxu0
  %475 = vmatprep.mubr.f32.mxu0 0.0
  %476 = vmatmul.mubr.f32.gmra.mxu0 %v362
  %v477 = vpop.f32.mrf.mxu0
  %v478 = vadd.f32 0.0, %v477
  %v479 = vpop.f32.mrf.mxu0
  %480 = vmatprep.mubr.f32.mxu0 0.0
  %481 = vmatmul.mubr.f32.gmra.mxu0 %v365
  %v482 = vpop.f32.mrf.mxu0
  %v483 = vadd.f32 0.0, %v482
  %v484 = vpop.f32.mrf.mxu0
  %485 = vmatprep.mubr.f32.mxu0 0.0
  %486 = vmatmul.mubr.f32.gmra.mxu0 %v368
  %v487 = vpop.f32.mrf.mxu0
  %v488 = vadd.f32 0.0, %v487
  %v489 = vpop.f32.mrf.mxu0
  %490 = vmatprep.mubr.f32.mxu0 0.0
  %491 = vmatmul.mubr.f32.gmra.mxu0 %v371
  %v492 = vpop.f32.mrf.mxu0
  %v493 = vadd.f32 0.0, %v492
  %v494 = vpop.f32.mrf.mxu0
  %495 = vmatprep.mubr.f32.mxu0 0.0
  %496 = vmatmul.mubr.f32.gmra.mxu0 %v374
  %v497 = vpop.f32.mrf.mxu0
  %v498 = vadd.f32 0.0, %v497
  %v499 = vpop.f32.mrf.mxu0
  %500 = vmatprep.mubr.f32.mxu0 0.0
  %501 = vmatmul.mubr.f32.gmra.mxu0 %v377
  %v502 = vpop.f32.mrf.mxu0
  %v503 = vadd.f32 0.0, %v502
  %v504 = vpop.f32.mrf.mxu0
  %505 = vmatprep.mubr.f32.mxu0 0.0
  %506 = vmatmul.mubr.f32.gmra.mxu0 %v380
  %v507 = vpop.f32.mrf.mxu0
  %v508 = vadd.f32 0.0, %v507
  %v509 = vpop.f32.mrf.mxu0
  %510 = vmatprep.mubr.f32.mxu0 0.0
  %511 = vmatmul.mubr.f32.gmra.mxu0 %v383
  %v512 = vpop.f32.mrf.mxu0
  %v513 = vadd.f32 0.0, %v512
  %v514 = vpop.f32.mrf.mxu0
  %515 = vmatprep.mubr.f32.mxu0 0.0
  %516 = vmatmul.mubr.f32.gmra.mxu0 %v386
  %v517 = vpop.f32.mrf.mxu0
  %v518 = vadd.f32 0.0, %v517
  %v519 = vpop.f32.mrf.mxu0
  %520 = vmatprep.mubr.f32.mxu0 0.0
  %521 = vmatmul.mubr.f32.gmra.mxu0 %v389
  %v522 = vpop.f32.mrf.mxu0
  %v523 = vadd.f32 0.0, %v522
  %v524 = vpop.f32.mrf.mxu0
  %525 = vmatprep.mubr.f32.mxu0 0.0
  %526 = vmatmul.mubr.f32.gmra.mxu0 %v392
  %v527 = vpop.f32.mrf.mxu0
  %v528 = vadd.f32 0.0, %v527
  %v529 = vpop.f32.mrf.mxu0
  %530 = vmatprep.mubr.f32.mxu0 0.0
  %531 = vmatmul.mubr.f32.gmra.mxu0 %v395
  %v532 = vpop.f32.mrf.mxu0
  %v533 = vadd.f32 0.0, %v532
  %v534 = vpop.f32.mrf.mxu0
  %535 = vmatprep.mubr.f32.mxu0 0.0
  %536 = vmatmul.mubr.f32.gmra.mxu0 %v398
  %v537 = vpop.f32.mrf.mxu0
  %v538 = vadd.f32 0.0, %v537
  %v539 = vpop.f32.mrf.mxu0
  %540 = vmatprep.mubr.f32.mxu0 0.0
  %541 = vmatmul.mubr.f32.gmra.mxu0 %v401
  %v542 = vpop.f32.mrf.mxu0
  %v543 = vadd.f32 0.0, %v542
  %v544 = vpop.f32.mrf.mxu0
  %545 = vmatprep.mubr.f32.mxu0 0.0
  %546 = vmatmul.mubr.f32.gmra.mxu0 %v404
  %v547 = vpop.f32.mrf.mxu0
  %v548 = vadd.f32 0.0, %v547
  %v549 = vpop.f32.mrf.mxu0
  %550 = vdwg.mxu0
  %vm551 = vcmp.gt.f32.partialorder %v473, 0.0
  %vm552 = vcmp.gt.f32.partialorder %v478, 0.0
  %vm553 = vcmp.gt.f32.partialorder %v483, 0.0
  %vm554 = vcmp.gt.f32.partialorder %v488, 0.0
  %vm555 = vcmp.gt.f32.partialorder %v493, 0.0
  %vm556 = vcmp.gt.f32.partialorder %v498, 0.0
  %vm557 = vcmp.gt.f32.partialorder %v503, 0.0
  %vm558 = vcmp.gt.f32.partialorder %v508, 0.0
  %vm559 = vcmp.gt.f32.partialorder %v513, 0.0
  %vm560 = vcmp.gt.f32.partialorder %v518, 0.0
  %vm561 = vcmp.gt.f32.partialorder %v523, 0.0
  %vm562 = vcmp.gt.f32.partialorder %v528, 0.0
  %vm563 = vcmp.gt.f32.partialorder %v533, 0.0
  %vm564 = vcmp.gt.f32.partialorder %v538, 0.0
  %vm565 = vcmp.gt.f32.partialorder %v543, 0.0
  %vm566 = vcmp.gt.f32.partialorder %v548, 0.0
  %v567 = vmul.f32 %v473, 0.2
  %v568 = vmul.f32 %v478, 0.2
  %v569 = vmul.f32 %v483, 0.2
  %v570 = vmul.f32 %v488, 0.2
  %v571 = vmul.f32 %v493, 0.2
  %v572 = vmul.f32 %v498, 0.2
  %v573 = vmul.f32 %v503, 0.2
  %v574 = vmul.f32 %v508, 0.2
  %v575 = vmul.f32 %v513, 0.2
  %v576 = vmul.f32 %v518, 0.2
  %v577 = vmul.f32 %v523, 0.2
  %v578 = vmul.f32 %v528, 0.2
  %v579 = vmul.f32 %v533, 0.2
  %v580 = vmul.f32 %v538, 0.2
  %v581 = vmul.f32 %v543, 0.2
  %v582 = vmul.f32 %v548, 0.2
  %v583 = vsel %vm551, %v473, %v567
  %v584 = vsel %vm552, %v478, %v568
  %v585 = vsel %vm553, %v483, %v569
  %v586 = vsel %vm554, %v488, %v570
  %v587 = vsel %vm555, %v493, %v571
  %v588 = vsel %vm556, %v498, %v572
  %v589 = vsel %vm557, %v503, %v573
  %v590 = vsel %vm558, %v508, %v574
  %v591 = vsel %vm559, %v513, %v575
  %v592 = vsel %vm560, %v518, %v576
  %v593 = vsel %vm561, %v523, %v577
  %v594 = vsel %vm562, %v528, %v578
  %v595 = vsel %vm563, %v533, %v579
  %v596 = vsel %vm564, %v538, %v580
  %v597 = vsel %vm565, %v543, %v581
  %v598 = vsel %vm566, %v548, %v582
  %vm599 = vcmask 64512
  %600 = vst.msk [vmem:[#allocation2] sm:$0xff] %vm599, 0.0
  %vm601 = vcmask 58368
  %602 = vst.msk [vmem:[#allocation2 + $0x8] sm:$0x3] %vm601, 0.0
  %603 = vst.msk [vmem:[#allocation2 + $0xa0] sm:$0xff] %vm599, 0.0
  %604 = vst.msk [vmem:[#allocation2 + $0xa8] sm:$0x3] %vm601, 0.0
  %s605 = scalar_lea.vmem [#allocation2], 144
  %606 = vst.msk [vmem:[%s605] sm:$0xff] %vm599, 0.0
  %607 = vst.msk [vmem:[%s605 + $0x8] sm:$0x3] %vm601, 0.0
  %608 = vst.msk [vmem:[%s605 + $0xa0] sm:$0xff] %vm599, 0.0
  %609 = vst.msk [vmem:[%s605 + $0xa8] sm:$0x3] %vm601, 0.0
  %vm610 = vcmask 57344
  %611 = vst.msk [vmem:[#allocation2] sm:$0x1] %vm610, 0.0
  %612 = vst.msk [vmem:[#allocation2 + $0x10] sm:$0x1] %vm610, 0.0
  %613 = vst.msk [vmem:[#allocation2 + $0x20] sm:$0x1] %vm610, 0.0
  %614 = vst.msk [vmem:[#allocation2 + $0x30] sm:$0x1] %vm610, 0.0
  %615 = vst.msk [vmem:[#allocation2 + $0x40] sm:$0x1] %vm610, 0.0
  %616 = vst.msk [vmem:[#allocation2 + $0x50] sm:$0x1] %vm610, 0.0
  %617 = vst.msk [vmem:[#allocation2 + $0x60] sm:$0x1] %vm610, 0.0
  %618 = vst.msk [vmem:[#allocation2 + $0x70] sm:$0x1] %vm610, 0.0
  %619 = vst.msk [vmem:[#allocation2 + $0x80] sm:$0x1] %vm610, 0.0
  %620 = vst.msk [vmem:[#allocation2 + $0x90] sm:$0x1] %vm610, 0.0
  %621 = vst.msk [vmem:[#allocation2 + $0xa0] sm:$0x1] %vm610, 0.0
  %622 = vst.msk [vmem:[#allocation2 + $0xb0] sm:$0x1] %vm610, 0.0
  %623 = vst.msk [vmem:[#allocation2 + $0xc0] sm:$0x1] %vm610, 0.0
  %624 = vst.msk [vmem:[#allocation2 + $0xd0] sm:$0x1] %vm610, 0.0
  %625 = vst.msk [vmem:[#allocation2 + $0xe0] sm:$0x1] %vm610, 0.0
  %626 = vst.msk [vmem:[#allocation2 + $0xf0] sm:$0x1] %vm610, 0.0
  %627 = vst.msk [vmem:[#allocation2 + $0x100] sm:$0x1] %vm610, 0.0
  %628 = vst.msk [vmem:[#allocation2 + $0x110] sm:$0x1] %vm610, 0.0
  %629 = vst.msk [vmem:[#allocation2 + $0x120] sm:$0x1] %vm610, 0.0
  %630 = vst.msk [vmem:[#allocation2 + $0x130] sm:$0x1] %vm610, 0.0
  %631 = vst.msk [vmem:[#allocation2 + $0x9] sm:$0x1] %vm610, 0.0
  %632 = vst.msk [vmem:[#allocation2 + $0x19] sm:$0x1] %vm610, 0.0
  %633 = vst.msk [vmem:[#allocation2 + $0x29] sm:$0x1] %vm610, 0.0
  %634 = vst.msk [vmem:[#allocation2 + $0x39] sm:$0x1] %vm610, 0.0
  %635 = vst.msk [vmem:[#allocation2 + $0x49] sm:$0x1] %vm610, 0.0
  %636 = vst.msk [vmem:[#allocation2 + $0x59] sm:$0x1] %vm610, 0.0
  %637 = vst.msk [vmem:[#allocation2 + $0x69] sm:$0x1] %vm610, 0.0
  %638 = vst.msk [vmem:[#allocation2 + $0x79] sm:$0x1] %vm610, 0.0
  %639 = vst.msk [vmem:[#allocation2 + $0x89] sm:$0x1] %vm610, 0.0
  %640 = vst.msk [vmem:[#allocation2 + $0x99] sm:$0x1] %vm610, 0.0
  %641 = vst.msk [vmem:[#allocation2 + $0xa9] sm:$0x1] %vm610, 0.0
  %642 = vst.msk [vmem:[#allocation2 + $0xb9] sm:$0x1] %vm610, 0.0
  %643 = vst.msk [vmem:[#allocation2 + $0xc9] sm:$0x1] %vm610, 0.0
  %644 = vst.msk [vmem:[#allocation2 + $0xd9] sm:$0x1] %vm610, 0.0
  %645 = vst.msk [vmem:[#allocation2 + $0xe9] sm:$0x1] %vm610, 0.0
  %646 = vst.msk [vmem:[#allocation2 + $0xf9] sm:$0x1] %vm610, 0.0
  %647 = vst.msk [vmem:[#allocation2 + $0x109] sm:$0x1] %vm610, 0.0
  %648 = vst.msk [vmem:[#allocation2 + $0x119] sm:$0x1] %vm610, 0.0
  %649 = vst.msk [vmem:[#allocation2 + $0x129] sm:$0x1] %vm610, 0.0
  %650 = vst.msk [vmem:[#allocation2 + $0x139] sm:$0x1] %vm610, 0.0
  %s651 = scalar_lea.vmem [#allocation2], 16
  %652 = vst.msk [vmem:[%s651 + $0x1] sm:$0xff] %vm599, %v583
  %653 = vst.msk [vmem:[%s651 + $0x11] sm:$0xff] %vm599, %v584
  %654 = vst.msk [vmem:[%s651 + $0x21] sm:$0xff] %vm599, %v585
  %655 = vst.msk [vmem:[%s651 + $0x31] sm:$0xff] %vm599, %v586
  %656 = vst.msk [vmem:[%s651 + $0x41] sm:$0xff] %vm599, %v587
  %657 = vst.msk [vmem:[%s651 + $0x51] sm:$0xff] %vm599, %v588
  %658 = vst.msk [vmem:[%s651 + $0x61] sm:$0xff] %vm599, %v589
  %659 = vst.msk [vmem:[%s651 + $0x71] sm:$0xff] %vm599, %v590
  %660 = vst.msk [vmem:[%s651 + $0xa1] sm:$0xff] %vm599, %v591
  %661 = vst.msk [vmem:[%s651 + $0xb1] sm:$0xff] %vm599, %v592
  %662 = vst.msk [vmem:[%s651 + $0xc1] sm:$0xff] %vm599, %v593
  %663 = vst.msk [vmem:[%s651 + $0xd1] sm:$0xff] %vm599, %v594
  %664 = vst.msk [vmem:[%s651 + $0xe1] sm:$0xff] %vm599, %v595
  %665 = vst.msk [vmem:[%s651 + $0xf1] sm:$0xff] %vm599, %v596
  %666 = vst.msk [vmem:[%s651 + $0x101] sm:$0xff] %vm599, %v597
  %667 = vst.msk [vmem:[%s651 + $0x111] sm:$0xff] %vm599, %v598
  %v668 = vld [vmem:[#allocation2] sm:$0xff]
  %v669 = vld [vmem:[#allocation2 + $0x10] sm:$0xff]
  %v670 = vld [vmem:[#allocation2 + $0x20] sm:$0xff]
  %v671 = vld [vmem:[#allocation2 + $0x30] sm:$0xff]
  %v672 = vld [vmem:[#allocation2 + $0x40] sm:$0xff]
  %v673 = vld [vmem:[#allocation2 + $0x50] sm:$0xff]
  %v674 = vld [vmem:[#allocation2 + $0x60] sm:$0xff]
  %v675 = vld [vmem:[#allocation2 + $0x70] sm:$0xff]
  %v676 = vld [vmem:[#allocation2 + $0xa0] sm:$0xff]
  %v677 = vld [vmem:[#allocation2 + $0xb0] sm:$0xff]
  %v678 = vld [vmem:[#allocation2 + $0xc0] sm:$0xff]
  %v679 = vld [vmem:[#allocation2 + $0xd0] sm:$0xff]
  %v680 = vld [vmem:[#allocation2 + $0xe0] sm:$0xff]
  %v681 = vld [vmem:[#allocation2 + $0xf0] sm:$0xff]
  %v682 = vld [vmem:[#allocation2 + $0x100] sm:$0xff]
  %v683 = vld [vmem:[#allocation2 + $0x110] sm:$0xff]
  %v684 = vld [vmem:[#allocation2 + $0x1] sm:$0xff]
  %v685 = vld [vmem:[#allocation2 + $0x11] sm:$0xff]
  %v686 = vld [vmem:[#allocation2 + $0x21] sm:$0xff]
  %v687 = vld [vmem:[#allocation2 + $0x31] sm:$0xff]
  %v688 = vld [vmem:[#allocation2 + $0x41] sm:$0xff]
  %v689 = vld [vmem:[#allocation2 + $0x51] sm:$0xff]
  %v690 = vld [vmem:[#allocation2 + $0x61] sm:$0xff]
  %v691 = vld [vmem:[#allocation2 + $0x71] sm:$0xff]
  %v692 = vld [vmem:[#allocation2 + $0xa1] sm:$0xff]
  %v693 = vld [vmem:[#allocation2 + $0xb1] sm:$0xff]
  %v694 = vld [vmem:[#allocation2 + $0xc1] sm:$0xff]
  %v695 = vld [vmem:[#allocation2 + $0xd1] sm:$0xff]
  %v696 = vld [vmem:[#allocation2 + $0xe1] sm:$0xff]
  %v697 = vld [vmem:[#allocation2 + $0xf1] sm:$0xff]
  %v698 = vld [vmem:[#allocation2 + $0x101] sm:$0xff]
  %v699 = vld [vmem:[#allocation2 + $0x111] sm:$0xff]
  %v700 = vld [vmem:[#allocation2 + $0x2] sm:$0xff]
  %v701 = vld [vmem:[#allocation2 + $0x12] sm:$0xff]
  %v702 = vld [vmem:[#allocation2 + $0x22] sm:$0xff]
  %v703 = vld [vmem:[#allocation2 + $0x32] sm:$0xff]
  %v704 = vld [vmem:[#allocation2 + $0x42] sm:$0xff]
  %v705 = vld [vmem:[#allocation2 + $0x52] sm:$0xff]
  %v706 = vld [vmem:[#allocation2 + $0x62] sm:$0xff]
  %v707 = vld [vmem:[#allocation2 + $0x72] sm:$0xff]
  %v708 = vld [vmem:[#allocation2 + $0xa2] sm:$0xff]
  %v709 = vld [vmem:[#allocation2 + $0xb2] sm:$0xff]
  %v710 = vld [vmem:[#allocation2 + $0xc2] sm:$0xff]
  %v711 = vld [vmem:[#allocation2 + $0xd2] sm:$0xff]
  %v712 = vld [vmem:[#allocation2 + $0xe2] sm:$0xff]
  %v713 = vld [vmem:[#allocation2 + $0xf2] sm:$0xff]
  %v714 = vld [vmem:[#allocation2 + $0x102] sm:$0xff]
  %v715 = vld [vmem:[#allocation2 + $0x112] sm:$0xff]
  %v716 = vld [vmem:[%s651] sm:$0xff]
  %v717 = vld [vmem:[%s651 + $0x10] sm:$0xff]
  %v718 = vld [vmem:[%s651 + $0x20] sm:$0xff]
  %v719 = vld [vmem:[%s651 + $0x30] sm:$0xff]
  %v720 = vld [vmem:[%s651 + $0x40] sm:$0xff]
  %v721 = vld [vmem:[%s651 + $0x50] sm:$0xff]
  %v722 = vld [vmem:[%s651 + $0x60] sm:$0xff]
  %v723 = vld [vmem:[%s651 + $0x70] sm:$0xff]
  %v724 = vld [vmem:[%s651 + $0xa0] sm:$0xff]
  %v725 = vld [vmem:[%s651 + $0xb0] sm:$0xff]
  %v726 = vld [vmem:[%s651 + $0xc0] sm:$0xff]
  %v727 = vld [vmem:[%s651 + $0xd0] sm:$0xff]
  %v728 = vld [vmem:[%s651 + $0xe0] sm:$0xff]
  %v729 = vld [vmem:[%s651 + $0xf0] sm:$0xff]
  %v730 = vld [vmem:[%s651 + $0x100] sm:$0xff]
  %v731 = vld [vmem:[%s651 + $0x110] sm:$0xff]
  %v732 = vld [vmem:[%s651 + $0x1] sm:$0xff]
  %v733 = vld [vmem:[%s651 + $0x11] sm:$0xff]
  %v734 = vld [vmem:[%s651 + $0x21] sm:$0xff]
  %v735 = vld [vmem:[%s651 + $0x31] sm:$0xff]
  %v736 = vld [vmem:[%s651 + $0x41] sm:$0xff]
  %v737 = vld [vmem:[%s651 + $0x51] sm:$0xff]
  %v738 = vld [vmem:[%s651 + $0x61] sm:$0xff]
  %v739 = vld [vmem:[%s651 + $0x71] sm:$0xff]
  %v740 = vld [vmem:[%s651 + $0xa1] sm:$0xff]
  %v741 = vld [vmem:[%s651 + $0xb1] sm:$0xff]
  %v742 = vld [vmem:[%s651 + $0xc1] sm:$0xff]
  %v743 = vld [vmem:[%s651 + $0xd1] sm:$0xff]
  %v744 = vld [vmem:[%s651 + $0xe1] sm:$0xff]
  %v745 = vld [vmem:[%s651 + $0xf1] sm:$0xff]
  %v746 = vld [vmem:[%s651 + $0x101] sm:$0xff]
  %v747 = vld [vmem:[%s651 + $0x111] sm:$0xff]
  %v748 = vld [vmem:[%s651 + $0x2] sm:$0xff]
  %v749 = vld [vmem:[%s651 + $0x12] sm:$0xff]
  %v750 = vld [vmem:[%s651 + $0x22] sm:$0xff]
  %v751 = vld [vmem:[%s651 + $0x32] sm:$0xff]
  %v752 = vld [vmem:[%s651 + $0x42] sm:$0xff]
  %v753 = vld [vmem:[%s651 + $0x52] sm:$0xff]
  %v754 = vld [vmem:[%s651 + $0x62] sm:$0xff]
  %v755 = vld [vmem:[%s651 + $0x72] sm:$0xff]
  %v756 = vld [vmem:[%s651 + $0xa2] sm:$0xff]
  %v757 = vld [vmem:[%s651 + $0xb2] sm:$0xff]
  %v758 = vld [vmem:[%s651 + $0xc2] sm:$0xff]
  %v759 = vld [vmem:[%s651 + $0xd2] sm:$0xff]
  %v760 = vld [vmem:[%s651 + $0xe2] sm:$0xff]
  %v761 = vld [vmem:[%s651 + $0xf2] sm:$0xff]
  %v762 = vld [vmem:[%s651 + $0x102] sm:$0xff]
  %v763 = vld [vmem:[%s651 + $0x112] sm:$0xff]
  %s764 = scalar_lea.vmem [#allocation2], 32
  %v765 = vld [vmem:[%s764] sm:$0xff]
  %v766 = vld [vmem:[%s764 + $0x10] sm:$0xff]
  %v767 = vld [vmem:[%s764 + $0x20] sm:$0xff]
  %v768 = vld [vmem:[%s764 + $0x30] sm:$0xff]
  %v769 = vld [vmem:[%s764 + $0x40] sm:$0xff]
  %v770 = vld [vmem:[%s764 + $0x50] sm:$0xff]
  %v771 = vld [vmem:[%s764 + $0x60] sm:$0xff]
  %v772 = vld [vmem:[%s764 + $0x70] sm:$0xff]
  %v773 = vld [vmem:[%s764 + $0xa0] sm:$0xff]
  %v774 = vld [vmem:[%s764 + $0xb0] sm:$0xff]
  %v775 = vld [vmem:[%s764 + $0xc0] sm:$0xff]
  %v776 = vld [vmem:[%s764 + $0xd0] sm:$0xff]
  %v777 = vld [vmem:[%s764 + $0xe0] sm:$0xff]
  %v778 = vld [vmem:[%s764 + $0xf0] sm:$0xff]
  %v779 = vld [vmem:[%s764 + $0x100] sm:$0xff]
  %v780 = vld [vmem:[%s764 + $0x110] sm:$0xff]
  %v781 = vld [vmem:[%s764 + $0x1] sm:$0xff]
  %v782 = vld [vmem:[%s764 + $0x11] sm:$0xff]
  %v783 = vld [vmem:[%s764 + $0x21] sm:$0xff]
  %v784 = vld [vmem:[%s764 + $0x31] sm:$0xff]
  %v785 = vld [vmem:[%s764 + $0x41] sm:$0xff]
  %v786 = vld [vmem:[%s764 + $0x51] sm:$0xff]
  %v787 = vld [vmem:[%s764 + $0x61] sm:$0xff]
  %v788 = vld [vmem:[%s764 + $0x71] sm:$0xff]
  %v789 = vld [vmem:[%s764 + $0xa1] sm:$0xff]
  %v790 = vld [vmem:[%s764 + $0xb1] sm:$0xff]
  %v791 = vld [vmem:[%s764 + $0xc1] sm:$0xff]
  %v792 = vld [vmem:[%s764 + $0xd1] sm:$0xff]
  %v793 = vld [vmem:[%s764 + $0xe1] sm:$0xff]
  %v794 = vld [vmem:[%s764 + $0xf1] sm:$0xff]
  %v795 = vld [vmem:[%s764 + $0x101] sm:$0xff]
  %v796 = vld [vmem:[%s764 + $0x111] sm:$0xff]
  %v797 = vld [vmem:[%s764 + $0x2] sm:$0xff]
  %v798 = vld [vmem:[%s764 + $0x12] sm:$0xff]
  %v799 = vld [vmem:[%s764 + $0x22] sm:$0xff]
  %v800 = vld [vmem:[%s764 + $0x32] sm:$0xff]
  %v801 = vld [vmem:[%s764 + $0x42] sm:$0xff]
  %v802 = vld [vmem:[%s764 + $0x52] sm:$0xff]
  %v803 = vld [vmem:[%s764 + $0x62] sm:$0xff]
  %v804 = vld [vmem:[%s764 + $0x72] sm:$0xff]
  %v805 = vld [vmem:[%s764 + $0xa2] sm:$0xff]
  %v806 = vld [vmem:[%s764 + $0xb2] sm:$0xff]
  %v807 = vld [vmem:[%s764 + $0xc2] sm:$0xff]
  %v808 = vld [vmem:[%s764 + $0xd2] sm:$0xff]
  %v809 = vld [vmem:[%s764 + $0xe2] sm:$0xff]
  %v810 = vld [vmem:[%s764 + $0xf2] sm:$0xff]
  %v811 = vld [vmem:[%s764 + $0x102] sm:$0xff]
  %v812 = vld [vmem:[%s764 + $0x112] sm:$0xff]
  %829 = vrot.lane.b32.xlu0 %v684, 8
  %v830 = vpop.permute.xlu0 %829
  %831 = vrot.lane.b32.xlu0 %v685, 8
  %v832 = vpop.permute.xlu0 %831
  %833 = vrot.lane.b32.xlu0 %v686, 8
  %v834 = vpop.permute.xlu0 %833
  %835 = vrot.lane.b32.xlu0 %v687, 8
  %v836 = vpop.permute.xlu0 %835
  %837 = vrot.lane.b32.xlu0 %v688, 8
  %v838 = vpop.permute.xlu0 %837
  %839 = vrot.lane.b32.xlu0 %v689, 8
  %v840 = vpop.permute.xlu0 %839
  %841 = vrot.lane.b32.xlu0 %v690, 8
  %v842 = vpop.permute.xlu0 %841
  %843 = vrot.lane.b32.xlu0 %v691, 8
  %v844 = vpop.permute.xlu0 %843
  %845 = vrot.lane.b32.xlu0 %v692, 8
  %v846 = vpop.permute.xlu0 %845
  %847 = vrot.lane.b32.xlu0 %v693, 8
  %v848 = vpop.permute.xlu0 %847
  %849 = vrot.lane.b32.xlu0 %v694, 8
  %v850 = vpop.permute.xlu0 %849
  %851 = vrot.lane.b32.xlu0 %v695, 8
  %v852 = vpop.permute.xlu0 %851
  %853 = vrot.lane.b32.xlu0 %v696, 8
  %v854 = vpop.permute.xlu0 %853
  %855 = vrot.lane.b32.xlu0 %v697, 8
  %v856 = vpop.permute.xlu0 %855
  %857 = vrot.lane.b32.xlu0 %v698, 8
  %v858 = vpop.permute.xlu0 %857
  %859 = vrot.lane.b32.xlu0 %v699, 8
  %v860 = vpop.permute.xlu0 %859
  %893 = vrot.lane.b32.xlu0 %v700, 16
  %v894 = vpop.permute.xlu0 %893
  %895 = vrot.lane.b32.xlu0 %v701, 16
  %v896 = vpop.permute.xlu0 %895
  %897 = vrot.lane.b32.xlu0 %v702, 16
  %v898 = vpop.permute.xlu0 %897
  %899 = vrot.lane.b32.xlu0 %v703, 16
  %v900 = vpop.permute.xlu0 %899
  %901 = vrot.lane.b32.xlu0 %v704, 16
  %v902 = vpop.permute.xlu0 %901
  %903 = vrot.lane.b32.xlu0 %v705, 16
  %v904 = vpop.permute.xlu0 %903
  %905 = vrot.lane.b32.xlu0 %v706, 16
  %v906 = vpop.permute.xlu0 %905
  %907 = vrot.lane.b32.xlu0 %v707, 16
  %v908 = vpop.permute.xlu0 %907
  %909 = vrot.lane.b32.xlu0 %v708, 16
  %v910 = vpop.permute.xlu0 %909
  %911 = vrot.lane.b32.xlu0 %v709, 16
  %v912 = vpop.permute.xlu0 %911
  %913 = vrot.lane.b32.xlu0 %v710, 16
  %v914 = vpop.permute.xlu0 %913
  %915 = vrot.lane.b32.xlu0 %v711, 16
  %v916 = vpop.permute.xlu0 %915
  %917 = vrot.lane.b32.xlu0 %v712, 16
  %v918 = vpop.permute.xlu0 %917
  %919 = vrot.lane.b32.xlu0 %v713, 16
  %v920 = vpop.permute.xlu0 %919
  %921 = vrot.lane.b32.xlu0 %v714, 16
  %v922 = vpop.permute.xlu0 %921
  %923 = vrot.lane.b32.xlu0 %v715, 16
  %v924 = vpop.permute.xlu0 %923
  %957 = vrot.lane.b32.xlu0 %v716, 24
  %v958 = vpop.permute.xlu0 %957
  %959 = vrot.lane.b32.xlu0 %v717, 24
  %v960 = vpop.permute.xlu0 %959
  %961 = vrot.lane.b32.xlu0 %v718, 24
  %v962 = vpop.permute.xlu0 %961
  %963 = vrot.lane.b32.xlu0 %v719, 24
  %v964 = vpop.permute.xlu0 %963
  %965 = vrot.lane.b32.xlu0 %v720, 24
  %v966 = vpop.permute.xlu0 %965
  %967 = vrot.lane.b32.xlu0 %v721, 24
  %v968 = vpop.permute.xlu0 %967
  %969 = vrot.lane.b32.xlu0 %v722, 24
  %v970 = vpop.permute.xlu0 %969
  %971 = vrot.lane.b32.xlu0 %v723, 24
  %v972 = vpop.permute.xlu0 %971
  %973 = vrot.lane.b32.xlu0 %v724, 24
  %v974 = vpop.permute.xlu0 %973
  %975 = vrot.lane.b32.xlu0 %v725, 24
  %v976 = vpop.permute.xlu0 %975
  %977 = vrot.lane.b32.xlu0 %v726, 24
  %v978 = vpop.permute.xlu0 %977
  %979 = vrot.lane.b32.xlu0 %v727, 24
  %v980 = vpop.permute.xlu0 %979
  %981 = vrot.lane.b32.xlu0 %v728, 24
  %v982 = vpop.permute.xlu0 %981
  %983 = vrot.lane.b32.xlu0 %v729, 24
  %v984 = vpop.permute.xlu0 %983
  %985 = vrot.lane.b32.xlu0 %v730, 24
  %v986 = vpop.permute.xlu0 %985
  %987 = vrot.lane.b32.xlu0 %v731, 24
  %v988 = vpop.permute.xlu0 %987
  %1021 = vrot.lane.b32.xlu0 %v732, 32
  %v1022 = vpop.permute.xlu0 %1021
  %1023 = vrot.lane.b32.xlu0 %v733, 32
  %v1024 = vpop.permute.xlu0 %1023
  %1025 = vrot.lane.b32.xlu0 %v734, 32
  %v1026 = vpop.permute.xlu0 %1025
  %1027 = vrot.lane.b32.xlu0 %v735, 32
  %v1028 = vpop.permute.xlu0 %1027
  %1029 = vrot.lane.b32.xlu0 %v736, 32
  %v1030 = vpop.permute.xlu0 %1029
  %1031 = vrot.lane.b32.xlu0 %v737, 32
  %v1032 = vpop.permute.xlu0 %1031
  %1033 = vrot.lane.b32.xlu0 %v738, 32
  %v1034 = vpop.permute.xlu0 %1033
  %1035 = vrot.lane.b32.xlu0 %v739, 32
  %v1036 = vpop.permute.xlu0 %1035
  %1037 = vrot.lane.b32.xlu0 %v740, 32
  %v1038 = vpop.permute.xlu0 %1037
  %1039 = vrot.lane.b32.xlu0 %v741, 32
  %v1040 = vpop.permute.xlu0 %1039
  %1041 = vrot.lane.b32.xlu0 %v742, 32
  %v1042 = vpop.permute.xlu0 %1041
  %1043 = vrot.lane.b32.xlu0 %v743, 32
  %v1044 = vpop.permute.xlu0 %1043
  %1045 = vrot.lane.b32.xlu0 %v744, 32
  %v1046 = vpop.permute.xlu0 %1045
  %1047 = vrot.lane.b32.xlu0 %v745, 32
  %v1048 = vpop.permute.xlu0 %1047
  %1049 = vrot.lane.b32.xlu0 %v746, 32
  %v1050 = vpop.permute.xlu0 %1049
  %1051 = vrot.lane.b32.xlu0 %v747, 32
  %v1052 = vpop.permute.xlu0 %1051
  %1085 = vrot.lane.b32.xlu0 %v748, 40
  %v1086 = vpop.permute.xlu0 %1085
  %1087 = vrot.lane.b32.xlu0 %v749, 40
  %v1088 = vpop.permute.xlu0 %1087
  %1089 = vrot.lane.b32.xlu0 %v750, 40
  %v1090 = vpop.permute.xlu0 %1089
  %1091 = vrot.lane.b32.xlu0 %v751, 40
  %v1092 = vpop.permute.xlu0 %1091
  %1093 = vrot.lane.b32.xlu0 %v752, 40
  %v1094 = vpop.permute.xlu0 %1093
  %1095 = vrot.lane.b32.xlu0 %v753, 40
  %v1096 = vpop.permute.xlu0 %1095
  %1097 = vrot.lane.b32.xlu0 %v754, 40
  %v1098 = vpop.permute.xlu0 %1097
  %1099 = vrot.lane.b32.xlu0 %v755, 40
  %v1100 = vpop.permute.xlu0 %1099
  %1101 = vrot.lane.b32.xlu0 %v756, 40
  %v1102 = vpop.permute.xlu0 %1101
  %1103 = vrot.lane.b32.xlu0 %v757, 40
  %v1104 = vpop.permute.xlu0 %1103
  %1105 = vrot.lane.b32.xlu0 %v758, 40
  %v1106 = vpop.permute.xlu0 %1105
  %1107 = vrot.lane.b32.xlu0 %v759, 40
  %v1108 = vpop.permute.xlu0 %1107
  %1109 = vrot.lane.b32.xlu0 %v760, 40
  %v1110 = vpop.permute.xlu0 %1109
  %1111 = vrot.lane.b32.xlu0 %v761, 40
  %v1112 = vpop.permute.xlu0 %1111
  %1113 = vrot.lane.b32.xlu0 %v762, 40
  %v1114 = vpop.permute.xlu0 %1113
  %1115 = vrot.lane.b32.xlu0 %v763, 40
  %v1116 = vpop.permute.xlu0 %1115
  %1149 = vrot.lane.b32.xlu0 %v765, 48
  %v1150 = vpop.permute.xlu0 %1149
  %1151 = vrot.lane.b32.xlu0 %v766, 48
  %v1152 = vpop.permute.xlu0 %1151
  %1153 = vrot.lane.b32.xlu0 %v767, 48
  %v1154 = vpop.permute.xlu0 %1153
  %1155 = vrot.lane.b32.xlu0 %v768, 48
  %v1156 = vpop.permute.xlu0 %1155
  %1157 = vrot.lane.b32.xlu0 %v769, 48
  %v1158 = vpop.permute.xlu0 %1157
  %1159 = vrot.lane.b32.xlu0 %v770, 48
  %v1160 = vpop.permute.xlu0 %1159
  %1161 = vrot.lane.b32.xlu0 %v771, 48
  %v1162 = vpop.permute.xlu0 %1161
  %1163 = vrot.lane.b32.xlu0 %v772, 48
  %v1164 = vpop.permute.xlu0 %1163
  %1165 = vrot.lane.b32.xlu0 %v773, 48
  %v1166 = vpop.permute.xlu0 %1165
  %1167 = vrot.lane.b32.xlu0 %v774, 48
  %v1168 = vpop.permute.xlu0 %1167
  %1169 = vrot.lane.b32.xlu0 %v775, 48
  %v1170 = vpop.permute.xlu0 %1169
  %1171 = vrot.lane.b32.xlu0 %v776, 48
  %v1172 = vpop.permute.xlu0 %1171
  %1173 = vrot.lane.b32.xlu0 %v777, 48
  %v1174 = vpop.permute.xlu0 %1173
  %1175 = vrot.lane.b32.xlu0 %v778, 48
  %v1176 = vpop.permute.xlu0 %1175
  %1177 = vrot.lane.b32.xlu0 %v779, 48
  %v1178 = vpop.permute.xlu0 %1177
  %1179 = vrot.lane.b32.xlu0 %v780, 48
  %v1180 = vpop.permute.xlu0 %1179
  %1213 = vrot.lane.b32.xlu0 %v781, 56
  %v1214 = vpop.permute.xlu0 %1213
  %1215 = vrot.lane.b32.xlu0 %v782, 56
  %v1216 = vpop.permute.xlu0 %1215
  %1217 = vrot.lane.b32.xlu0 %v783, 56
  %v1218 = vpop.permute.xlu0 %1217
  %1219 = vrot.lane.b32.xlu0 %v784, 56
  %v1220 = vpop.permute.xlu0 %1219
  %1221 = vrot.lane.b32.xlu0 %v785, 56
  %v1222 = vpop.permute.xlu0 %1221
  %1223 = vrot.lane.b32.xlu0 %v786, 56
  %v1224 = vpop.permute.xlu0 %1223
  %1225 = vrot.lane.b32.xlu0 %v787, 56
  %v1226 = vpop.permute.xlu0 %1225
  %1227 = vrot.lane.b32.xlu0 %v788, 56
  %v1228 = vpop.permute.xlu0 %1227
  %1229 = vrot.lane.b32.xlu0 %v789, 56
  %v1230 = vpop.permute.xlu0 %1229
  %1231 = vrot.lane.b32.xlu0 %v790, 56
  %v1232 = vpop.permute.xlu0 %1231
  %1233 = vrot.lane.b32.xlu0 %v791, 56
  %v1234 = vpop.permute.xlu0 %1233
  %1235 = vrot.lane.b32.xlu0 %v792, 56
  %v1236 = vpop.permute.xlu0 %1235
  %1237 = vrot.lane.b32.xlu0 %v793, 56
  %v1238 = vpop.permute.xlu0 %1237
  %1239 = vrot.lane.b32.xlu0 %v794, 56
  %v1240 = vpop.permute.xlu0 %1239
  %1241 = vrot.lane.b32.xlu0 %v795, 56
  %v1242 = vpop.permute.xlu0 %1241
  %1243 = vrot.lane.b32.xlu0 %v796, 56
  %v1244 = vpop.permute.xlu0 %1243
  %1277 = vrot.lane.b32.xlu0 %v797, 64
  %v1278 = vpop.permute.xlu0 %1277
  %1279 = vrot.lane.b32.xlu0 %v798, 64
  %v1280 = vpop.permute.xlu0 %1279
  %1281 = vrot.lane.b32.xlu0 %v799, 64
  %v1282 = vpop.permute.xlu0 %1281
  %1283 = vrot.lane.b32.xlu0 %v800, 64
  %v1284 = vpop.permute.xlu0 %1283
  %1285 = vrot.lane.b32.xlu0 %v801, 64
  %v1286 = vpop.permute.xlu0 %1285
  %1287 = vrot.lane.b32.xlu0 %v802, 64
  %v1288 = vpop.permute.xlu0 %1287
  %1289 = vrot.lane.b32.xlu0 %v803, 64
  %v1290 = vpop.permute.xlu0 %1289
  %1291 = vrot.lane.b32.xlu0 %v804, 64
  %v1292 = vpop.permute.xlu0 %1291
  %1293 = vrot.lane.b32.xlu0 %v805, 64
  %v1294 = vpop.permute.xlu0 %1293
  %1295 = vrot.lane.b32.xlu0 %v806, 64
  %v1296 = vpop.permute.xlu0 %1295
  %1297 = vrot.lane.b32.xlu0 %v807, 64
  %v1298 = vpop.permute.xlu0 %1297
  %1299 = vrot.lane.b32.xlu0 %v808, 64
  %v1300 = vpop.permute.xlu0 %1299
  %1301 = vrot.lane.b32.xlu0 %v809, 64
  %v1302 = vpop.permute.xlu0 %1301
  %1303 = vrot.lane.b32.xlu0 %v810, 64
  %v1304 = vpop.permute.xlu0 %1303
  %1305 = vrot.lane.b32.xlu0 %v811, 64
  %v1306 = vpop.permute.xlu0 %1305
  %1307 = vrot.lane.b32.xlu0 %v812, 64
  %v1308 = vpop.permute.xlu0 %1307
  %v1325 = vsel %vm599, %v668, %v830
  %v1326 = vsel %vm599, %v669, %v832
  %v1327 = vsel %vm599, %v670, %v834
  %v1328 = vsel %vm599, %v671, %v836
  %v1329 = vsel %vm599, %v672, %v838
  %v1330 = vsel %vm599, %v673, %v840
  %v1331 = vsel %vm599, %v674, %v842
  %v1332 = vsel %vm599, %v675, %v844
  %v1333 = vsel %vm599, %v676, %v846
  %v1334 = vsel %vm599, %v677, %v848
  %v1335 = vsel %vm599, %v678, %v850
  %v1336 = vsel %vm599, %v679, %v852
  %v1337 = vsel %vm599, %v680, %v854
  %v1338 = vsel %vm599, %v681, %v856
  %v1339 = vsel %vm599, %v682, %v858
  %v1340 = vsel %vm599, %v683, %v860
  %v1341 = vsel %vm298, %v1325, %v894
  %v1342 = vsel %vm298, %v1326, %v896
  %v1343 = vsel %vm298, %v1327, %v898
  %v1344 = vsel %vm298, %v1328, %v900
  %v1345 = vsel %vm298, %v1329, %v902
  %v1346 = vsel %vm298, %v1330, %v904
  %v1347 = vsel %vm298, %v1331, %v906
  %v1348 = vsel %vm298, %v1332, %v908
  %v1349 = vsel %vm298, %v1333, %v910
  %v1350 = vsel %vm298, %v1334, %v912
  %v1351 = vsel %vm298, %v1335, %v914
  %v1352 = vsel %vm298, %v1336, %v916
  %v1353 = vsel %vm298, %v1337, %v918
  %v1354 = vsel %vm298, %v1338, %v920
  %v1355 = vsel %vm298, %v1339, %v922
  %v1356 = vsel %vm298, %v1340, %v924
  %vm1357 = vcmask 195584
  %v1358 = vsel %vm1357, %v1341, %v958
  %v1359 = vsel %vm1357, %v1342, %v960
  %v1360 = vsel %vm1357, %v1343, %v962
  %v1361 = vsel %vm1357, %v1344, %v964
  %v1362 = vsel %vm1357, %v1345, %v966
  %v1363 = vsel %vm1357, %v1346, %v968
  %v1364 = vsel %vm1357, %v1347, %v970
  %v1365 = vsel %vm1357, %v1348, %v972
  %v1366 = vsel %vm1357, %v1349, %v974
  %v1367 = vsel %vm1357, %v1350, %v976
  %v1368 = vsel %vm1357, %v1351, %v978
  %v1369 = vsel %vm1357, %v1352, %v980
  %v1370 = vsel %vm1357, %v1353, %v982
  %v1371 = vsel %vm1357, %v1354, %v984
  %v1372 = vsel %vm1357, %v1355, %v986
  %v1373 = vsel %vm1357, %v1356, %v988
  %v1374 = vsel %vm315, %v1358, %v1022
  %v1375 = vsel %vm315, %v1359, %v1024
  %v1376 = vsel %vm315, %v1360, %v1026
  %v1377 = vsel %vm315, %v1361, %v1028
  %v1378 = vsel %vm315, %v1362, %v1030
  %v1379 = vsel %vm315, %v1363, %v1032
  %v1380 = vsel %vm315, %v1364, %v1034
  %v1381 = vsel %vm315, %v1365, %v1036
  %v1382 = vsel %vm315, %v1366, %v1038
  %v1383 = vsel %vm315, %v1367, %v1040
  %v1384 = vsel %vm315, %v1368, %v1042
  %v1385 = vsel %vm315, %v1369, %v1044
  %v1386 = vsel %vm315, %v1370, %v1046
  %v1387 = vsel %vm315, %v1371, %v1048
  %v1388 = vsel %vm315, %v1372, %v1050
  %v1389 = vsel %vm315, %v1373, %v1052
  %vm1390 = vcmask 326656
  %v1391 = vsel %vm1390, %v1374, %v1086
  %v1392 = vsel %vm1390, %v1375, %v1088
  %v1393 = vsel %vm1390, %v1376, %v1090
  %v1394 = vsel %vm1390, %v1377, %v1092
  %v1395 = vsel %vm1390, %v1378, %v1094
  %v1396 = vsel %vm1390, %v1379, %v1096
  %v1397 = vsel %vm1390, %v1380, %v1098
  %v1398 = vsel %vm1390, %v1381, %v1100
  %v1399 = vsel %vm1390, %v1382, %v1102
  %v1400 = vsel %vm1390, %v1383, %v1104
  %v1401 = vsel %vm1390, %v1384, %v1106
  %v1402 = vsel %vm1390, %v1385, %v1108
  %v1403 = vsel %vm1390, %v1386, %v1110
  %v1404 = vsel %vm1390, %v1387, %v1112
  %v1405 = vsel %vm1390, %v1388, %v1114
  %v1406 = vsel %vm1390, %v1389, %v1116
  %v1407 = vsel %vm332, %v1391, %v1150
  %v1408 = vsel %vm332, %v1392, %v1152
  %v1409 = vsel %vm332, %v1393, %v1154
  %v1410 = vsel %vm332, %v1394, %v1156
  %v1411 = vsel %vm332, %v1395, %v1158
  %v1412 = vsel %vm332, %v1396, %v1160
  %v1413 = vsel %vm332, %v1397, %v1162
  %v1414 = vsel %vm332, %v1398, %v1164
  %v1415 = vsel %vm332, %v1399, %v1166
  %v1416 = vsel %vm332, %v1400, %v1168
  %v1417 = vsel %vm332, %v1401, %v1170
  %v1418 = vsel %vm332, %v1402, %v1172
  %v1419 = vsel %vm332, %v1403, %v1174
  %v1420 = vsel %vm332, %v1404, %v1176
  %v1421 = vsel %vm332, %v1405, %v1178
  %v1422 = vsel %vm332, %v1406, %v1180
  %vm1423 = vcmask 457728
  %v1424 = vsel %vm1423, %v1407, %v1214
  %v1425 = vsel %vm1423, %v1408, %v1216
  %v1426 = vsel %vm1423, %v1409, %v1218
  %v1427 = vsel %vm1423, %v1410, %v1220
  %v1428 = vsel %vm1423, %v1411, %v1222
  %v1429 = vsel %vm1423, %v1412, %v1224
  %v1430 = vsel %vm1423, %v1413, %v1226
  %v1431 = vsel %vm1423, %v1414, %v1228
  %v1432 = vsel %vm1423, %v1415, %v1230
  %v1433 = vsel %vm1423, %v1416, %v1232
  %v1434 = vsel %vm1423, %v1417, %v1234
  %v1435 = vsel %vm1423, %v1418, %v1236
  %v1436 = vsel %vm1423, %v1419, %v1238
  %v1437 = vsel %vm1423, %v1420, %v1240
  %v1438 = vsel %vm1423, %v1421, %v1242
  %v1439 = vsel %vm1423, %v1422, %v1244
  %v1440 = vsel %vm357, %v1424, %v1278
  %v1441 = vsel %vm357, %v1425, %v1280
  %v1442 = vsel %vm357, %v1426, %v1282
  %v1443 = vsel %vm357, %v1427, %v1284
  %v1444 = vsel %vm357, %v1428, %v1286
  %v1445 = vsel %vm357, %v1429, %v1288
  %v1446 = vsel %vm357, %v1430, %v1290
  %v1447 = vsel %vm357, %v1431, %v1292
  %v1448 = vsel %vm357, %v1432, %v1294
  %v1449 = vsel %vm357, %v1433, %v1296
  %v1450 = vsel %vm357, %v1434, %v1298
  %v1451 = vsel %vm357, %v1435, %v1300
  %v1452 = vsel %vm357, %v1436, %v1302
  %v1453 = vsel %vm357, %v1437, %v1304
  %v1454 = vsel %vm357, %v1438, %v1306
  %v1455 = vsel %vm357, %v1439, %v1308
  %v1456 = vld [vmem:[%s3] sm:$0xff]
  %v1457 = vld [vmem:[%s3 + $0x8] sm:$0xff]
  %v1458 = vld [vmem:[%s3 + $0x10] sm:$0xff]
  %v1459 = vld [vmem:[%s3 + $0x18] sm:$0xff]
  %v1460 = vld [vmem:[%s3 + $0x20] sm:$0xff]
  %v1461 = vld [vmem:[%s3 + $0x28] sm:$0xff]
  %v1462 = vld [vmem:[%s3 + $0x30] sm:$0xff]
  %v1463 = vld [vmem:[%s3 + $0x38] sm:$0xff]
  %v1464 = vld [vmem:[%s3 + $0x40] sm:$0xff]
  %vm1465 = vcmask 588800
  %v1467 = vsel %vm1465, %v1440, 0
  %v1470 = vsel %vm1465, %v1441, 0
  %v1473 = vsel %vm1465, %v1442, 0
  %v1476 = vsel %vm1465, %v1443, 0
  %v1479 = vsel %vm1465, %v1444, 0
  %v1482 = vsel %vm1465, %v1445, 0
  %v1485 = vsel %vm1465, %v1446, 0
  %v1488 = vsel %vm1465, %v1447, 0
  %v1491 = vsel %vm1465, %v1448, 0
  %v1494 = vsel %vm1465, %v1449, 0
  %v1497 = vsel %vm1465, %v1450, 0
  %v1500 = vsel %vm1465, %v1451, 0
  %v1503 = vsel %vm1465, %v1452, 0
  %v1506 = vsel %vm1465, %v1453, 0
  %v1509 = vsel %vm1465, %v1454, 0
  %v1512 = vsel %vm1465, %v1455, 0
  %1514 = vmatprep.subr.mxu0 0.0
  %1515 = vmatpush1.msra.mxu0 0.0
  %1516 = vmatprep.subr.mxu0 0.0
  %1517 = vmatpush1.msra.mxu0 0.0
  %1518 = vmatprep.subr.mxu0 0.0
  %1519 = vmatpush1.msra.mxu0 0.0
  %1520 = vmatprep.subr.mxu0 0.0
  %1521 = vmatpush1.msra.mxu0 0.0
  %1522 = vmatprep.subr.mxu0 0.0
  %1523 = vmatpush1.msra.mxu0 0.0
  %1524 = vmatprep.subr.mxu0 0.0
  %1525 = vmatpush1.msra.mxu0 0.0
  %1526 = vmatprep.subr.mxu0 0.0
  %1527 = vmatpush1.msra.mxu0 0.0
  %1528 = vmatprep.subr.mxu0 0.0
  %1529 = vmatpush1.msra.mxu0 %v1464
  %1530 = vmatprep.subr.mxu0 0.0
  %1531 = vmatpush1.msra.mxu0 %v1463
  %1532 = vmatprep.subr.mxu0 0.0
  %1533 = vmatpush1.msra.mxu0 %v1462
  %1534 = vmatprep.subr.mxu0 0.0
  %1535 = vmatpush1.msra.mxu0 %v1461
  %1536 = vmatprep.subr.mxu0 0.0
  %1537 = vmatpush1.msra.mxu0 %v1460
  %1538 = vmatprep.subr.mxu0 0.0
  %1539 = vmatpush1.msra.mxu0 %v1459
  %1540 = vmatprep.subr.mxu0 0.0
  %1541 = vmatpush1.msra.mxu0 %v1458
  %1542 = vmatprep.subr.mxu0 0.0
  %1543 = vmatpush1.msra.mxu0 %v1457
  %1544 = vmatprep.subr.mxu0 0.0
  %1545 = vmatpush1.msra.mxu0 %v1456
  %1546 = vmatprep.subr.mxu0 0.0
  %1547 = vmatpush2.msra.mxu0 0.0
  %1548 = vmatprep.subr.mxu0 0.0
  %1549 = vmatpush2.msra.mxu0 0.0
  %1550 = vmatprep.subr.mxu0 0.0
  %1551 = vmatpush2.msra.mxu0 0.0
  %1552 = vmatprep.subr.mxu0 0.0
  %1553 = vmatpush2.msra.mxu0 0.0
  %1554 = vmatprep.subr.mxu0 0.0
  %1555 = vmatpush2.msra.mxu0 0.0
  %1556 = vmatprep.subr.mxu0 0.0
  %1557 = vmatpush2.msra.mxu0 0.0
  %1558 = vmatprep.subr.mxu0 0.0
  %1559 = vmatpush2.msra.mxu0 0.0
  %1560 = vmatprep.subr.mxu0 0.0
  %1561 = vmatpush2.msra.mxu0 0.0
  %1562 = vmatprep.subr.mxu0 0.0
  %1563 = vmatpush2.msra.mxu0 0.0
  %1564 = vmatprep.subr.mxu0 0.0
  %1565 = vmatpush2.msra.mxu0 0.0
  %1566 = vmatprep.subr.mxu0 0.0
  %1567 = vmatpush2.msra.mxu0 0.0
  %1568 = vmatprep.subr.mxu0 0.0
  %1569 = vmatpush2.msra.mxu0 0.0
  %1570 = vmatprep.subr.mxu0 0.0
  %1571 = vmatpush2.msra.mxu0 0.0
  %1572 = vmatprep.subr.mxu0 0.0
  %1573 = vmatpush2.msra.mxu0 0.0
  %1574 = vmatprep.subr.mxu0 0.0
  %1575 = vmatpush2.msra.mxu0 0.0
  %1576 = vmatprep.subr.mxu0 0.0
  %1577 = vmatpush2.msra.mxu0 0.0
  %1578 = vmatprep.mubr.f32.mxu0 0.0
  %1579 = vmatmul.mubr.f32.gmra.mxu0 %v1467
  %v1580 = vpop.f32.mrf.mxu0
  %v1581 = vadd.f32 0.0, %v1580
  %v1582 = vpop.f32.mrf.mxu0
  %1583 = vmatprep.mubr.f32.mxu0 0.0
  %1584 = vmatmul.mubr.f32.gmra.mxu0 %v1470
  %v1585 = vpop.f32.mrf.mxu0
  %v1586 = vadd.f32 0.0, %v1585
  %v1587 = vpop.f32.mrf.mxu0
  %1588 = vmatprep.mubr.f32.mxu0 0.0
  %1589 = vmatmul.mubr.f32.gmra.mxu0 %v1473
  %v1590 = vpop.f32.mrf.mxu0
  %v1591 = vadd.f32 0.0, %v1590
  %v1592 = vpop.f32.mrf.mxu0
  %1593 = vmatprep.mubr.f32.mxu0 0.0
  %1594 = vmatmul.mubr.f32.gmra.mxu0 %v1476
  %v1595 = vpop.f32.mrf.mxu0
  %v1596 = vadd.f32 0.0, %v1595
  %v1597 = vpop.f32.mrf.mxu0
  %1598 = vmatprep.mubr.f32.mxu0 0.0
  %1599 = vmatmul.mubr.f32.gmra.mxu0 %v1479
  %v1600 = vpop.f32.mrf.mxu0
  %v1601 = vadd.f32 0.0, %v1600
  %v1602 = vpop.f32.mrf.mxu0
  %1603 = vmatprep.mubr.f32.mxu0 0.0
  %1604 = vmatmul.mubr.f32.gmra.mxu0 %v1482
  %v1605 = vpop.f32.mrf.mxu0
  %v1606 = vadd.f32 0.0, %v1605
  %v1607 = vpop.f32.mrf.mxu0
  %1608 = vmatprep.mubr.f32.mxu0 0.0
  %1609 = vmatmul.mubr.f32.gmra.mxu0 %v1485
  %v1610 = vpop.f32.mrf.mxu0
  %v1611 = vadd.f32 0.0, %v1610
  %v1612 = vpop.f32.mrf.mxu0
  %1613 = vmatprep.mubr.f32.mxu0 0.0
  %1614 = vmatmul.mubr.f32.gmra.mxu0 %v1488
  %v1615 = vpop.f32.mrf.mxu0
  %v1616 = vadd.f32 0.0, %v1615
  %v1617 = vpop.f32.mrf.mxu0
  %1618 = vmatprep.mubr.f32.mxu0 0.0
  %1619 = vmatmul.mubr.f32.gmra.mxu0 %v1491
  %v1620 = vpop.f32.mrf.mxu0
  %v1621 = vadd.f32 0.0, %v1620
  %v1622 = vpop.f32.mrf.mxu0
  %1623 = vmatprep.mubr.f32.mxu0 0.0
  %1624 = vmatmul.mubr.f32.gmra.mxu0 %v1494
  %v1625 = vpop.f32.mrf.mxu0
  %v1626 = vadd.f32 0.0, %v1625
  %v1627 = vpop.f32.mrf.mxu0
  %1628 = vmatprep.mubr.f32.mxu0 0.0
  %1629 = vmatmul.mubr.f32.gmra.mxu0 %v1497
  %v1630 = vpop.f32.mrf.mxu0
  %v1631 = vadd.f32 0.0, %v1630
  %v1632 = vpop.f32.mrf.mxu0
  %1633 = vmatprep.mubr.f32.mxu0 0.0
  %1634 = vmatmul.mubr.f32.gmra.mxu0 %v1500
  %v1635 = vpop.f32.mrf.mxu0
  %v1636 = vadd.f32 0.0, %v1635
  %v1637 = vpop.f32.mrf.mxu0
  %1638 = vmatprep.mubr.f32.mxu0 0.0
  %1639 = vmatmul.mubr.f32.gmra.mxu0 %v1503
  %v1640 = vpop.f32.mrf.mxu0
  %v1641 = vadd.f32 0.0, %v1640
  %v1642 = vpop.f32.mrf.mxu0
  %1643 = vmatprep.mubr.f32.mxu0 0.0
  %1644 = vmatmul.mubr.f32.gmra.mxu0 %v1506
  %v1645 = vpop.f32.mrf.mxu0
  %v1646 = vadd.f32 0.0, %v1645
  %v1647 = vpop.f32.mrf.mxu0
  %1648 = vmatprep.mubr.f32.mxu0 0.0
  %1649 = vmatmul.mubr.f32.gmra.mxu0 %v1509
  %v1650 = vpop.f32.mrf.mxu0
  %v1651 = vadd.f32 0.0, %v1650
  %v1652 = vpop.f32.mrf.mxu0
  %1653 = vmatprep.mubr.f32.mxu0 0.0
  %1654 = vmatmul.mubr.f32.gmra.mxu0 %v1512
  %v1655 = vpop.f32.mrf.mxu0
  %v1656 = vadd.f32 0.0, %v1655
  %v1657 = vpop.f32.mrf.mxu0
  %1658 = vdwg.mxu0
  %vm1659 = vcmp.gt.f32.partialorder %v1581, 0.0
  %vm1660 = vcmp.gt.f32.partialorder %v1586, 0.0
  %vm1661 = vcmp.gt.f32.partialorder %v1591, 0.0
  %vm1662 = vcmp.gt.f32.partialorder %v1596, 0.0
  %vm1663 = vcmp.gt.f32.partialorder %v1601, 0.0
  %vm1664 = vcmp.gt.f32.partialorder %v1606, 0.0
  %vm1665 = vcmp.gt.f32.partialorder %v1611, 0.0
  %vm1666 = vcmp.gt.f32.partialorder %v1616, 0.0
  %vm1667 = vcmp.gt.f32.partialorder %v1621, 0.0
  %vm1668 = vcmp.gt.f32.partialorder %v1626, 0.0
  %vm1669 = vcmp.gt.f32.partialorder %v1631, 0.0
  %vm1670 = vcmp.gt.f32.partialorder %v1636, 0.0
  %vm1671 = vcmp.gt.f32.partialorder %v1641, 0.0
  %vm1672 = vcmp.gt.f32.partialorder %v1646, 0.0
  %vm1673 = vcmp.gt.f32.partialorder %v1651, 0.0
  %vm1674 = vcmp.gt.f32.partialorder %v1656, 0.0
  %v1675 = vmul.f32 %v1581, 0.2
  %v1676 = vmul.f32 %v1586, 0.2
  %v1677 = vmul.f32 %v1591, 0.2
  %v1678 = vmul.f32 %v1596, 0.2
  %v1679 = vmul.f32 %v1601, 0.2
  %v1680 = vmul.f32 %v1606, 0.2
  %v1681 = vmul.f32 %v1611, 0.2
  %v1682 = vmul.f32 %v1616, 0.2
  %v1683 = vmul.f32 %v1621, 0.2
  %v1684 = vmul.f32 %v1626, 0.2
  %v1685 = vmul.f32 %v1631, 0.2
  %v1686 = vmul.f32 %v1636, 0.2
  %v1687 = vmul.f32 %v1641, 0.2
  %v1688 = vmul.f32 %v1646, 0.2
  %v1689 = vmul.f32 %v1651, 0.2
  %v1690 = vmul.f32 %v1656, 0.2
  %v1691 = vsel %vm1659, %v1581, %v1675
  %v1692 = vsel %vm1660, %v1586, %v1676
  %v1693 = vsel %vm1661, %v1591, %v1677
  %v1694 = vsel %vm1662, %v1596, %v1678
  %v1695 = vsel %vm1663, %v1601, %v1679
  %v1696 = vsel %vm1664, %v1606, %v1680
  %v1697 = vsel %vm1665, %v1611, %v1681
  %v1698 = vsel %vm1666, %v1616, %v1682
  %v1699 = vsel %vm1667, %v1621, %v1683
  %v1700 = vsel %vm1668, %v1626, %v1684
  %v1701 = vsel %vm1669, %v1631, %v1685
  %v1702 = vsel %vm1670, %v1636, %v1686
  %v1703 = vsel %vm1671, %v1641, %v1687
  %v1704 = vsel %vm1672, %v1646, %v1688
  %v1705 = vsel %vm1673, %v1651, %v1689
  %v1706 = vsel %vm1674, %v1656, %v1690
  %v1707 = vld [vmem:[%s1] sm:$0xff]
  %v1708 = vld [vmem:[%s1 + $0x8] sm:$0xff]
  %v1709 = vld [vmem:[%s1 + $0x10] sm:$0xff]
  %v1710 = vld [vmem:[%s1 + $0x18] sm:$0xff]
  %v1711 = vld [vmem:[%s1 + $0x20] sm:$0xff]
  %v1712 = vld [vmem:[%s1 + $0x28] sm:$0xff]
  %v1713 = vld [vmem:[%s1 + $0x30] sm:$0xff]
  %v1714 = vld [vmem:[%s1 + $0x38] sm:$0xff]
  %v1715 = vld [vmem:[%s1 + $0x40] sm:$0xff]
  %v1716 = vld [vmem:[%s1 + $0x48] sm:$0xff]
  %v1717 = vld [vmem:[%s1 + $0x50] sm:$0xff]
  %v1718 = vld [vmem:[%s1 + $0x58] sm:$0xff]
  %v1719 = vld [vmem:[%s1 + $0x60] sm:$0xff]
  %v1720 = vld [vmem:[%s1 + $0x68] sm:$0xff]
  %v1721 = vld [vmem:[%s1 + $0x70] sm:$0xff]
  %v1722 = vld [vmem:[%s1 + $0x78] sm:$0xff]
  %v1723 = vld [vmem:[%s4] sm:$0xf]
  %v1724 = vld [vmem:[%s5] sm:$0x1]
  %v1726 = vlaneseq
  %v1727 = vshrl.u32 %v1726, 7
  %v1728 = vsub.s32 0, %v1727
  %v1729 = vrot.slane %v1724, %v1728
  %vm1731 = vcmask 31744
  %v1733 = vsel %vm1731, %v1707, 0
  %v1736 = vsel %vm1731, %v1708, 0
  %v1739 = vsel %vm1731, %v1709, 0
  %v1742 = vsel %vm1731, %v1710, 0
  %v1745 = vsel %vm1731, %v1711, 0
  %v1748 = vsel %vm1731, %v1712, 0
  %v1751 = vsel %vm1731, %v1713, 0
  %v1754 = vsel %vm1731, %v1714, 0
  %v1757 = vsel %vm1731, %v1715, 0
  %v1760 = vsel %vm1731, %v1716, 0
  %v1763 = vsel %vm1731, %v1717, 0
  %v1766 = vsel %vm1731, %v1718, 0
  %v1769 = vsel %vm1731, %v1719, 0
  %v1772 = vsel %vm1731, %v1720, 0
  %v1775 = vsel %vm1731, %v1721, 0
  %v1778 = vsel %vm1731, %v1722, 0
  %vm1780 = vcmask 1043456
  %v1782 = vsel %vm1780, %v1723, 0
  %1784 = vmatprep.subr.mxu0 0.0
  %1785 = vmatpush1.msra.mxu0 0.0
  %1786 = vmatprep.subr.mxu0 0.0
  %1787 = vmatpush1.msra.mxu0 0.0
  %1788 = vmatprep.subr.mxu0 0.0
  %1789 = vmatpush1.msra.mxu0 0.0
  %1790 = vmatprep.subr.mxu0 0.0
  %1791 = vmatpush1.msra.mxu0 0.0
  %1792 = vmatprep.subr.mxu0 0.0
  %1793 = vmatpush1.msra.mxu0 0.0
  %1794 = vmatprep.subr.mxu0 0.0
  %1795 = vmatpush1.msra.mxu0 0.0
  %1796 = vmatprep.subr.mxu0 0.0
  %1797 = vmatpush1.msra.mxu0 0.0
  %1798 = vmatprep.subr.mxu0 0.0
  %1799 = vmatpush1.msra.mxu0 0.0
  %1800 = vmatprep.subr.mxu0 0.0
  %1801 = vmatpush1.msra.mxu0 0.0
  %1802 = vmatprep.subr.mxu0 0.0
  %1803 = vmatpush1.msra.mxu0 0.0
  %1804 = vmatprep.subr.mxu0 0.0
  %1805 = vmatpush1.msra.mxu0 0.0
  %1806 = vmatprep.subr.mxu0 0.0
  %1807 = vmatpush1.msra.mxu0 0.0
  %1808 = vmatprep.subr.mxu0 0.0
  %1809 = vmatpush1.msra.mxu0 0.0
  %1810 = vmatprep.subr.mxu0 0.0
  %1811 = vmatpush1.msra.mxu0 0.0
  %1812 = vmatprep.subr.mxu0 0.0
  %1813 = vmatpush1.msra.mxu0 0.0
  %1814 = vmatprep.subr.mxu0 0.0
  %1815 = vmatpush1.msra.mxu0 %v1782
  %1816 = vmatprep.subr.mxu0 0.0
  %1817 = vmatpush2.msra.mxu0 0.0
  %1818 = vmatprep.subr.mxu0 0.0
  %1819 = vmatpush2.msra.mxu0 0.0
  %1820 = vmatprep.subr.mxu0 0.0
  %1821 = vmatpush2.msra.mxu0 0.0
  %1822 = vmatprep.subr.mxu0 0.0
  %1823 = vmatpush2.msra.mxu0 0.0
  %1824 = vmatprep.subr.mxu0 0.0
  %1825 = vmatpush2.msra.mxu0 0.0
  %1826 = vmatprep.subr.mxu0 0.0
  %1827 = vmatpush2.msra.mxu0 0.0
  %1828 = vmatprep.subr.mxu0 0.0
  %1829 = vmatpush2.msra.mxu0 0.0
  %1830 = vmatprep.subr.mxu0 0.0
  %1831 = vmatpush2.msra.mxu0 0.0
  %1832 = vmatprep.subr.mxu0 0.0
  %1833 = vmatpush2.msra.mxu0 0.0
  %1834 = vmatprep.subr.mxu0 0.0
  %1835 = vmatpush2.msra.mxu0 0.0
  %1836 = vmatprep.subr.mxu0 0.0
  %1837 = vmatpush2.msra.mxu0 0.0
  %1838 = vmatprep.subr.mxu0 0.0
  %1839 = vmatpush2.msra.mxu0 0.0
  %1840 = vmatprep.subr.mxu0 0.0
  %1841 = vmatpush2.msra.mxu0 0.0
  %1842 = vmatprep.subr.mxu0 0.0
  %1843 = vmatpush2.msra.mxu0 0.0
  %1844 = vmatprep.subr.mxu0 0.0
  %1845 = vmatpush2.msra.mxu0 0.0
  %1846 = vmatprep.subr.mxu0 0.0
  %1847 = vmatpush2.msra.mxu0 0.0
  %1848 = vmatprep.mubr.f32.mxu0 0.0
  %1849 = vmatmul.mubr.f32.gmra.mxu0 %v1733
  %v1850 = vpop.f32.mrf.mxu0
  %v1851 = vadd.f32 %v1729, %v1850
  %v1852 = vpop.f32.mrf.mxu0
  %1853 = vmatprep.mubr.f32.mxu0 0.0
  %1854 = vmatmul.mubr.f32.gmra.mxu0 %v1736
  %v1855 = vpop.f32.mrf.mxu0
  %v1856 = vadd.f32 %v1729, %v1855
  %v1857 = vpop.f32.mrf.mxu0
  %1858 = vmatprep.mubr.f32.mxu0 0.0
  %1859 = vmatmul.mubr.f32.gmra.mxu0 %v1739
  %v1860 = vpop.f32.mrf.mxu0
  %v1861 = vadd.f32 %v1729, %v1860
  %v1862 = vpop.f32.mrf.mxu0
  %1863 = vmatprep.mubr.f32.mxu0 0.0
  %1864 = vmatmul.mubr.f32.gmra.mxu0 %v1742
  %v1865 = vpop.f32.mrf.mxu0
  %v1866 = vadd.f32 %v1729, %v1865
  %v1867 = vpop.f32.mrf.mxu0
  %1868 = vmatprep.mubr.f32.mxu0 0.0
  %1869 = vmatmul.mubr.f32.gmra.mxu0 %v1745
  %v1870 = vpop.f32.mrf.mxu0
  %v1871 = vadd.f32 %v1729, %v1870
  %v1872 = vpop.f32.mrf.mxu0
  %1873 = vmatprep.mubr.f32.mxu0 0.0
  %1874 = vmatmul.mubr.f32.gmra.mxu0 %v1748
  %v1875 = vpop.f32.mrf.mxu0
  %v1876 = vadd.f32 %v1729, %v1875
  %v1877 = vpop.f32.mrf.mxu0
  %1878 = vmatprep.mubr.f32.mxu0 0.0
  %1879 = vmatmul.mubr.f32.gmra.mxu0 %v1751
  %v1880 = vpop.f32.mrf.mxu0
  %v1881 = vadd.f32 %v1729, %v1880
  %v1882 = vpop.f32.mrf.mxu0
  %1883 = vmatprep.mubr.f32.mxu0 0.0
  %1884 = vmatmul.mubr.f32.gmra.mxu0 %v1754
  %v1885 = vpop.f32.mrf.mxu0
  %v1886 = vadd.f32 %v1729, %v1885
  %v1887 = vpop.f32.mrf.mxu0
  %1888 = vmatprep.mubr.f32.mxu0 0.0
  %1889 = vmatmul.mubr.f32.gmra.mxu0 %v1757
  %v1890 = vpop.f32.mrf.mxu0
  %v1891 = vadd.f32 %v1729, %v1890
  %v1892 = vpop.f32.mrf.mxu0
  %1893 = vmatprep.mubr.f32.mxu0 0.0
  %1894 = vmatmul.mubr.f32.gmra.mxu0 %v1760
  %v1895 = vpop.f32.mrf.mxu0
  %v1896 = vadd.f32 %v1729, %v1895
  %v1897 = vpop.f32.mrf.mxu0
  %1898 = vmatprep.mubr.f32.mxu0 0.0
  %1899 = vmatmul.mubr.f32.gmra.mxu0 %v1763
  %v1900 = vpop.f32.mrf.mxu0
  %v1901 = vadd.f32 %v1729, %v1900
  %v1902 = vpop.f32.mrf.mxu0
  %1903 = vmatprep.mubr.f32.mxu0 0.0
  %1904 = vmatmul.mubr.f32.gmra.mxu0 %v1766
  %v1905 = vpop.f32.mrf.mxu0
  %v1906 = vadd.f32 %v1729, %v1905
  %v1907 = vpop.f32.mrf.mxu0
  %1908 = vmatprep.mubr.f32.mxu0 0.0
  %1909 = vmatmul.mubr.f32.gmra.mxu0 %v1769
  %v1910 = vpop.f32.mrf.mxu0
  %v1911 = vadd.f32 %v1729, %v1910
  %v1912 = vpop.f32.mrf.mxu0
  %1913 = vmatprep.mubr.f32.mxu0 0.0
  %1914 = vmatmul.mubr.f32.gmra.mxu0 %v1772
  %v1915 = vpop.f32.mrf.mxu0
  %v1916 = vadd.f32 %v1729, %v1915
  %v1917 = vpop.f32.mrf.mxu0
  %1918 = vmatprep.mubr.f32.mxu0 0.0
  %1919 = vmatmul.mubr.f32.gmra.mxu0 %v1775
  %v1920 = vpop.f32.mrf.mxu0
  %v1921 = vadd.f32 %v1729, %v1920
  %v1922 = vpop.f32.mrf.mxu0
  %1923 = vmatprep.mubr.f32.mxu0 0.0
  %1924 = vmatmul.mubr.f32.gmra.mxu0 %v1778
  %v1925 = vpop.f32.mrf.mxu0
  %v1926 = vadd.f32 %v1729, %v1925
  %v1927 = vpop.f32.mrf.mxu0
  %1928 = vdwg.mxu0
  %s1929 = sld [smem:[#allocation3]]
  %v1930 = vstv %s1929
  %v1931 = vmul.f32 %v1930, %v1691
  %v1932 = vmul.f32 %v1930, %v1692
  %v1933 = vmul.f32 %v1930, %v1693
  %v1934 = vmul.f32 %v1930, %v1694
  %v1935 = vmul.f32 %v1930, %v1695
  %v1936 = vmul.f32 %v1930, %v1696
  %v1937 = vmul.f32 %v1930, %v1697
  %v1938 = vmul.f32 %v1930, %v1698
  %v1939 = vmul.f32 %v1930, %v1699
  %v1940 = vmul.f32 %v1930, %v1700
  %v1941 = vmul.f32 %v1930, %v1701
  %v1942 = vmul.f32 %v1930, %v1702
  %v1943 = vmul.f32 %v1930, %v1703
  %v1944 = vmul.f32 %v1930, %v1704
  %v1945 = vmul.f32 %v1930, %v1705
  %v1946 = vmul.f32 %v1930, %v1706
  %v1947 = vadd.f32 %v1851, %v1931
  %v1948 = vadd.f32 %v1856, %v1932
  %v1949 = vadd.f32 %v1861, %v1933
  %v1950 = vadd.f32 %v1866, %v1934
  %v1951 = vadd.f32 %v1871, %v1935
  %v1952 = vadd.f32 %v1876, %v1936
  %v1953 = vadd.f32 %v1881, %v1937
  %v1954 = vadd.f32 %v1886, %v1938
  %v1955 = vadd.f32 %v1891, %v1939
  %v1956 = vadd.f32 %v1896, %v1940
  %v1957 = vadd.f32 %v1901, %v1941
  %v1958 = vadd.f32 %v1906, %v1942
  %v1959 = vadd.f32 %v1911, %v1943
  %v1960 = vadd.f32 %v1916, %v1944
  %v1961 = vadd.f32 %v1921, %v1945
  %v1962 = vadd.f32 %v1926, %v1946
  %1963 = vst.msk [vmem:[%s7] sm:$0xff] %vm599, %v1947
  %1964 = vst.msk [vmem:[%s7 + $0x8] sm:$0xff] %vm599, %v1948
  %1965 = vst.msk [vmem:[%s7 + $0x10] sm:$0xff] %vm599, %v1949
  %1966 = vst.msk [vmem:[%s7 + $0x18] sm:$0xff] %vm599, %v1950
  %1967 = vst.msk [vmem:[%s7 + $0x20] sm:$0xff] %vm599, %v1951
  %1968 = vst.msk [vmem:[%s7 + $0x28] sm:$0xff] %vm599, %v1952
  %1969 = vst.msk [vmem:[%s7 + $0x30] sm:$0xff] %vm599, %v1953
  %1970 = vst.msk [vmem:[%s7 + $0x38] sm:$0xff] %vm599, %v1954
  %1971 = vst.msk [vmem:[%s7 + $0x40] sm:$0xff] %vm599, %v1955
  %1972 = vst.msk [vmem:[%s7 + $0x48] sm:$0xff] %vm599, %v1956
  %1973 = vst.msk [vmem:[%s7 + $0x50] sm:$0xff] %vm599, %v1957
  %1974 = vst.msk [vmem:[%s7 + $0x58] sm:$0xff] %vm599, %v1958
  %1975 = vst.msk [vmem:[%s7 + $0x60] sm:$0xff] %vm599, %v1959
  %1976 = vst.msk [vmem:[%s7 + $0x68] sm:$0xff] %vm599, %v1960
  %1977 = vst.msk [vmem:[%s7 + $0x70] sm:$0xff] %vm599, %v1961
  %1978 = vst.msk [vmem:[%s7 + $0x78] sm:$0xff] %vm599, %v1962
  // Predicated region
  $region30: #{resd_forward.1} parent=0 // pred_check
    _
  $region31: #{resd_forward.1} parent=0 // pred_check_branch
    %1980 = sbr.rel (0) target = $region33
  $region32: #{resd_forward.1} parent=0 // pred_region
    _
  $region33: #{resd_forward.1} parent=0 // pred_fallthru
    _
  // Predicated region
  $region34: #{resd_forward.1} parent=0 // pred_check
    _
  $region35: #{resd_forward.1} parent=0 // pred_check_branch
    %1982 = sbr.rel (0) target = $region37
  $region36: #{resd_forward.1} parent=0 // pred_region
    _
  $region37: #{resd_forward.1} parent=0 // pred_fallthru
    _

// kernel: resd_forward.1
$region0: #{resd_forward.1}
  #allocation0 [shape = 'u32[]', space=smem, size = 0x4, offset = 0x4, fixed_abs, tag = 'smem constant byte address 0x4 - core index']
  #allocation1 [shape = 'u32[144,128]{1,0:T(1,128)}', space=vmem, size = 0x12000, scoped, tag = 'internal scratch']
  #allocation2 [shape = 'f32[2,10,10,8]{3,2,1,0:T(8,128)}', space=vmem, size = 0x28000, scoped, tag = 'scratch operand']
  #allocation3 [shape = 'f32[1,1]{1,0:T(1,128)S(6)}', space=smem, size = 0x200, scoped, tag = 'scoped memory for resd_forward.1']
  %s0 = inlined_call_operand.vmem [shape: f32[2,9,9,16], index: 0, kind: input, shape index: {}]
  %s1 = inlined_call_operand.vmem [shape: f32[2,64,4], index: 1, kind: input, shape index: {}]
  %s2 = inlined_call_operand.vmem [shape: f32[64,8], index: 2, kind: input, shape index: {}]
  %s3 = inlined_call_operand.vmem [shape: f32[72,8], index: 3, kind: input, shape index: {}]
  %s4 = inlined_call_operand.vmem [shape: f32[4,8], index: 4, kind: input, shape index: {}]
  %s5 = inlined_call_operand.vmem [shape: f32[1,8], index: 5, kind: input, shape index: {}]
  %s6 = inlined_call_operand.<no memory space> [shape: f32[1,1], index: 6, kind: input, shape index: {}]
  %s7 = inlined_call_operand.vmem [shape: f32[2,64,8], index: 7, kind: output, shape index: {}]
  %s8 = sld [smem:[#allocation0]]
  $region38: #{resd_forward.1} parent=0
    _
  %s10 = ssub.s32 1, %s8
  %s11 = scalar_select 0, %s10, %s8
  %12 = sst [smem:[#allocation3]] %s6
  // Predicated region
  $region2: #{resd_forward.1} parent=0 // pred_check
    _
  $region3: #{resd_forward.1} parent=0 // pred_check_branch
    %14 = sbr.rel (0) target = $region5
  $region4: #{resd_forward.1} parent=0 // pred_region
    _
  $region5: #{resd_forward.1} parent=0 // pred_fallthru
    _
  // Predicated region
  $region6: #{resd_forward.1} parent=0 // pred_check
    _
  $region7: #{resd_forward.1} parent=0 // pred_check_branch
    %16 = sbr.rel (0) target = $region9
  $region8: #{resd_forward.1} parent=0 // pred_region
    _
  $region9: #{resd_forward.1} parent=0 // pred_fallthru
    _
  // Predicated region
  $region10: #{resd_forward.1} parent=0 // pred_check
    _
  $region11: #{resd_forward.1} parent=0 // pred_check_branch
    %18 = sbr.rel (0) target = $region13
  $region12: #{resd_forward.1} parent=0 // pred_region
    _
  $region13: #{resd_forward.1} parent=0 // pred_fallthru
    _
  // Predicated region
  $region14: #{resd_forward.1} parent=0 // pred_check
    _
  $region15: #{resd_forward.1} parent=0 // pred_check_branch
    %20 = sbr.rel (0) target = $region17
  $region16: #{resd_forward.1} parent=0 // pred_region
    _
  $region17: #{resd_forward.1} parent=0 // pred_fallthru
    _
  // Predicated region
  $region18: #{resd_forward.1} parent=0 // pred_check
    _
  $region19: #{resd_forward.1} parent=0 // pred_check_branch
    %22 = sbr.rel (0) target = $region21
  $region20: #{resd_forward.1} parent=0 // pred_region
    _
  $region21: #{resd_forward.1} parent=0 // pred_fallthru
    _
  // Predicated region
  $region22: #{resd_forward.1} parent=0 // pred_check
    _
  $region23: #{resd_forward.1} parent=0 // pred_check_branch
    %24 = sbr.rel (0) target = $region25
  $region24: #{resd_forward.1} parent=0 // pred_region
    _
  $region25: #{resd_forward.1} parent=0 // pred_fallthru
    _
  // Predicated region
  $region26: #{resd_forward.1} parent=0 // pred_check
    _
  $region27: #{resd_forward.1} parent=0 // pred_check_branch
    %26 = sbr.rel (0) target = $region29
  $region28: #{resd_forward.1} parent=0 // pred_region
    _
  $region29: #{resd_forward.1} parent=0 // pred_fallthru
    _
  %v27 = vld [vmem:[%s0] sm:$0xff]
  %v28 = vld [vmem:[%s0 + $0x8] sm:$0x1]
  %v29 = vld [vmem:[%s0 + $0x10] sm:$0xff]
  %v30 = vld [vmem:[%s0 + $0x18] sm:$0x1]
  %v31 = vld [vmem:[%s0 + $0x20] sm:$0xff]
  %v32 = vld [vmem:[%s0 + $0x28] sm:$0x1]
  %v33 = vld [vmem:[%s0 + $0x30] sm:$0xff]
  %v34 = vld [vmem:[%s0 + $0x38] sm:$0x1]
  %v35 = vld [vmem:[%s0 + $0x40] sm:$0xff]
  %v36 = vld [vmem:[%s0 + $0x48] sm:$0x1]
  %v37 = vld [vmem:[%s0 + $0x50] sm:$0xff]
  %v38 = vld [vmem:[%s0 + $0x58] sm:$0x1]
  %v39 = vld [vmem:[%s0 + $0x60] sm:$0xff]
  %v40 = vld [vmem:[%s0 + $0x68] sm:$0x1]
  %v41 = vld [vmem:[%s0 + $0x70] sm:$0xff]
  %v42 = vld [vmem:[%s0 + $0x78] sm:$0x1]
  %v43 = vld [vmem:[%s0 + $0x80] sm:$0xff]
  %v44 = vld [vmem:[%s0 + $0x88] sm:$0x1]
  %v45 = vld [vmem:[%s0 + $0x90] sm:$0xff]
  %v46 = vld [vmem:[%s0 + $0x98] sm:$0x1]
  %v47 = vld [vmem:[%s0 + $0xa0] sm:$0xff]
  %v48 = vld [vmem:[%s0 + $0xa8] sm:$0x1]
  %v49 = vld [vmem:[%s0 + $0xb0] sm:$0xff]
  %v50 = vld [vmem:[%s0 + $0xb8] sm:$0x1]
  %v51 = vld [vmem:[%s0 + $0xc0] sm:$0xff]
  %v52 = vld [vmem:[%s0 + $0xc8] sm:$0x1]
  %v53 = vld [vmem:[%s0 + $0xd0] sm:$0xff]
  %v54 = vld [vmem:[%s0 + $0xd8] sm:$0x1]
  %v55 = vld [vmem:[%s0 + $0xe0] sm:$0xff]
  %v56 = vld [vmem:[%s0 + $0xe8] sm:$0x1]
  %v57 = vld [vmem:[%s0 + $0xf0] sm:$0xff]
  %v58 = vld [vmem:[%s0 + $0xf8] sm:$0x1]
  %v59 = vld [vmem:[%s0 + $0x100] sm:$0xff]
  %v60 = vld [vmem:[%s0 + $0x108] sm:$0x1]
  %v61 = vld [vmem:[%s0 + $0x110] sm:$0xff]
  %v62 = vld [vmem:[%s0 + $0x118] sm:$0x1]
  %v63 = vld [vmem:[%s2] sm:$0xff]
  %v64 = vld [vmem:[%s2 + $0x8] sm:$0xff]
  %vm97 = vcmask 1046528
  %v98 = vrot.slane %v27, 1
  %v99 = vrot.slane %v28, 1
  %v100 = vsel %vm97, %v98, %v99
  %v101 = vrot.slane %v29, 1
  %v102 = vrot.slane %v30, 1
  %v103 = vsel %vm97, %v101, %v102
  %v104 = vrot.slane %v31, 1
  %v105 = vrot.slane %v32, 1
  %v106 = vsel %vm97, %v104, %v105
  %v107 = vrot.slane %v33, 1
  %v108 = vrot.slane %v34, 1
  %v109 = vsel %vm97, %v107, %v108
  %v110 = vrot.slane %v35, 1
  %v111 = vrot.slane %v36, 1
  %v112 = vsel %vm97, %v110, %v111
  %v113 = vrot.slane %v37, 1
  %v114 = vrot.slane %v38, 1
  %v115 = vsel %vm97, %v113, %v114
  %v116 = vrot.slane %v39, 1
  %v117 = vrot.slane %v40, 1
  %v118 = vsel %vm97, %v116, %v117
  %v119 = vrot.slane %v41, 1
  %v120 = vrot.slane %v42, 1
  %v121 = vsel %vm97, %v119, %v120
  %v122 = vrot.slane %v45, 1
  %v123 = vrot.slane %v46, 1
  %v124 = vsel %vm97, %v122, %v123
  %v125 = vrot.slane %v47, 1
  %v126 = vrot.slane %v48, 1
  %v127 = vsel %vm97, %v125, %v126
  %v128 = vrot.slane %v49, 1
  %v129 = vrot.slane %v50, 1
  %v130 = vsel %vm97, %v128, %v129
  %v131 = vrot.slane %v51, 1
  %v132 = vrot.slane %v52, 1
  %v133 = vsel %vm97, %v131, %v132
  %v134 = vrot.slane %v53, 1
  %v135 = vrot.slane %v54, 1
  %v136 = vsel %vm97, %v134, %v135
  %v137 = vrot.slane %v55, 1
  %v138 = vrot.slane %v56, 1
  %v139 = vsel %vm97, %v137, %v138
  %v140 = vrot.slane %v57, 1
  %v141 = vrot.slane %v58, 1
  %v142 = vsel %vm97, %v140, %v141
  %v143 = vrot.slane %v59, 1
  %v144 = vrot.slane %v60, 1
  %v145 = vsel %vm97, %v143, %v144
  %v146 = vld [vmem:[%s2 + $0x10] sm:$0xff]
  %v147 = vld [vmem:[%s2 + $0x18] sm:$0xff]
  %vm148 = vcmask 130048
  %v149 = vsel %vm148, %v100, 0
  %v151 = vsel %vm148, %v103, 0
  %v153 = vsel %vm148, %v106, 0
  %v155 = vsel %vm148, %v109, 0
  %v157 = vsel %vm148, %v112, 0
  %v159 = vsel %vm148, %v115, 0
  %v161 = vsel %vm148, %v118, 0
  %v163 = vsel %vm148, %v121, 0
  %v165 = vsel %vm148, %v124, 0
  %v167 = vsel %vm148, %v127, 0
  %v169 = vsel %vm148, %v130, 0
  %v171 = vsel %vm148, %v133, 0
  %v173 = vsel %vm148, %v136, 0
  %v175 = vsel %vm148, %v139, 0
  %v177 = vsel %vm148, %v142, 0
  %v179 = vsel %vm148, %v145, 0
  %181 = vmatprep.subr.mxu0 0.0
  %182 = vmatpush1.msra.mxu0 0.0
  %183 = vmatprep.subr.mxu0 0.0
  %184 = vmatpush1.msra.mxu0 0.0
  %185 = vmatprep.subr.mxu0 0.0
  %186 = vmatpush1.msra.mxu0 0.0
  %187 = vmatprep.subr.mxu0 0.0
  %188 = vmatpush1.msra.mxu0 0.0
  %189 = vmatprep.subr.mxu0 0.0
  %190 = vmatpush1.msra.mxu0 0.0
  %191 = vmatprep.subr.mxu0 0.0
  %192 = vmatpush1.msra.mxu0 0.0
  %193 = vmatprep.subr.mxu0 0.0
  %194 = vmatpush1.msra.mxu0 0.0
  %195 = vmatprep.subr.mxu0 0.0
  %196 = vmatpush1.msra.mxu0 0.0
  %197 = vmatprep.subr.mxu0 0.0
  %198 = vmatpush1.msra.mxu0 0.0
  %199 = vmatprep.subr.mxu0 0.0
  %200 = vmatpush1.msra.mxu0 0.0
  %201 = vmatprep.subr.mxu0 0.0
  %202 = vmatpush1.msra.mxu0 0.0
  %203 = vmatprep.subr.mxu0 0.0
  %204 = vmatpush1.msra.mxu0 0.0
  %205 = vmatprep.subr.mxu0 0.0
  %206 = vmatpush1.msra.mxu0 0.0
  %207 = vmatprep.subr.mxu0 0.0
  %208 = vmatpush1.msra.mxu0 0.0
  %209 = vmatprep.subr.mxu0 0.0
  %210 = vmatpush1.msra.mxu0 %v147
  %211 = vmatprep.subr.mxu0 0.0
  %212 = vmatpush1.msra.mxu0 %v146
  %213 = vmatprep.subr.mxu0 0.0
  %214 = vmatpush2.msra.mxu0 0.0
  %215 = vmatprep.subr.mxu0 0.0
  %216 = vmatpush2.msra.mxu0 0.0
  %217 = vmatprep.subr.mxu0 0.0
  %218 = vmatpush2.msra.mxu0 0.0
  %219 = vmatprep.subr.mxu0 0.0
  %220 = vmatpush2.msra.mxu0 0.0
  %221 = vmatprep.subr.mxu0 0.0
  %222 = vmatpush2.msra.mxu0 0.0
  %223 = vmatprep.subr.mxu0 0.0
  %224 = vmatpush2.msra.mxu0 0.0
  %225 = vmatprep.subr.mxu0 0.0
  %226 = vmatpush2.msra.mxu0 0.0
  %227 = vmatprep.subr.mxu0 0.0
  %228 = vmatpush2.msra.mxu0 0.0
  %229 = vmatprep.subr.mxu0 0.0
  %230 = vmatpush2.msra.mxu0 0.0
  %231 = vmatprep.subr.mxu0 0.0
  %232 = vmatpush2.msra.mxu0 0.0
  %233 = vmatprep.subr.mxu0 0.0
  %234 = vmatpush2.msra.mxu0 0.0
  %235 = vmatprep.subr.mxu0 0.0
  %236 = vmatpush2.msra.mxu0 0.0
  %237 = vmatprep.subr.mxu0 0.0
  %238 = vmatpush2.msra.mxu0 0.0
  %239 = vmatprep.subr.mxu0 0.0
  %240 = vmatpush2.msra.mxu0 0.0
  %241 = vmatprep.subr.mxu0 0.0
  %242 = vmatpush2.msra.mxu0 0.0
  %243 = vmatprep.subr.mxu0 0.0
  %244 = vmatpush2.msra.mxu0 0.0
  %245 = vmatprep.mubr.f32.mxu0 0.0
  %246 = vmatmul.mubr.f32.gmra.mxu0 %v149
  %v247 = vpop.f32.mrf.mxu0
  %v248 = vadd.f32 0.0, %v247
  %v249 = vpop.f32.mrf.mxu0
  %250 = vmatprep.mubr.f32.mxu0 0.0
  %251 = vmatmul.mubr.f32.gmra.mxu0 %v151
  %v252 = vpop.f32.mrf.mxu0
  %v253 = vadd.f32 0.0, %v252
  %v254 = vpop.f32.mrf.mxu0
  %255 = vmatprep.mubr.f32.mxu0 0.0
  %256 = vmatmul.mubr.f32.gmra.mxu0 %v153
  %v257 = vpop.f32.mrf.mxu0
  %v258 = vadd.f32 0.0, %v257
  %v259 = vpop.f32.mrf.mxu0
  %260 = vmatprep.mubr.f32.mxu0 0.0
  %261 = vmatmul.mubr.f32.gmra.mxu0 %v155
  %v262 = vpop.f32.mrf.mxu0
  %v263 = vadd.f32 0.0, %v262
  %v264 = vpop.f32.mrf.mxu0
  %265 = vmatprep.mubr.f32.mxu0 0.0
  %266 = vmatmul.mubr.f32.gmra.mxu0 %v157
  %v267 = vpop.f32.mrf.mxu0
  %v268 = vadd.f32 0.0, %v267
  %v269 = vpop.f32.mrf.mxu0
  %270 = vmatprep.mubr.f32.mxu0 0.0
  %271 = vmatmul.mubr.f32.gmra.mxu0 %v159
  %v272 = vpop.f32.mrf.mxu0
  %v273 = vadd.f32 0.0, %v272
  %v274 = vpop.f32.mrf.mxu0
  %275 = vmatprep.mubr.f32.mxu0 0.0
  %276 = vmatmul.mubr.f32.gmra.mxu0 %v161
  %v277 = vpop.f32.mrf.mxu0
  %v278 = vadd.f32 0.0, %v277
  %v279 = vpop.f32.mrf.mxu0
  %280 = vmatprep.mubr.f32.mxu0 0.0
  %281 = vmatmul.mubr.f32.gmra.mxu0 %v163
  %v282 = vpop.f32.mrf.mxu0
  %v283 = vadd.f32 0.0, %v282
  %v284 = vpop.f32.mrf.mxu0
  %285 = vmatprep.mubr.f32.mxu0 0.0
  %286 = vmatmul.mubr.f32.gmra.mxu0 %v165
  %v287 = vpop.f32.mrf.mxu0
  %v288 = vadd.f32 0.0, %v287
  %v289 = vpop.f32.mrf.mxu0
  %290 = vmatprep.mubr.f32.mxu0 0.0
  %291 = vmatmul.mubr.f32.gmra.mxu0 %v167
  %v292 = vpop.f32.mrf.mxu0
  %v293 = vadd.f32 0.0, %v292
  %v294 = vpop.f32.mrf.mxu0
  %295 = vmatprep.mubr.f32.mxu0 0.0
  %296 = vmatmul.mubr.f32.gmra.mxu0 %v169
  %v297 = vpop.f32.mrf.mxu0
  %v298 = vadd.f32 0.0, %v297
  %v299 = vpop.f32.mrf.mxu0
  %300 = vmatprep.mubr.f32.mxu0 0.0
  %301 = vmatmul.mubr.f32.gmra.mxu0 %v171
  %v302 = vpop.f32.mrf.mxu0
  %v303 = vadd.f32 0.0, %v302
  %v304 = vpop.f32.mrf.mxu0
  %305 = vmatprep.mubr.f32.mxu0 0.0
  %306 = vmatmul.mubr.f32.gmra.mxu0 %v173
  %v307 = vpop.f32.mrf.mxu0
  %v308 = vadd.f32 0.0, %v307
  %v309 = vpop.f32.mrf.mxu0
  %310 = vmatprep.mubr.f32.mxu0 0.0
  %311 = vmatmul.mubr.f32.gmra.mxu0 %v175
  %v312 = vpop.f32.mrf.mxu0
  %v313 = vadd.f32 0.0, %v312
  %v314 = vpop.f32.mrf.mxu0
  %315 = vmatprep.mubr.f32.mxu0 0.0
  %316 = vmatmul.mubr.f32.gmra.mxu0 %v177
  %v317 = vpop.f32.mrf.mxu0
  %v318 = vadd.f32 0.0, %v317
  %v319 = vpop.f32.mrf.mxu0
  %320 = vmatprep.mubr.f32.mxu0 0.0
  %321 = vmatmul.mubr.f32.gmra.mxu0 %v179
  %v322 = vpop.f32.mrf.mxu0
  %v323 = vadd.f32 0.0, %v322
  %v324 = vpop.f32.mrf.mxu0
  %325 = vdwg.mxu0
  %v326 = vsel %vm148, %v27, 0
  %v328 = vsel %vm148, %v29, 0
  %v330 = vsel %vm148, %v31, 0
  %v332 = vsel %vm148, %v33, 0
  %v334 = vsel %vm148, %v35, 0
  %v336 = vsel %vm148, %v37, 0
  %v338 = vsel %vm148, %v39, 0
  %v340 = vsel %vm148, %v41, 0
  %v342 = vsel %vm148, %v45, 0
  %v344 = vsel %vm148, %v47, 0
  %v346 = vsel %vm148, %v49, 0
  %v348 = vsel %vm148, %v51, 0
  %v350 = vsel %vm148, %v53, 0
  %v352 = vsel %vm148, %v55, 0
  %v354 = vsel %vm148, %v57, 0
  %v356 = vsel %vm148, %v59, 0
  %358 = vmatprep.subr.mxu0 0.0
  %359 = vmatpush1.msra.mxu0 0.0
  %360 = vmatprep.subr.mxu0 0.0
  %361 = vmatpush1.msra.mxu0 0.0
  %362 = vmatprep.subr.mxu0 0.0
  %363 = vmatpush1.msra.mxu0 0.0
  %364 = vmatprep.subr.mxu0 0.0
  %365 = vmatpush1.msra.mxu0 0.0
  %366 = vmatprep.subr.mxu0 0.0
  %367 = vmatpush1.msra.mxu0 0.0
  %368 = vmatprep.subr.mxu0 0.0
  %369 = vmatpush1.msra.mxu0 0.0
  %370 = vmatprep.subr.mxu0 0.0
  %371 = vmatpush1.msra.mxu0 0.0
  %372 = vmatprep.subr.mxu0 0.0
  %373 = vmatpush1.msra.mxu0 0.0
  %374 = vmatprep.subr.mxu0 0.0
  %375 = vmatpush1.msra.mxu0 0.0
  %376 = vmatprep.subr.mxu0 0.0
  %377 = vmatpush1.msra.mxu0 0.0
  %378 = vmatprep.subr.mxu0 0.0
  %379 = vmatpush1.msra.mxu0 0.0
  %380 = vmatprep.subr.mxu0 0.0
  %381 = vmatpush1.msra.mxu0 0.0
  %382 = vmatprep.subr.mxu0 0.0
  %383 = vmatpush1.msra.mxu0 0.0
  %384 = vmatprep.subr.mxu0 0.0
  %385 = vmatpush1.msra.mxu0 0.0
  %386 = vmatprep.subr.mxu0 0.0
  %387 = vmatpush1.msra.mxu0 %v64
  %388 = vmatprep.subr.mxu0 0.0
  %389 = vmatpush1.msra.mxu0 %v63
  %390 = vmatprep.subr.mxu0 0.0
  %391 = vmatpush2.msra.mxu0 0.0
  %392 = vmatprep.subr.mxu0 0.0
  %393 = vmatpush2.msra.mxu0 0.0
  %394 = vmatprep.subr.mxu0 0.0
  %395 = vmatpush2.msra.mxu0 0.0
  %396 = vmatprep.subr.mxu0 0.0
  %397 = vmatpush2.msra.mxu0 0.0
  %398 = vmatprep.subr.mxu0 0.0
  %399 = vmatpush2.msra.mxu0 0.0
  %400 = vmatprep.subr.mxu0 0.0
  %401 = vmatpush2.msra.mxu0 0.0
  %402 = vmatprep.subr.mxu0 0.0
  %403 = vmatpush2.msra.mxu0 0.0
  %404 = vmatprep.subr.mxu0 0.0
  %405 = vmatpush2.msra.mxu0 0.0
  %406 = vmatprep.subr.mxu0 0.0
  %407 = vmatpush2.msra.mxu0 0.0
  %408 = vmatprep.subr.mxu0 0.0
  %409 = vmatpush2.msra.mxu0 0.0
  %410 = vmatprep.subr.mxu0 0.0
  %411 = vmatpush2.msra.mxu0 0.0
  %412 = vmatprep.subr.mxu0 0.0
  %413 = vmatpush2.msra.mxu0 0.0
  %414 = vmatprep.subr.mxu0 0.0
  %415 = vmatpush2.msra.mxu0 0.0
  %416 = vmatprep.subr.mxu0 0.0
  %417 = vmatpush2.msra.mxu0 0.0
  %418 = vmatprep.subr.mxu0 0.0
  %419 = vmatpush2.msra.mxu0 0.0
  %420 = vmatprep.subr.mxu0 0.0
  %421 = vmatpush2.msra.mxu0 0.0
  %422 = vmatprep.mubr.f32.mxu0 0.0
  %423 = vmatmul.mubr.f32.gmra.mxu0 %v326
  %v424 = vpop.f32.mrf.mxu0
  %v425 = vadd.f32 %v248, %v424
  %v426 = vpop.f32.mrf.mxu0
  %427 = vmatprep.mubr.f32.mxu0 0.0
  %428 = vmatmul.mubr.f32.gmra.mxu0 %v328
  %v429 = vpop.f32.mrf.mxu0
  %v430 = vadd.f32 %v253, %v429
  %v431 = vpop.f32.mrf.mxu0
  %432 = vmatprep.mubr.f32.mxu0 0.0
  %433 = vmatmul.mubr.f32.gmra.mxu0 %v330
  %v434 = vpop.f32.mrf.mxu0
  %v435 = vadd.f32 %v258, %v434
  %v436 = vpop.f32.mrf.mxu0
  %437 = vmatprep.mubr.f32.mxu0 0.0
  %438 = vmatmul.mubr.f32.gmra.mxu0 %v332
  %v439 = vpop.f32.mrf.mxu0
  %v440 = vadd.f32 %v263, %v439
  %v441 = vpop.f32.mrf.mxu0
  %442 = vmatprep.mubr.f32.mxu0 0.0
  %443 = vmatmul.mubr.f32.gmra.mxu0 %v334
  %v444 = vpop.f32.mrf.mxu0
  %v445 = vadd.f32 %v268, %v444
  %v446 = vpop.f32.mrf.mxu0
  %447 = vmatprep.mubr.f32.mxu0 0.0
  %448 = vmatmul.mubr.f32.gmra.mxu0 %v336
  %v449 = vpop.f32.mrf.mxu0
  %v450 = vadd.f32 %v273, %v449
  %v451 = vpop.f32.mrf.mxu0
  %452 = vmatprep.mubr.f32.mxu0 0.0
  %453 = vmatmul.mubr.f32.gmra.mxu0 %v338
  %v454 = vpop.f32.mrf.mxu0
  %v455 = vadd.f32 %v278, %v454
  %v456 = vpop.f32.mrf.mxu0
  %457 = vmatprep.mubr.f32.mxu0 0.0
  %458 = vmatmul.mubr.f32.gmra.mxu0 %v340
  %v459 = vpop.f32.mrf.mxu0
  %v460 = vadd.f32 %v283, %v459
  %v461 = vpop.f32.mrf.mxu0
  %462 = vmatprep.mubr.f32.mxu0 0.0
  %463 = vmatmul.mubr.f32.gmra.mxu0 %v342
  %v464 = vpop.f32.mrf.mxu0
  %v465 = vadd.f32 %v288, %v464
  %v466 = vpop.f32.mrf.mxu0
  %467 = vmatprep.mubr.f32.mxu0 0.0
  %468 = vmatmul.mubr.f32.gmra.mxu0 %v344
  %v469 = vpop.f32.mrf.mxu0
  %v470 = vadd.f32 %v293, %v469
  %v471 = vpop.f32.mrf.mxu0
  %472 = vmatprep.mubr.f32.mxu0 0.0
  %473 = vmatmul.mubr.f32.gmra.mxu0 %v346
  %v474 = vpop.f32.mrf.mxu0
  %v475 = vadd.f32 %v298, %v474
  %v476 = vpop.f32.mrf.mxu0
  %477 = vmatprep.mubr.f32.mxu0 0.0
  %478 = vmatmul.mubr.f32.gmra.mxu0 %v348
  %v479 = vpop.f32.mrf.mxu0
  %v480 = vadd.f32 %v303, %v479
  %v481 = vpop.f32.mrf.mxu0
  %482 = vmatprep.mubr.f32.mxu0 0.0
  %483 = vmatmul.mubr.f32.gmra.mxu0 %v350
  %v484 = vpop.f32.mrf.mxu0
  %v485 = vadd.f32 %v308, %v484
  %v486 = vpop.f32.mrf.mxu0
  %487 = vmatprep.mubr.f32.mxu0 0.0
  %488 = vmatmul.mubr.f32.gmra.mxu0 %v352
  %v489 = vpop.f32.mrf.mxu0
  %v490 = vadd.f32 %v313, %v489
  %v491 = vpop.f32.mrf.mxu0
  %492 = vmatprep.mubr.f32.mxu0 0.0
  %493 = vmatmul.mubr.f32.gmra.mxu0 %v354
  %v494 = vpop.f32.mrf.mxu0
  %v495 = vadd.f32 %v318, %v494
  %v496 = vpop.f32.mrf.mxu0
  %497 = vmatprep.mubr.f32.mxu0 0.0
  %498 = vmatmul.mubr.f32.gmra.mxu0 %v356
  %v499 = vpop.f32.mrf.mxu0
  %v500 = vadd.f32 %v323, %v499
  %v501 = vpop.f32.mrf.mxu0
  %502 = vdwg.mxu0
  %v503 = vld [vmem:[%s2 + $0x20] sm:$0xff]
  %v504 = vld [vmem:[%s2 + $0x28] sm:$0xff]
  %v506 = vsel %vm148, %v43, 0
  %v509 = vsel %vm148, %v61, 0
  %511 = vmatprep.subr.mxu0 0.0
  %512 = vmatpush1.msra.mxu0 0.0
  %513 = vmatprep.subr.mxu0 0.0
  %514 = vmatpush1.msra.mxu0 0.0
  %515 = vmatprep.subr.mxu0 0.0
  %516 = vmatpush1.msra.mxu0 0.0
  %517 = vmatprep.subr.mxu0 0.0
  %518 = vmatpush1.msra.mxu0 0.0
  %519 = vmatprep.subr.mxu0 0.0
  %520 = vmatpush1.msra.mxu0 0.0
  %521 = vmatprep.subr.mxu0 0.0
  %522 = vmatpush1.msra.mxu0 0.0
  %523 = vmatprep.subr.mxu0 0.0
  %524 = vmatpush1.msra.mxu0 0.0
  %525 = vmatprep.subr.mxu0 0.0
  %526 = vmatpush1.msra.mxu0 0.0
  %527 = vmatprep.subr.mxu0 0.0
  %528 = vmatpush1.msra.mxu0 0.0
  %529 = vmatprep.subr.mxu0 0.0
  %530 = vmatpush1.msra.mxu0 0.0
  %531 = vmatprep.subr.mxu0 0.0
  %532 = vmatpush1.msra.mxu0 0.0
  %533 = vmatprep.subr.mxu0 0.0
  %534 = vmatpush1.msra.mxu0 0.0
  %535 = vmatprep.subr.mxu0 0.0
  %536 = vmatpush1.msra.mxu0 0.0
  %537 = vmatprep.subr.mxu0 0.0
  %538 = vmatpush1.msra.mxu0 0.0
  %539 = vmatprep.subr.mxu0 0.0
  %540 = vmatpush1.msra.mxu0 %v504
  %541 = vmatprep.subr.mxu0 0.0
  %542 = vmatpush1.msra.mxu0 %v503
  %543 = vmatprep.subr.mxu0 0.0
  %544 = vmatpush2.msra.mxu0 0.0
  %545 = vmatprep.subr.mxu0 0.0
  %546 = vmatpush2.msra.mxu0 0.0
  %547 = vmatprep.subr.mxu0 0.0
  %548 = vmatpush2.msra.mxu0 0.0
  %549 = vmatprep.subr.mxu0 0.0
  %550 = vmatpush2.msra.mxu0 0.0
  %551 = vmatprep.subr.mxu0 0.0
  %552 = vmatpush2.msra.mxu0 0.0
  %553 = vmatprep.subr.mxu0 0.0
  %554 = vmatpush2.msra.mxu0 0.0
  %555 = vmatprep.subr.mxu0 0.0
  %556 = vmatpush2.msra.mxu0 0.0
  %557 = vmatprep.subr.mxu0 0.0
  %558 = vmatpush2.msra.mxu0 0.0
  %559 = vmatprep.subr.mxu0 0.0
  %560 = vmatpush2.msra.mxu0 0.0
  %561 = vmatprep.subr.mxu0 0.0
  %562 = vmatpush2.msra.mxu0 0.0
  %563 = vmatprep.subr.mxu0 0.0
  %564 = vmatpush2.msra.mxu0 0.0
  %565 = vmatprep.subr.mxu0 0.0
  %566 = vmatpush2.msra.mxu0 0.0
  %567 = vmatprep.subr.mxu0 0.0
  %568 = vmatpush2.msra.mxu0 0.0
  %569 = vmatprep.subr.mxu0 0.0
  %570 = vmatpush2.msra.mxu0 0.0
  %571 = vmatprep.subr.mxu0 0.0
  %572 = vmatpush2.msra.mxu0 0.0
  %573 = vmatprep.subr.mxu0 0.0
  %574 = vmatpush2.msra.mxu0 0.0
  %575 = vmatprep.mubr.f32.mxu0 0.0
  %576 = vmatmul.mubr.f32.gmra.mxu0 %v328
  %v577 = vpop.f32.mrf.mxu0
  %v578 = vadd.f32 0.0, %v577
  %v579 = vpop.f32.mrf.mxu0
  %580 = vmatprep.mubr.f32.mxu0 0.0
  %581 = vmatmul.mubr.f32.gmra.mxu0 %v330
  %v582 = vpop.f32.mrf.mxu0
  %v583 = vadd.f32 0.0, %v582
  %v584 = vpop.f32.mrf.mxu0
  %585 = vmatprep.mubr.f32.mxu0 0.0
  %586 = vmatmul.mubr.f32.gmra.mxu0 %v332
  %v587 = vpop.f32.mrf.mxu0
  %v588 = vadd.f32 0.0, %v587
  %v589 = vpop.f32.mrf.mxu0
  %590 = vmatprep.mubr.f32.mxu0 0.0
  %591 = vmatmul.mubr.f32.gmra.mxu0 %v334
  %v592 = vpop.f32.mrf.mxu0
  %v593 = vadd.f32 0.0, %v592
  %v594 = vpop.f32.mrf.mxu0
  %595 = vmatprep.mubr.f32.mxu0 0.0
  %596 = vmatmul.mubr.f32.gmra.mxu0 %v336
  %v597 = vpop.f32.mrf.mxu0
  %v598 = vadd.f32 0.0, %v597
  %v599 = vpop.f32.mrf.mxu0
  %600 = vmatprep.mubr.f32.mxu0 0.0
  %601 = vmatmul.mubr.f32.gmra.mxu0 %v338
  %v602 = vpop.f32.mrf.mxu0
  %v603 = vadd.f32 0.0, %v602
  %v604 = vpop.f32.mrf.mxu0
  %605 = vmatprep.mubr.f32.mxu0 0.0
  %606 = vmatmul.mubr.f32.gmra.mxu0 %v340
  %v607 = vpop.f32.mrf.mxu0
  %v608 = vadd.f32 0.0, %v607
  %v609 = vpop.f32.mrf.mxu0
  %610 = vmatprep.mubr.f32.mxu0 0.0
  %611 = vmatmul.mubr.f32.gmra.mxu0 %v506
  %v612 = vpop.f32.mrf.mxu0
  %v613 = vadd.f32 0.0, %v612
  %v614 = vpop.f32.mrf.mxu0
  %615 = vmatprep.mubr.f32.mxu0 0.0
  %616 = vmatmul.mubr.f32.gmra.mxu0 %v344
  %v617 = vpop.f32.mrf.mxu0
  %v618 = vadd.f32 0.0, %v617
  %v619 = vpop.f32.mrf.mxu0
  %620 = vmatprep.mubr.f32.mxu0 0.0
  %621 = vmatmul.mubr.f32.gmra.mxu0 %v346
  %v622 = vpop.f32.mrf.mxu0
  %v623 = vadd.f32 0.0, %v622
  %v624 = vpop.f32.mrf.mxu0
  %625 = vmatprep.mubr.f32.mxu0 0.0
  %626 = vmatmul.mubr.f32.gmra.mxu0 %v348
  %v627 = vpop.f32.mrf.mxu0
  %v628 = vadd.f32 0.0, %v627
  %v629 = vpop.f32.mrf.mxu0
  %630 = vmatprep.mubr.f32.mxu0 0.0
  %631 = vmatmul.mubr.f32.gmra.mxu0 %v350
  %v632 = vpop.f32.mrf.mxu0
  %v633 = vadd.f32 0.0, %v632
  %v634 = vpop.f32.mrf.mxu0
  %635 = vmatprep.mubr.f32.mxu0 0.0
  %636 = vmatmul.mubr.f32.gmra.mxu0 %v352
  %v637 = vpop.f32.mrf.mxu0
  %v638 = vadd.f32 0.0, %v637
  %v639 = vpop.f32.mrf.mxu0
  %640 = vmatprep.mubr.f32.mxu0 0.0
  %641 = vmatmul.mubr.f32.gmra.mxu0 %v354
  %v642 = vpop.f32.mrf.mxu0
  %v643 = vadd.f32 0.0, %v642
  %v644 = vpop.f32.mrf.mxu0
  %645 = vmatprep.mubr.f32.mxu0 0.0
  %646 = vmatmul.mubr.f32.gmra.mxu0 %v356
  %v647 = vpop.f32.mrf.mxu0
  %v648 = vadd.f32 0.0, %v647
  %v649 = vpop.f32.mrf.mxu0
  %650 = vmatprep.mubr.f32.mxu0 0.0
  %651 = vmatmul.mubr.f32.gmra.mxu0 %v509
  %v652 = vpop.f32.mrf.mxu0
  %v653 = vadd.f32 0.0, %v652
  %v654 = vpop.f32.mrf.mxu0
  %655 = vdwg.mxu0
  %v656 = vadd.f32 %v425, %v578
  %v657 = vadd.f32 %v430, %v583
  %v658 = vadd.f32 %v435, %v588
  %v659 = vadd.f32 %v440, %v593
  %v660 = vadd.f32 %v445, %v598
  %v661 = vadd.f32 %v450, %v603
  %v662 = vadd.f32 %v455, %v608
  %v663 = vadd.f32 %v460, %v613
  %v664 = vadd.f32 %v465, %v618
  %v665 = vadd.f32 %v470, %v623
  %v666 = vadd.f32 %v475, %v628
  %v667 = vadd.f32 %v480, %v633
  %v668 = vadd.f32 %v485, %v638
  %v669 = vadd.f32 %v490, %v643
  %v670 = vadd.f32 %v495, %v648
  %v671 = vadd.f32 %v500, %v653
  %v674 = vrot.slane %v43, 1
  %v675 = vrot.slane %v44, 1
  %v676 = vsel %vm97, %v674, %v675
  %v677 = vrot.slane %v61, 1
  %v678 = vrot.slane %v62, 1
  %v679 = vsel %vm97, %v677, %v678
  %v680 = vld [vmem:[%s2 + $0x30] sm:$0xff]
  %v681 = vld [vmem:[%s2 + $0x38] sm:$0xff]
  %v682 = vsel %vm148, %v676, 0
  %v684 = vsel %vm148, %v679, 0
  %686 = vmatprep.subr.mxu0 0.0
  %687 = vmatpush1.msra.mxu0 0.0
  %688 = vmatprep.subr.mxu0 0.0
  %689 = vmatpush1.msra.mxu0 0.0
  %690 = vmatprep.subr.mxu0 0.0
  %691 = vmatpush1.msra.mxu0 0.0
  %692 = vmatprep.subr.mxu0 0.0
  %693 = vmatpush1.msra.mxu0 0.0
  %694 = vmatprep.subr.mxu0 0.0
  %695 = vmatpush1.msra.mxu0 0.0
  %696 = vmatprep.subr.mxu0 0.0
  %697 = vmatpush1.msra.mxu0 0.0
  %698 = vmatprep.subr.mxu0 0.0
  %699 = vmatpush1.msra.mxu0 0.0
  %700 = vmatprep.subr.mxu0 0.0
  %701 = vmatpush1.msra.mxu0 0.0
  %702 = vmatprep.subr.mxu0 0.0
  %703 = vmatpush1.msra.mxu0 0.0
  %704 = vmatprep.subr.mxu0 0.0
  %705 = vmatpush1.msra.mxu0 0.0
  %706 = vmatprep.subr.mxu0 0.0
  %707 = vmatpush1.msra.mxu0 0.0
  %708 = vmatprep.subr.mxu0 0.0
  %709 = vmatpush1.msra.mxu0 0.0
  %710 = vmatprep.subr.mxu0 0.0
  %711 = vmatpush1.msra.mxu0 0.0
  %712 = vmatprep.subr.mxu0 0.0
  %713 = vmatpush1.msra.mxu0 0.0
  %714 = vmatprep.subr.mxu0 0.0
  %715 = vmatpush1.msra.mxu0 %v681
  %716 = vmatprep.subr.mxu0 0.0
  %717 = vmatpush1.msra.mxu0 %v680
  %718 = vmatprep.subr.mxu0 0.0
  %719 = vmatpush2.msra.mxu0 0.0
  %720 = vmatprep.subr.mxu0 0.0
  %721 = vmatpush2.msra.mxu0 0.0
  %722 = vmatprep.subr.mxu0 0.0
  %723 = vmatpush2.msra.mxu0 0.0
  %724 = vmatprep.subr.mxu0 0.0
  %725 = vmatpush2.msra.mxu0 0.0
  %726 = vmatprep.subr.mxu0 0.0
  %727 = vmatpush2.msra.mxu0 0.0
  %728 = vmatprep.subr.mxu0 0.0
  %729 = vmatpush2.msra.mxu0 0.0
  %730 = vmatprep.subr.mxu0 0.0
  %731 = vmatpush2.msra.mxu0 0.0
  %732 = vmatprep.subr.mxu0 0.0
  %733 = vmatpush2.msra.mxu0 0.0
  %734 = vmatprep.subr.mxu0 0.0
  %735 = vmatpush2.msra.mxu0 0.0
  %736 = vmatprep.subr.mxu0 0.0
  %737 = vmatpush2.msra.mxu0 0.0
  %738 = vmatprep.subr.mxu0 0.0
  %739 = vmatpush2.msra.mxu0 0.0
  %740 = vmatprep.subr.mxu0 0.0
  %741 = vmatpush2.msra.mxu0 0.0
  %742 = vmatprep.subr.mxu0 0.0
  %743 = vmatpush2.msra.mxu0 0.0
  %744 = vmatprep.subr.mxu0 0.0
  %745 = vmatpush2.msra.mxu0 0.0
  %746 = vmatprep.subr.mxu0 0.0
  %747 = vmatpush2.msra.mxu0 0.0
  %748 = vmatprep.subr.mxu0 0.0
  %749 = vmatpush2.msra.mxu0 0.0
  %750 = vmatprep.mubr.f32.mxu0 0.0
  %751 = vmatmul.mubr.f32.gmra.mxu0 %v151
  %v752 = vpop.f32.mrf.mxu0
  %v753 = vadd.f32 0.0, %v752
  %v754 = vpop.f32.mrf.mxu0
  %755 = vmatprep.mubr.f32.mxu0 0.0
  %756 = vmatmul.mubr.f32.gmra.mxu0 %v153
  %v757 = vpop.f32.mrf.mxu0
  %v758 = vadd.f32 0.0, %v757
  %v759 = vpop.f32.mrf.mxu0
  %760 = vmatprep.mubr.f32.mxu0 0.0
  %761 = vmatmul.mubr.f32.gmra.mxu0 %v155
  %v762 = vpop.f32.mrf.mxu0
  %v763 = vadd.f32 0.0, %v762
  %v764 = vpop.f32.mrf.mxu0
  %765 = vmatprep.mubr.f32.mxu0 0.0
  %766 = vmatmul.mubr.f32.gmra.mxu0 %v157
  %v767 = vpop.f32.mrf.mxu0
  %v768 = vadd.f32 0.0, %v767
  %v769 = vpop.f32.mrf.mxu0
  %770 = vmatprep.mubr.f32.mxu0 0.0
  %771 = vmatmul.mubr.f32.gmra.mxu0 %v159
  %v772 = vpop.f32.mrf.mxu0
  %v773 = vadd.f32 0.0, %v772
  %v774 = vpop.f32.mrf.mxu0
  %775 = vmatprep.mubr.f32.mxu0 0.0
  %776 = vmatmul.mubr.f32.gmra.mxu0 %v161
  %v777 = vpop.f32.mrf.mxu0
  %v778 = vadd.f32 0.0, %v777
  %v779 = vpop.f32.mrf.mxu0
  %780 = vmatprep.mubr.f32.mxu0 0.0
  %781 = vmatmul.mubr.f32.gmra.mxu0 %v163
  %v782 = vpop.f32.mrf.mxu0
  %v783 = vadd.f32 0.0, %v782
  %v784 = vpop.f32.mrf.mxu0
  %785 = vmatprep.mubr.f32.mxu0 0.0
  %786 = vmatmul.mubr.f32.gmra.mxu0 %v682
  %v787 = vpop.f32.mrf.mxu0
  %v788 = vadd.f32 0.0, %v787
  %v789 = vpop.f32.mrf.mxu0
  %790 = vmatprep.mubr.f32.mxu0 0.0
  %791 = vmatmul.mubr.f32.gmra.mxu0 %v167
  %v792 = vpop.f32.mrf.mxu0
  %v793 = vadd.f32 0.0, %v792
  %v794 = vpop.f32.mrf.mxu0
  %795 = vmatprep.mubr.f32.mxu0 0.0
  %796 = vmatmul.mubr.f32.gmra.mxu0 %v169
  %v797 = vpop.f32.mrf.mxu0
  %v798 = vadd.f32 0.0, %v797
  %v799 = vpop.f32.mrf.mxu0
  %800 = vmatprep.mubr.f32.mxu0 0.0
  %801 = vmatmul.mubr.f32.gmra.mxu0 %v171
  %v802 = vpop.f32.mrf.mxu0
  %v803 = vadd.f32 0.0, %v802
  %v804 = vpop.f32.mrf.mxu0
  %805 = vmatprep.mubr.f32.mxu0 0.0
  %806 = vmatmul.mubr.f32.gmra.mxu0 %v173
  %v807 = vpop.f32.mrf.mxu0
  %v808 = vadd.f32 0.0, %v807
  %v809 = vpop.f32.mrf.mxu0
  %810 = vmatprep.mubr.f32.mxu0 0.0
  %811 = vmatmul.mubr.f32.gmra.mxu0 %v175
  %v812 = vpop.f32.mrf.mxu0
  %v813 = vadd.f32 0.0, %v812
  %v814 = vpop.f32.mrf.mxu0
  %815 = vmatprep.mubr.f32.mxu0 0.0
  %816 = vmatmul.mubr.f32.gmra.mxu0 %v177
  %v817 = vpop.f32.mrf.mxu0
  %v818 = vadd.f32 0.0, %v817
  %v819 = vpop.f32.mrf.mxu0
  %820 = vmatprep.mubr.f32.mxu0 0.0
  %821 = vmatmul.mubr.f32.gmra.mxu0 %v179
  %v822 = vpop.f32.mrf.mxu0
  %v823 = vadd.f32 0.0, %v822
  %v824 = vpop.f32.mrf.mxu0
  %825 = vmatprep.mubr.f32.mxu0 0.0
  %826 = vmatmul.mubr.f32.gmra.mxu0 %v684
  %v827 = vpop.f32.mrf.mxu0
  %v828 = vadd.f32 0.0, %v827
  %v829 = vpop.f32.mrf.mxu0
  %830 = vdwg.mxu0
  %v831 = vadd.f32 %v656, %v753
  %v832 = vadd.f32 %v657, %v758
  %v833 = vadd.f32 %v658, %v763
  %v834 = vadd.f32 %v659, %v768
  %v835 = vadd.f32 %v660, %v773
  %v836 = vadd.f32 %v661, %v778
  %v837 = vadd.f32 %v662, %v783
  %v838 = vadd.f32 %v663, %v788
  %v839 = vadd.f32 %v664, %v793
  %v840 = vadd.f32 %v665, %v798
  %v841 = vadd.f32 %v666, %v803
  %v842 = vadd.f32 %v667, %v808
  %v843 = vadd.f32 %v668, %v813
  %v844 = vadd.f32 %v669, %v818
  %v845 = vadd.f32 %v670, %v823
  %v846 = vadd.f32 %v671, %v828
  %vm847 = vcmp.gt.f32.partialorder %v831, 0.0
  %vm848 = vcmp.gt.f32.partialorder %v832, 0.0
  %vm849 = vcmp.gt.f32.partialorder %v833, 0.0
  %vm850 = vcmp.gt.f32.partialorder %v834, 0.0
  %vm851 = vcmp.gt.f32.partialorder %v835, 0.0
  %vm852 = vcmp.gt.f32.partialorder %v836, 0.0
  %vm853 = vcmp.gt.f32.partialorder %v837, 0.0
  %vm854 = vcmp.gt.f32.partialorder %v838, 0.0
  %vm855 = vcmp.gt.f32.partialorder %v839, 0.0
  %vm856 = vcmp.gt.f32.partialorder %v840, 0.0
  %vm857 = vcmp.gt.f32.partialorder %v841, 0.0
  %vm858 = vcmp.gt.f32.partialorder %v842, 0.0
  %vm859 = vcmp.gt.f32.partialorder %v843, 0.0
  %vm860 = vcmp.gt.f32.partialorder %v844, 0.0
  %vm861 = vcmp.gt.f32.partialorder %v845, 0.0
  %vm862 = vcmp.gt.f32.partialorder %v846, 0.0
  %v863 = vmul.f32 %v831, 0.2
  %v864 = vmul.f32 %v832, 0.2
  %v865 = vmul.f32 %v833, 0.2
  %v866 = vmul.f32 %v834, 0.2
  %v867 = vmul.f32 %v835, 0.2
  %v868 = vmul.f32 %v836, 0.2
  %v869 = vmul.f32 %v837, 0.2
  %v870 = vmul.f32 %v838, 0.2
  %v871 = vmul.f32 %v839, 0.2
  %v872 = vmul.f32 %v840, 0.2
  %v873 = vmul.f32 %v841, 0.2
  %v874 = vmul.f32 %v842, 0.2
  %v875 = vmul.f32 %v843, 0.2
  %v876 = vmul.f32 %v844, 0.2
  %v877 = vmul.f32 %v845, 0.2
  %v878 = vmul.f32 %v846, 0.2
  %v879 = vsel %vm847, %v831, %v863
  %v880 = vsel %vm848, %v832, %v864
  %v881 = vsel %vm849, %v833, %v865
  %v882 = vsel %vm850, %v834, %v866
  %v883 = vsel %vm851, %v835, %v867
  %v884 = vsel %vm852, %v836, %v868
  %v885 = vsel %vm853, %v837, %v869
  %v886 = vsel %vm854, %v838, %v870
  %v887 = vsel %vm855, %v839, %v871
  %v888 = vsel %vm856, %v840, %v872
  %v889 = vsel %vm857, %v841, %v873
  %v890 = vsel %vm858, %v842, %v874
  %v891 = vsel %vm859, %v843, %v875
  %v892 = vsel %vm860, %v844, %v876
  %v893 = vsel %vm861, %v845, %v877
  %v894 = vsel %vm862, %v846, %v878
  %vm895 = vcmask 64512
  %896 = vst.msk [vmem:[#allocation2] sm:$0xff] %vm895, 0.0
  %vm897 = vcmask 58368
  %898 = vst.msk [vmem:[#allocation2 + $0x8] sm:$0x3] %vm897, 0.0
  %899 = vst.msk [vmem:[#allocation2 + $0xa0] sm:$0xff] %vm895, 0.0
  %900 = vst.msk [vmem:[#allocation2 + $0xa8] sm:$0x3] %vm897, 0.0
  %s901 = scalar_lea.vmem [#allocation2], 144
  %902 = vst.msk [vmem:[%s901] sm:$0xff] %vm895, 0.0
  %903 = vst.msk [vmem:[%s901 + $0x8] sm:$0x3] %vm897, 0.0
  %904 = vst.msk [vmem:[%s901 + $0xa0] sm:$0xff] %vm895, 0.0
  %905 = vst.msk [vmem:[%s901 + $0xa8] sm:$0x3] %vm897, 0.0
  %vm906 = vcmask 57344
  %907 = vst.msk [vmem:[#allocation2] sm:$0x1] %vm906, 0.0
  %908 = vst.msk [vmem:[#allocation2 + $0x10] sm:$0x1] %vm906, 0.0
  %909 = vst.msk [vmem:[#allocation2 + $0x20] sm:$0x1] %vm906, 0.0
  %910 = vst.msk [vmem:[#allocation2 + $0x30] sm:$0x1] %vm906, 0.0
  %911 = vst.msk [vmem:[#allocation2 + $0x40] sm:$0x1] %vm906, 0.0
  %912 = vst.msk [vmem:[#allocation2 + $0x50] sm:$0x1] %vm906, 0.0
  %913 = vst.msk [vmem:[#allocation2 + $0x60] sm:$0x1] %vm906, 0.0
  %914 = vst.msk [vmem:[#allocation2 + $0x70] sm:$0x1] %vm906, 0.0
  %915 = vst.msk [vmem:[#allocation2 + $0x80] sm:$0x1] %vm906, 0.0
  %916 = vst.msk [vmem:[#allocation2 + $0x90] sm:$0x1] %vm906, 0.0
  %917 = vst.msk [vmem:[#allocation2 + $0xa0] sm:$0x1] %vm906, 0.0
  %918 = vst.msk [vmem:[#allocation2 + $0xb0] sm:$0x1] %vm906, 0.0
  %919 = vst.msk [vmem:[#allocation2 + $0xc0] sm:$0x1] %vm906, 0.0
  %920 = vst.msk [vmem:[#allocation2 + $0xd0] sm:$0x1] %vm906, 0.0
  %921 = vst.msk [vmem:[#allocation2 + $0xe0] sm:$0x1] %vm906, 0.0
  %922 = vst.msk [vmem:[#allocation2 + $0xf0] sm:$0x1] %vm906, 0.0
  %923 = vst.msk [vmem:[#allocation2 + $0x100] sm:$0x1] %vm906, 0.0
  %924 = vst.msk [vmem:[#allocation2 + $0x110] sm:$0x1] %vm906, 0.0
  %925 = vst.msk [vmem:[#allocation2 + $0x120] sm:$0x1] %vm906, 0.0
  %926 = vst.msk [vmem:[#allocation2 + $0x130] sm:$0x1] %vm906, 0.0
  %927 = vst.msk [vmem:[#allocation2 + $0x9] sm:$0x1] %vm906, 0.0
  %928 = vst.msk [vmem:[#allocation2 + $0x19] sm:$0x1] %vm906, 0.0
  %929 = vst.msk [vmem:[#allocation2 + $0x29] sm:$0x1] %vm906, 0.0
  %930 = vst.msk [vmem:[#allocation2 + $0x39] sm:$0x1] %vm906, 0.0
  %931 = vst.msk [vmem:[#allocation2 + $0x49] sm:$0x1] %vm906, 0.0
  %932 = vst.msk [vmem:[#allocation2 + $0x59] sm:$0x1] %vm906, 0.0
  %933 = vst.msk [vmem:[#allocation2 + $0x69] sm:$0x1] %vm906, 0.0
  %934 = vst.msk [vmem:[#allocation2 + $0x79] sm:$0x1] %vm906, 0.0
  %935 = vst.msk [vmem:[#allocation2 + $0x89] sm:$0x1] %vm906, 0.0
  %936 = vst.msk [vmem:[#allocation2 + $0x99] sm:$0x1] %vm906, 0.0
  %937 = vst.msk [vmem:[#allocation2 + $0xa9] sm:$0x1] %vm906, 0.0
  %938 = vst.msk [vmem:[#allocation2 + $0xb9] sm:$0x1] %vm906, 0.0
  %939 = vst.msk [vmem:[#allocation2 + $0xc9] sm:$0x1] %vm906, 0.0
  %940 = vst.msk [vmem:[#allocation2 + $0xd9] sm:$0x1] %vm906, 0.0
  %941 = vst.msk [vmem:[#allocation2 + $0xe9] sm:$0x1] %vm906, 0.0
  %942 = vst.msk [vmem:[#allocation2 + $0xf9] sm:$0x1] %vm906, 0.0
  %943 = vst.msk [vmem:[#allocation2 + $0x109] sm:$0x1] %vm906, 0.0
  %944 = vst.msk [vmem:[#allocation2 + $0x119] sm:$0x1] %vm906, 0.0
  %945 = vst.msk [vmem:[#allocation2 + $0x129] sm:$0x1] %vm906, 0.0
  %946 = vst.msk [vmem:[#allocation2 + $0x139] sm:$0x1] %vm906, 0.0
  %s947 = scalar_lea.vmem [#allocation2], 16
  %948 = vst.msk [vmem:[%s947 + $0x1] sm:$0xff] %vm895, %v879
  %949 = vst.msk [vmem:[%s947 + $0x11] sm:$0xff] %vm895, %v880
  %950 = vst.msk [vmem:[%s947 + $0x21] sm:$0xff] %vm895, %v881
  %951 = vst.msk [vmem:[%s947 + $0x31] sm:$0xff] %vm895, %v882
  %952 = vst.msk [vmem:[%s947 + $0x41] sm:$0xff] %vm895, %v883
  %953 = vst.msk [vmem:[%s947 + $0x51] sm:$0xff] %vm895, %v884
  %954 = vst.msk [vmem:[%s947 + $0x61] sm:$0xff] %vm895, %v885
  %955 = vst.msk [vmem:[%s947 + $0x71] sm:$0xff] %vm895, %v886
  %956 = vst.msk [vmem:[%s947 + $0xa1] sm:$0xff] %vm895, %v887
  %957 = vst.msk [vmem:[%s947 + $0xb1] sm:$0xff] %vm895, %v888
  %958 = vst.msk [vmem:[%s947 + $0xc1] sm:$0xff] %vm895, %v889
  %959 = vst.msk [vmem:[%s947 + $0xd1] sm:$0xff] %vm895, %v890
  %960 = vst.msk [vmem:[%s947 + $0xe1] sm:$0xff] %vm895, %v891
  %961 = vst.msk [vmem:[%s947 + $0xf1] sm:$0xff] %vm895, %v892
  %962 = vst.msk [vmem:[%s947 + $0x101] sm:$0xff] %vm895, %v893
  %963 = vst.msk [vmem:[%s947 + $0x111] sm:$0xff] %vm895, %v894
  %v964 = vld [vmem:[#allocation2] sm:$0xff]
  %v965 = vld [vmem:[#allocation2 + $0x10] sm:$0xff]
  %v966 = vld [vmem:[#allocation2 + $0x20] sm:$0xff]
  %v967 = vld [vmem:[#allocation2 + $0x30] sm:$0xff]
  %v968 = vld [vmem:[#allocation2 + $0x40] sm:$0xff]
  %v969 = vld [vmem:[#allocation2 + $0x50] sm:$0xff]
  %v970 = vld [vmem:[#allocation2 + $0x60] sm:$0xff]
  %v971 = vld [vmem:[#allocation2 + $0x70] sm:$0xff]
  %v972 = vld [vmem:[#allocation2 + $0xa0] sm:$0xff]
  %v973 = vld [vmem:[#allocation2 + $0xb0] sm:$0xff]
  %v974 = vld [vmem:[#allocation2 + $0xc0] sm:$0xff]
  %v975 = vld [vmem:[#allocation2 + $0xd0] sm:$0xff]
  %v976 = vld [vmem:[#allocation2 + $0xe0] sm:$0xff]
  %v977 = vld [vmem:[#allocation2 + $0xf0] sm:$0xff]
  %v978 = vld [vmem:[#allocation2 + $0x100] sm:$0xff]
  %v979 = vld [vmem:[#allocation2 + $0x110] sm:$0xff]
  %v980 = vld [vmem:[#allocation2 + $0x1] sm:$0xff]
  %v981 = vld [vmem:[#allocation2 + $0x11] sm:$0xff]
  %v982 = vld [vmem:[#allocation2 + $0x21] sm:$0xff]
  %v983 = vld [vmem:[#allocation2 + $0x31] sm:$0xff]
  %v984 = vld [vmem:[#allocation2 + $0x41] sm:$0xff]
  %v985 = vld [vmem:[#allocation2 + $0x51] sm:$0xff]
  %v986 = vld [vmem:[#allocation2 + $0x61] sm:$0xff]
  %v987 = vld [vmem:[#allocation2 + $0x71] sm:$0xff]
  %v988 = vld [vmem:[#allocation2 + $0xa1] sm:$0xff]
  %v989 = vld [vmem:[#allocation2 + $0xb1] sm:$0xff]
  %v990 = vld [vmem:[#allocation2 + $0xc1] sm:$0xff]
  %v991 = vld [vmem:[#allocation2 + $0xd1] sm:$0xff]
  %v992 = vld [vmem:[#allocation2 + $0xe1] sm:$0xff]
  %v993 = vld [vmem:[#allocation2 + $0xf1] sm:$0xff]
  %v994 = vld [vmem:[#allocation2 + $0x101] sm:$0xff]
  %v995 = vld [vmem:[#allocation2 + $0x111] sm:$0xff]
  %v996 = vld [vmem:[#allocation2 + $0x2] sm:$0xff]
  %v997 = vld [vmem:[#allocation2 + $0x12] sm:$0xff]
  %v998 = vld [vmem:[#allocation2 + $0x22] sm:$0xff]
  %v999 = vld [vmem:[#allocation2 + $0x32] sm:$0xff]
  %v1000 = vld [vmem:[#allocation2 + $0x42] sm:$0xff]
  %v1001 = vld [vmem:[#allocation2 + $0x52] sm:$0xff]
  %v1002 = vld [vmem:[#allocation2 + $0x62] sm:$0xff]
  %v1003 = vld [vmem:[#allocation2 + $0x72] sm:$0xff]
  %v1004 = vld [vmem:[#allocation2 + $0xa2] sm:$0xff]
  %v1005 = vld [vmem:[#allocation2 + $0xb2] sm:$0xff]
  %v1006 = vld [vmem:[#allocation2 + $0xc2] sm:$0xff]
  %v1007 = vld [vmem:[#allocation2 + $0xd2] sm:$0xff]
  %v1008 = vld [vmem:[#allocation2 + $0xe2] sm:$0xff]
  %v1009 = vld [vmem:[#allocation2 + $0xf2] sm:$0xff]
  %v1010 = vld [vmem:[#allocation2 + $0x102] sm:$0xff]
  %v1011 = vld [vmem:[#allocation2 + $0x112] sm:$0xff]
  %v1012 = vld [vmem:[%s947] sm:$0xff]
  %v1013 = vld [vmem:[%s947 + $0x10] sm:$0xff]
  %v1014 = vld [vmem:[%s947 + $0x20] sm:$0xff]
  %v1015 = vld [vmem:[%s947 + $0x30] sm:$0xff]
  %v1016 = vld [vmem:[%s947 + $0x40] sm:$0xff]
  %v1017 = vld [vmem:[%s947 + $0x50] sm:$0xff]
  %v1018 = vld [vmem:[%s947 + $0x60] sm:$0xff]
  %v1019 = vld [vmem:[%s947 + $0x70] sm:$0xff]
  %v1020 = vld [vmem:[%s947 + $0xa0] sm:$0xff]
  %v1021 = vld [vmem:[%s947 + $0xb0] sm:$0xff]
  %v1022 = vld [vmem:[%s947 + $0xc0] sm:$0xff]
  %v1023 = vld [vmem:[%s947 + $0xd0] sm:$0xff]
  %v1024 = vld [vmem:[%s947 + $0xe0] sm:$0xff]
  %v1025 = vld [vmem:[%s947 + $0xf0] sm:$0xff]
  %v1026 = vld [vmem:[%s947 + $0x100] sm:$0xff]
  %v1027 = vld [vmem:[%s947 + $0x110] sm:$0xff]
  %v1028 = vld [vmem:[%s947 + $0x1] sm:$0xff]
  %v1029 = vld [vmem:[%s947 + $0x11] sm:$0xff]
  %v1030 = vld [vmem:[%s947 + $0x21] sm:$0xff]
  %v1031 = vld [vmem:[%s947 + $0x31] sm:$0xff]
  %v1032 = vld [vmem:[%s947 + $0x41] sm:$0xff]
  %v1033 = vld [vmem:[%s947 + $0x51] sm:$0xff]
  %v1034 = vld [vmem:[%s947 + $0x61] sm:$0xff]
  %v1035 = vld [vmem:[%s947 + $0x71] sm:$0xff]
  %v1036 = vld [vmem:[%s947 + $0xa1] sm:$0xff]
  %v1037 = vld [vmem:[%s947 + $0xb1] sm:$0xff]
  %v1038 = vld [vmem:[%s947 + $0xc1] sm:$0xff]
  %v1039 = vld [vmem:[%s947 + $0xd1] sm:$0xff]
  %v1040 = vld [vmem:[%s947 + $0xe1] sm:$0xff]
  %v1041 = vld [vmem:[%s947 + $0xf1] sm:$0xff]
  %v1042 = vld [vmem:[%s947 + $0x101] sm:$0xff]
  %v1043 = vld [vmem:[%s947 + $0x111] sm:$0xff]
  %v1044 = vld [vmem:[%s947 + $0x2] sm:$0xff]
  %v1045 = vld [vmem:[%s947 + $0x12] sm:$0xff]
  %v1046 = vld [vmem:[%s947 + $0x22] sm:$0xff]
  %v1047 = vld [vmem:[%s947 + $0x32] sm:$0xff]
  %v1048 = vld [vmem:[%s947 + $0x42] sm:$0xff]
  %v1049 = vld [vmem:[%s947 + $0x52] sm:$0xff]
  %v1050 = vld [vmem:[%s947 + $0x62] sm:$0xff]
  %v1051 = vld [vmem:[%s947 + $0x72] sm:$0xff]
  %v1052 = vld [vmem:[%s947 + $0xa2] sm:$0xff]
  %v1053 = vld [vmem:[%s947 + $0xb2] sm:$0xff]
  %v1054 = vld [vmem:[%s947 + $0xc2] sm:$0xff]
  %v1055 = vld [vmem:[%s947 + $0xd2] sm:$0xff]
  %v1056 = vld [vmem:[%s947 + $0xe2] sm:$0xff]
  %v1057 = vld [vmem:[%s947 + $0xf2] sm:$0xff]
  %v1058 = vld [vmem:[%s947 + $0x102] sm:$0xff]
  %v1059 = vld [vmem:[%s947 + $0x112] sm:$0xff]
  %s1060 = scalar_lea.vmem [#allocation2], 32
  %v1061 = vld [vmem:[%s1060] sm:$0xff]
  %v1062 = vld [vmem:[%s1060 + $0x10] sm:$0xff]
  %v1063 = vld [vmem:[%s1060 + $0x20] sm:$0xff]
  %v1064 = vld [vmem:[%s1060 + $0x30] sm:$0xff]
  %v1065 = vld [vmem:[%s1060 + $0x40] sm:$0xff]
  %v1066 = vld [vmem:[%s1060 + $0x50] sm:$0xff]
  %v1067 = vld [vmem:[%s1060 + $0x60] sm:$0xff]
  %v1068 = vld [vmem:[%s1060 + $0x70] sm:$0xff]
  %v1069 = vld [vmem:[%s1060 + $0xa0] sm:$0xff]
  %v1070 = vld [vmem:[%s1060 + $0xb0] sm:$0xff]
  %v1071 = vld [vmem:[%s1060 + $0xc0] sm:$0xff]
  %v1072 = vld [vmem:[%s1060 + $0xd0] sm:$0xff]
  %v1073 = vld [vmem:[%s1060 + $0xe0] sm:$0xff]
  %v1074 = vld [vmem:[%s1060 + $0xf0] sm:$0xff]
  %v1075 = vld [vmem:[%s1060 + $0x100] sm:$0xff]
  %v1076 = vld [vmem:[%s1060 + $0x110] sm:$0xff]
  %v1077 = vld [vmem:[%s1060 + $0x1] sm:$0xff]
  %v1078 = vld [vmem:[%s1060 + $0x11] sm:$0xff]
  %v1079 = vld [vmem:[%s1060 + $0x21] sm:$0xff]
  %v1080 = vld [vmem:[%s1060 + $0x31] sm:$0xff]
  %v1081 = vld [vmem:[%s1060 + $0x41] sm:$0xff]
  %v1082 = vld [vmem:[%s1060 + $0x51] sm:$0xff]
  %v1083 = vld [vmem:[%s1060 + $0x61] sm:$0xff]
  %v1084 = vld [vmem:[%s1060 + $0x71] sm:$0xff]
  %v1085 = vld [vmem:[%s1060 + $0xa1] sm:$0xff]
  %v1086 = vld [vmem:[%s1060 + $0xb1] sm:$0xff]
  %v1087 = vld [vmem:[%s1060 + $0xc1] sm:$0xff]
  %v1088 = vld [vmem:[%s1060 + $0xd1] sm:$0xff]
  %v1089 = vld [vmem:[%s1060 + $0xe1] sm:$0xff]
  %v1090 = vld [vmem:[%s1060 + $0xf1] sm:$0xff]
  %v1091 = vld [vmem:[%s1060 + $0x101] sm:$0xff]
  %v1092 = vld [vmem:[%s1060 + $0x111] sm:$0xff]
  %v1093 = vld [vmem:[%s1060 + $0x2] sm:$0xff]
  %v1094 = vld [vmem:[%s1060 + $0x12] sm:$0xff]
  %v1095 = vld [vmem:[%s1060 + $0x22] sm:$0xff]
  %v1096 = vld [vmem:[%s1060 + $0x32] sm:$0xff]
  %v1097 = vld [vmem:[%s1060 + $0x42] sm:$0xff]
  %v1098 = vld [vmem:[%s1060 + $0x52] sm:$0xff]
  %v1099 = vld [vmem:[%s1060 + $0x62] sm:$0xff]
  %v1100 = vld [vmem:[%s1060 + $0x72] sm:$0xff]
  %v1101 = vld [vmem:[%s1060 + $0xa2] sm:$0xff]
  %v1102 = vld [vmem:[%s1060 + $0xb2] sm:$0xff]
  %v1103 = vld [vmem:[%s1060 + $0xc2] sm:$0xff]
  %v1104 = vld [vmem:[%s1060 + $0xd2] sm:$0xff]
  %v1105 = vld [vmem:[%s1060 + $0xe2] sm:$0xff]
  %v1106 = vld [vmem:[%s1060 + $0xf2] sm:$0xff]
  %v1107 = vld [vmem:[%s1060 + $0x102] sm:$0xff]
  %v1108 = vld [vmem:[%s1060 + $0x112] sm:$0xff]
  %v1109 = vld [vmem:[%s3] sm:$0xff]
  %v1110 = vld [vmem:[%s3 + $0x8] sm:$0xff]
  %v1112 = vsel %vm895, %v980, 0
  %v1115 = vsel %vm895, %v981, 0
  %v1118 = vsel %vm895, %v982, 0
  %v1121 = vsel %vm895, %v983, 0
  %v1124 = vsel %vm895, %v984, 0
  %v1127 = vsel %vm895, %v985, 0
  %v1130 = vsel %vm895, %v986, 0
  %v1133 = vsel %vm895, %v987, 0
  %v1136 = vsel %vm895, %v988, 0
  %v1139 = vsel %vm895, %v989, 0
  %v1142 = vsel %vm895, %v990, 0
  %v1145 = vsel %vm895, %v991, 0
  %v1148 = vsel %vm895, %v992, 0
  %v1151 = vsel %vm895, %v993, 0
  %v1154 = vsel %vm895, %v994, 0
  %v1157 = vsel %vm895, %v995, 0
  %1159 = vmatprep.subr.mxu0 0.0
  %1160 = vmatpush1.msra.mxu0 0.0
  %1161 = vmatprep.subr.mxu0 0.0
  %1162 = vmatpush1.msra.mxu0 0.0
  %1163 = vmatprep.subr.mxu0 0.0
  %1164 = vmatpush1.msra.mxu0 0.0
  %1165 = vmatprep.subr.mxu0 0.0
  %1166 = vmatpush1.msra.mxu0 0.0
  %1167 = vmatprep.subr.mxu0 0.0
  %1168 = vmatpush1.msra.mxu0 0.0
  %1169 = vmatprep.subr.mxu0 0.0
  %1170 = vmatpush1.msra.mxu0 0.0
  %1171 = vmatprep.subr.mxu0 0.0
  %1172 = vmatpush1.msra.mxu0 0.0
  %1173 = vmatprep.subr.mxu0 0.0
  %1174 = vmatpush1.msra.mxu0 0.0
  %1175 = vmatprep.subr.mxu0 0.0
  %1176 = vmatpush1.msra.mxu0 0.0
  %1177 = vmatprep.subr.mxu0 0.0
  %1178 = vmatpush1.msra.mxu0 0.0
  %1179 = vmatprep.subr.mxu0 0.0
  %1180 = vmatpush1.msra.mxu0 0.0
  %1181 = vmatprep.subr.mxu0 0.0
  %1182 = vmatpush1.msra.mxu0 0.0
  %1183 = vmatprep.subr.mxu0 0.0
  %1184 = vmatpush1.msra.mxu0 0.0
  %1185 = vmatprep.subr.mxu0 0.0
  %1186 = vmatpush1.msra.mxu0 0.0
  %1187 = vmatprep.subr.mxu0 0.0
  %1188 = vmatpush1.msra.mxu0 0.0
  %1189 = vmatprep.subr.mxu0 0.0
  %1190 = vmatpush1.msra.mxu0 %v1110
  %1191 = vmatprep.subr.mxu0 0.0
  %1192 = vmatpush2.msra.mxu0 0.0
  %1193 = vmatprep.subr.mxu0 0.0
  %1194 = vmatpush2.msra.mxu0 0.0
  %1195 = vmatprep.subr.mxu0 0.0
  %1196 = vmatpush2.msra.mxu0 0.0
  %1197 = vmatprep.subr.mxu0 0.0
  %1198 = vmatpush2.msra.mxu0 0.0
  %1199 = vmatprep.subr.mxu0 0.0
  %1200 = vmatpush2.msra.mxu0 0.0
  %1201 = vmatprep.subr.mxu0 0.0
  %1202 = vmatpush2.msra.mxu0 0.0
  %1203 = vmatprep.subr.mxu0 0.0
  %1204 = vmatpush2.msra.mxu0 0.0
  %1205 = vmatprep.subr.mxu0 0.0
  %1206 = vmatpush2.msra.mxu0 0.0
  %1207 = vmatprep.subr.mxu0 0.0
  %1208 = vmatpush2.msra.mxu0 0.0
  %1209 = vmatprep.subr.mxu0 0.0
  %1210 = vmatpush2.msra.mxu0 0.0
  %1211 = vmatprep.subr.mxu0 0.0
  %1212 = vmatpush2.msra.mxu0 0.0
  %1213 = vmatprep.subr.mxu0 0.0
  %1214 = vmatpush2.msra.mxu0 0.0
  %1215 = vmatprep.subr.mxu0 0.0
  %1216 = vmatpush2.msra.mxu0 0.0
  %1217 = vmatprep.subr.mxu0 0.0
  %1218 = vmatpush2.msra.mxu0 0.0
  %1219 = vmatprep.subr.mxu0 0.0
  %1220 = vmatpush2.msra.mxu0 0.0
  %1221 = vmatprep.subr.mxu0 0.0
  %1222 = vmatpush2.msra.mxu0 0.0
  %1223 = vmatprep.mubr.f32.mxu0 0.0
  %1224 = vmatmul.mubr.f32.gmra.mxu0 %v1112
  %v1225 = vpop.f32.mrf.mxu0
  %v1226 = vadd.f32 0.0, %v1225
  %v1227 = vpop.f32.mrf.mxu0
  %1228 = vmatprep.mubr.f32.mxu0 0.0
  %1229 = vmatmul.mubr.f32.gmra.mxu0 %v1115
  %v1230 = vpop.f32.mrf.mxu0
  %v1231 = vadd.f32 0.0, %v1230
  %v1232 = vpop.f32.mrf.mxu0
  %1233 = vmatprep.mubr.f32.mxu0 0.0
  %1234 = vmatmul.mubr.f32.gmra.mxu0 %v1118
  %v1235 = vpop.f32.mrf.mxu0
  %v1236 = vadd.f32 0.0, %v1235
  %v1237 = vpop.f32.mrf.mxu0
  %1238 = vmatprep.mubr.f32.mxu0 0.0
  %1239 = vmatmul.mubr.f32.gmra.mxu0 %v1121
  %v1240 = vpop.f32.mrf.mxu0
  %v1241 = vadd.f32 0.0, %v1240
  %v1242 = vpop.f32.mrf.mxu0
  %1243 = vmatprep.mubr.f32.mxu0 0.0
  %1244 = vmatmul.mubr.f32.gmra.mxu0 %v1124
  %v1245 = vpop.f32.mrf.mxu0
  %v1246 = vadd.f32 0.0, %v1245
  %v1247 = vpop.f32.mrf.mxu0
  %1248 = vmatprep.mubr.f32.mxu0 0.0
  %1249 = vmatmul.mubr.f32.gmra.mxu0 %v1127
  %v1250 = vpop.f32.mrf.mxu0
  %v1251 = vadd.f32 0.0, %v1250
  %v1252 = vpop.f32.mrf.mxu0
  %1253 = vmatprep.mubr.f32.mxu0 0.0
  %1254 = vmatmul.mubr.f32.gmra.mxu0 %v1130
  %v1255 = vpop.f32.mrf.mxu0
  %v1256 = vadd.f32 0.0, %v1255
  %v1257 = vpop.f32.mrf.mxu0
  %1258 = vmatprep.mubr.f32.mxu0 0.0
  %1259 = vmatmul.mubr.f32.gmra.mxu0 %v1133
  %v1260 = vpop.f32.mrf.mxu0
  %v1261 = vadd.f32 0.0, %v1260
  %v1262 = vpop.f32.mrf.mxu0
  %1263 = vmatprep.mubr.f32.mxu0 0.0
  %1264 = vmatmul.mubr.f32.gmra.mxu0 %v1136
  %v1265 = vpop.f32.mrf.mxu0
  %v1266 = vadd.f32 0.0, %v1265
  %v1267 = vpop.f32.mrf.mxu0
  %1268 = vmatprep.mubr.f32.mxu0 0.0
  %1269 = vmatmul.mubr.f32.gmra.mxu0 %v1139
  %v1270 = vpop.f32.mrf.mxu0
  %v1271 = vadd.f32 0.0, %v1270
  %v1272 = vpop.f32.mrf.mxu0
  %1273 = vmatprep.mubr.f32.mxu0 0.0
  %1274 = vmatmul.mubr.f32.gmra.mxu0 %v1142
  %v1275 = vpop.f32.mrf.mxu0
  %v1276 = vadd.f32 0.0, %v1275
  %v1277 = vpop.f32.mrf.mxu0
  %1278 = vmatprep.mubr.f32.mxu0 0.0
  %1279 = vmatmul.mubr.f32.gmra.mxu0 %v1145
  %v1280 = vpop.f32.mrf.mxu0
  %v1281 = vadd.f32 0.0, %v1280
  %v1282 = vpop.f32.mrf.mxu0
  %1283 = vmatprep.mubr.f32.mxu0 0.0
  %1284 = vmatmul.mubr.f32.gmra.mxu0 %v1148
  %v1285 = vpop.f32.mrf.mxu0
  %v1286 = vadd.f32 0.0, %v1285
  %v1287 = vpop.f32.mrf.mxu0
  %1288 = vmatprep.mubr.f32.mxu0 0.0
  %1289 = vmatmul.mubr.f32.gmra.mxu0 %v1151
  %v1290 = vpop.f32.mrf.mxu0
  %v1291 = vadd.f32 0.0, %v1290
  %v1292 = vpop.f32.mrf.mxu0
  %1293 = vmatprep.mubr.f32.mxu0 0.0
  %1294 = vmatmul.mubr.f32.gmra.mxu0 %v1154
  %v1295 = vpop.f32.mrf.mxu0
  %v1296 = vadd.f32 0.0, %v1295
  %v1297 = vpop.f32.mrf.mxu0
  %1298 = vmatprep.mubr.f32.mxu0 0.0
  %1299 = vmatmul.mubr.f32.gmra.mxu0 %v1157
  %v1300 = vpop.f32.mrf.mxu0
  %v1301 = vadd.f32 0.0, %v1300
  %v1302 = vpop.f32.mrf.mxu0
  %1303 = vdwg.mxu0
  %v1305 = vsel %vm895, %v964, 0
  %v1308 = vsel %vm895, %v965, 0
  %v1311 = vsel %vm895, %v966, 0
  %v1314 = vsel %vm895, %v967, 0
  %v1317 = vsel %vm895, %v968, 0
  %v1320 = vsel %vm895, %v969, 0
  %v1323 = vsel %vm895, %v970, 0
  %v1326 = vsel %vm895, %v971, 0
  %v1329 = vsel %vm895, %v972, 0
  %v1332 = vsel %vm895, %v973, 0
  %v1335 = vsel %vm895, %v974, 0
  %v1338 = vsel %vm895, %v975, 0
  %v1341 = vsel %vm895, %v976, 0
  %v1344 = vsel %vm895, %v977, 0
  %v1347 = vsel %vm895, %v978, 0
  %v1350 = vsel %vm895, %v979, 0
  %1352 = vmatprep.subr.mxu0 0.0
  %1353 = vmatpush1.msra.mxu0 0.0
  %1354 = vmatprep.subr.mxu0 0.0
  %1355 = vmatpush1.msra.mxu0 0.0
  %1356 = vmatprep.subr.mxu0 0.0
  %1357 = vmatpush1.msra.mxu0 0.0
  %1358 = vmatprep.subr.mxu0 0.0
  %1359 = vmatpush1.msra.mxu0 0.0
  %1360 = vmatprep.subr.mxu0 0.0
  %1361 = vmatpush1.msra.mxu0 0.0
  %1362 = vmatprep.subr.mxu0 0.0
  %1363 = vmatpush1.msra.mxu0 0.0
  %1364 = vmatprep.subr.mxu0 0.0
  %1365 = vmatpush1.msra.mxu0 0.0
  %1366 = vmatprep.subr.mxu0 0.0
  %1367 = vmatpush1.msra.mxu0 0.0
  %1368 = vmatprep.subr.mxu0 0.0
  %1369 = vmatpush1.msra.mxu0 0.0
  %1370 = vmatprep.subr.mxu0 0.0
  %1371 = vmatpush1.msra.mxu0 0.0
  %1372 = vmatprep.subr.mxu0 0.0
  %1373 = vmatpush1.msra.mxu0 0.0
  %1374 = vmatprep.subr.mxu0 0.0
  %1375 = vmatpush1.msra.mxu0 0.0
  %1376 = vmatprep.subr.mxu0 0.0
  %1377 = vmatpush1.msra.mxu0 0.0
  %1378 = vmatprep.subr.mxu0 0.0
  %1379 = vmatpush1.msra.mxu0 0.0
  %1380 = vmatprep.subr.mxu0 0.0
  %1381 = vmatpush1.msra.mxu0 0.0
  %1382 = vmatprep.subr.mxu0 0.0
  %1383 = vmatpush1.msra.mxu0 %v1109
  %1384 = vmatprep.subr.mxu0 0.0
  %1385 = vmatpush2.msra.mxu0 0.0
  %1386 = vmatprep.subr.mxu0 0.0
  %1387 = vmatpush2.msra.mxu0 0.0
  %1388 = vmatprep.subr.mxu0 0.0
  %1389 = vmatpush2.msra.mxu0 0.0
  %1390 = vmatprep.subr.mxu0 0.0
  %1391 = vmatpush2.msra.mxu0 0.0
  %1392 = vmatprep.subr.mxu0 0.0
  %1393 = vmatpush2.msra.mxu0 0.0
  %1394 = vmatprep.subr.mxu0 0.0
  %1395 = vmatpush2.msra.mxu0 0.0
  %1396 = vmatprep.subr.mxu0 0.0
  %1397 = vmatpush2.msra.mxu0 0.0
  %1398 = vmatprep.subr.mxu0 0.0
  %1399 = vmatpush2.msra.mxu0 0.0
  %1400 = vmatprep.subr.mxu0 0.0
  %1401 = vmatpush2.msra.mxu0 0.0
  %1402 = vmatprep.subr.mxu0 0.0
  %1403 = vmatpush2.msra.mxu0 0.0
  %1404 = vmatprep.subr.mxu0 0.0
  %1405 = vmatpush2.msra.mxu0 0.0
  %1406 = vmatprep.subr.mxu0 0.0
  %1407 = vmatpush2.msra.mxu0 0.0
  %1408 = vmatprep.subr.mxu0 0.0
  %1409 = vmatpush2.msra.mxu0 0.0
  %1410 = vmatprep.subr.mxu0 0.0
  %1411 = vmatpush2.msra.mxu0 0.0
  %1412 = vmatprep.subr.mxu0 0.0
  %1413 = vmatpush2.msra.mxu0 0.0
  %1414 = vmatprep.subr.mxu0 0.0
  %1415 = vmatpush2.msra.mxu0 0.0
  %1416 = vmatprep.mubr.f32.mxu0 0.0
  %1417 = vmatmul.mubr.f32.gmra.mxu0 %v1305
  %v1418 = vpop.f32.mrf.mxu0
  %v1419 = vadd.f32 %v1226, %v1418
  %v1420 = vpop.f32.mrf.mxu0
  %1421 = vmatprep.mubr.f32.mxu0 0.0
  %1422 = vmatmul.mubr.f32.gmra.mxu0 %v1308
  %v1423 = vpop.f32.mrf.mxu0
  %v1424 = vadd.f32 %v1231, %v1423
  %v1425 = vpop.f32.mrf.mxu0
  %1426 = vmatprep.mubr.f32.mxu0 0.0
  %1427 = vmatmul.mubr.f32.gmra.mxu0 %v1311
  %v1428 = vpop.f32.mrf.mxu0
  %v1429 = vadd.f32 %v1236, %v1428
  %v1430 = vpop.f32.mrf.mxu0
  %1431 = vmatprep.mubr.f32.mxu0 0.0
  %1432 = vmatmul.mubr.f32.gmra.mxu0 %v1314
  %v1433 = vpop.f32.mrf.mxu0
  %v1434 = vadd.f32 %v1241, %v1433
  %v1435 = vpop.f32.mrf.mxu0
  %1436 = vmatprep.mubr.f32.mxu0 0.0
  %1437 = vmatmul.mubr.f32.gmra.mxu0 %v1317
  %v1438 = vpop.f32.mrf.mxu0
  %v1439 = vadd.f32 %v1246, %v1438
  %v1440 = vpop.f32.mrf.mxu0
  %1441 = vmatprep.mubr.f32.mxu0 0.0
  %1442 = vmatmul.mubr.f32.gmra.mxu0 %v1320
  %v1443 = vpop.f32.mrf.mxu0
  %v1444 = vadd.f32 %v1251, %v1443
  %v1445 = vpop.f32.mrf.mxu0
  %1446 = vmatprep.mubr.f32.mxu0 0.0
  %1447 = vmatmul.mubr.f32.gmra.mxu0 %v1323
  %v1448 = vpop.f32.mrf.mxu0
  %v1449 = vadd.f32 %v1256, %v1448
  %v1450 = vpop.f32.mrf.mxu0
  %1451 = vmatprep.mubr.f32.mxu0 0.0
  %1452 = vmatmul.mubr.f32.gmra.mxu0 %v1326
  %v1453 = vpop.f32.mrf.mxu0
  %v1454 = vadd.f32 %v1261, %v1453
  %v1455 = vpop.f32.mrf.mxu0
  %1456 = vmatprep.mubr.f32.mxu0 0.0
  %1457 = vmatmul.mubr.f32.gmra.mxu0 %v1329
  %v1458 = vpop.f32.mrf.mxu0
  %v1459 = vadd.f32 %v1266, %v1458
  %v1460 = vpop.f32.mrf.mxu0
  %1461 = vmatprep.mubr.f32.mxu0 0.0
  %1462 = vmatmul.mubr.f32.gmra.mxu0 %v1332
  %v1463 = vpop.f32.mrf.mxu0
  %v1464 = vadd.f32 %v1271, %v1463
  %v1465 = vpop.f32.mrf.mxu0
  %1466 = vmatprep.mubr.f32.mxu0 0.0
  %1467 = vmatmul.mubr.f32.gmra.mxu0 %v1335
  %v1468 = vpop.f32.mrf.mxu0
  %v1469 = vadd.f32 %v1276, %v1468
  %v1470 = vpop.f32.mrf.mxu0
  %1471 = vmatprep.mubr.f32.mxu0 0.0
  %1472 = vmatmul.mubr.f32.gmra.mxu0 %v1338
  %v1473 = vpop.f32.mrf.mxu0
  %v1474 = vadd.f32 %v1281, %v1473
  %v1475 = vpop.f32.mrf.mxu0
  %1476 = vmatprep.mubr.f32.mxu0 0.0
  %1477 = vmatmul.mubr.f32.gmra.mxu0 %v1341
  %v1478 = vpop.f32.mrf.mxu0
  %v1479 = vadd.f32 %v1286, %v1478
  %v1480 = vpop.f32.mrf.mxu0
  %1481 = vmatprep.mubr.f32.mxu0 0.0
  %1482 = vmatmul.mubr.f32.gmra.mxu0 %v1344
  %v1483 = vpop.f32.mrf.mxu0
  %v1484 = vadd.f32 %v1291, %v1483
  %v1485 = vpop.f32.mrf.mxu0
  %1486 = vmatprep.mubr.f32.mxu0 0.0
  %1487 = vmatmul.mubr.f32.gmra.mxu0 %v1347
  %v1488 = vpop.f32.mrf.mxu0
  %v1489 = vadd.f32 %v1296, %v1488
  %v1490 = vpop.f32.mrf.mxu0
  %1491 = vmatprep.mubr.f32.mxu0 0.0
  %1492 = vmatmul.mubr.f32.gmra.mxu0 %v1350
  %v1493 = vpop.f32.mrf.mxu0
  %v1494 = vadd.f32 %v1301, %v1493
  %v1495 = vpop.f32.mrf.mxu0
  %1496 = vdwg.mxu0
  %v1497 = vld [vmem:[%s3 + $0x10] sm:$0xff]
  %v1499 = vsel %vm895, %v996, 0
  %v1502 = vsel %vm895, %v997, 0
  %v1505 = vsel %vm895, %v998, 0
  %v1508 = vsel %vm895, %v999, 0
  %v1511 = vsel %vm895, %v1000, 0
  %v1514 = vsel %vm895, %v1001, 0
  %v1517 = vsel %vm895, %v1002, 0
  %v1520 = vsel %vm895, %v1003, 0
  %v1523 = vsel %vm895, %v1004, 0
  %v1526 = vsel %vm895, %v1005, 0
  %v1529 = vsel %vm895, %v1006, 0
  %v1532 = vsel %vm895, %v1007, 0
  %v1535 = vsel %vm895, %v1008, 0
  %v1538 = vsel %vm895, %v1009, 0
  %v1541 = vsel %vm895, %v1010, 0
  %v1544 = vsel %vm895, %v1011, 0
  %1546 = vmatprep.subr.mxu0 0.0
  %1547 = vmatpush1.msra.mxu0 0.0
  %1548 = vmatprep.subr.mxu0 0.0
  %1549 = vmatpush1.msra.mxu0 0.0
  %1550 = vmatprep.subr.mxu0 0.0
  %1551 = vmatpush1.msra.mxu0 0.0
  %1552 = vmatprep.subr.mxu0 0.0
  %1553 = vmatpush1.msra.mxu0 0.0
  %1554 = vmatprep.subr.mxu0 0.0
  %1555 = vmatpush1.msra.mxu0 0.0
  %1556 = vmatprep.subr.mxu0 0.0
  %1557 = vmatpush1.msra.mxu0 0.0
  %1558 = vmatprep.subr.mxu0 0.0
  %1559 = vmatpush1.msra.mxu0 0.0
  %1560 = vmatprep.subr.mxu0 0.0
  %1561 = vmatpush1.msra.mxu0 0.0
  %1562 = vmatprep.subr.mxu0 0.0
  %1563 = vmatpush1.msra.mxu0 0.0
  %1564 = vmatprep.subr.mxu0 0.0
  %1565 = vmatpush1.msra.mxu0 0.0
  %1566 = vmatprep.subr.mxu0 0.0
  %1567 = vmatpush1.msra.mxu0 0.0
  %1568 = vmatprep.subr.mxu0 0.0
  %1569 = vmatpush1.msra.mxu0 0.0
  %1570 = vmatprep.subr.mxu0 0.0
  %1571 = vmatpush1.msra.mxu0 0.0
  %1572 = vmatprep.subr.mxu0 0.0
  %1573 = vmatpush1.msra.mxu0 0.0
  %1574 = vmatprep.subr.mxu0 0.0
  %1575 = vmatpush1.msra.mxu0 0.0
  %1576 = vmatprep.subr.mxu0 0.0
  %1577 = vmatpush1.msra.mxu0 %v1497
  %1578 = vmatprep.subr.mxu0 0.0
  %1579 = vmatpush2.msra.mxu0 0.0
  %1580 = vmatprep.subr.mxu0 0.0
  %1581 = vmatpush2.msra.mxu0 0.0
  %1582 = vmatprep.subr.mxu0 0.0
  %1583 = vmatpush2.msra.mxu0 0.0
  %1584 = vmatprep.subr.mxu0 0.0
  %1585 = vmatpush2.msra.mxu0 0.0
  %1586 = vmatprep.subr.mxu0 0.0
  %1587 = vmatpush2.msra.mxu0 0.0
  %1588 = vmatprep.subr.mxu0 0.0
  %1589 = vmatpush2.msra.mxu0 0.0
  %1590 = vmatprep.subr.mxu0 0.0
  %1591 = vmatpush2.msra.mxu0 0.0
  %1592 = vmatprep.subr.mxu0 0.0
  %1593 = vmatpush2.msra.mxu0 0.0
  %1594 = vmatprep.subr.mxu0 0.0
  %1595 = vmatpush2.msra.mxu0 0.0
  %1596 = vmatprep.subr.mxu0 0.0
  %1597 = vmatpush2.msra.mxu0 0.0
  %1598 = vmatprep.subr.mxu0 0.0
  %1599 = vmatpush2.msra.mxu0 0.0
  %1600 = vmatprep.subr.mxu0 0.0
  %1601 = vmatpush2.msra.mxu0 0.0
  %1602 = vmatprep.subr.mxu0 0.0
  %1603 = vmatpush2.msra.mxu0 0.0
  %1604 = vmatprep.subr.mxu0 0.0
  %1605 = vmatpush2.msra.mxu0 0.0
  %1606 = vmatprep.subr.mxu0 0.0
  %1607 = vmatpush2.msra.mxu0 0.0
  %1608 = vmatprep.subr.mxu0 0.0
  %1609 = vmatpush2.msra.mxu0 0.0
  %1610 = vmatprep.mubr.f32.mxu0 0.0
  %1611 = vmatmul.mubr.f32.gmra.mxu0 %v1499
  %v1612 = vpop.f32.mrf.mxu0
  %v1613 = vadd.f32 0.0, %v1612
  %v1614 = vpop.f32.mrf.mxu0
  %1615 = vmatprep.mubr.f32.mxu0 0.0
  %1616 = vmatmul.mubr.f32.gmra.mxu0 %v1502
  %v1617 = vpop.f32.mrf.mxu0
  %v1618 = vadd.f32 0.0, %v1617
  %v1619 = vpop.f32.mrf.mxu0
  %1620 = vmatprep.mubr.f32.mxu0 0.0
  %1621 = vmatmul.mubr.f32.gmra.mxu0 %v1505
  %v1622 = vpop.f32.mrf.mxu0
  %v1623 = vadd.f32 0.0, %v1622
  %v1624 = vpop.f32.mrf.mxu0
  %1625 = vmatprep.mubr.f32.mxu0 0.0
  %1626 = vmatmul.mubr.f32.gmra.mxu0 %v1508
  %v1627 = vpop.f32.mrf.mxu0
  %v1628 = vadd.f32 0.0, %v1627
  %v1629 = vpop.f32.mrf.mxu0
  %1630 = vmatprep.mubr.f32.mxu0 0.0
  %1631 = vmatmul.mubr.f32.gmra.mxu0 %v1511
  %v1632 = vpop.f32.mrf.mxu0
  %v1633 = vadd.f32 0.0, %v1632
  %v1634 = vpop.f32.mrf.mxu0
  %1635 = vmatprep.mubr.f32.mxu0 0.0
  %1636 = vmatmul.mubr.f32.gmra.mxu0 %v1514
  %v1637 = vpop.f32.mrf.mxu0
  %v1638 = vadd.f32 0.0, %v1637
  %v1639 = vpop.f32.mrf.mxu0
  %1640 = vmatprep.mubr.f32.mxu0 0.0
  %1641 = vmatmul.mubr.f32.gmra.mxu0 %v1517
  %v1642 = vpop.f32.mrf.mxu0
  %v1643 = vadd.f32 0.0, %v1642
  %v1644 = vpop.f32.mrf.mxu0
  %1645 = vmatprep.mubr.f32.mxu0 0.0
  %1646 = vmatmul.mubr.f32.gmra.mxu0 %v1520
  %v1647 = vpop.f32.mrf.mxu0
  %v1648 = vadd.f32 0.0, %v1647
  %v1649 = vpop.f32.mrf.mxu0
  %1650 = vmatprep.mubr.f32.mxu0 0.0
  %1651 = vmatmul.mubr.f32.gmra.mxu0 %v1523
  %v1652 = vpop.f32.mrf.mxu0
  %v1653 = vadd.f32 0.0, %v1652
  %v1654 = vpop.f32.mrf.mxu0
  %1655 = vmatprep.mubr.f32.mxu0 0.0
  %1656 = vmatmul.mubr.f32.gmra.mxu0 %v1526
  %v1657 = vpop.f32.mrf.mxu0
  %v1658 = vadd.f32 0.0, %v1657
  %v1659 = vpop.f32.mrf.mxu0
  %1660 = vmatprep.mubr.f32.mxu0 0.0
  %1661 = vmatmul.mubr.f32.gmra.mxu0 %v1529
  %v1662 = vpop.f32.mrf.mxu0
  %v1663 = vadd.f32 0.0, %v1662
  %v1664 = vpop.f32.mrf.mxu0
  %1665 = vmatprep.mubr.f32.mxu0 0.0
  %1666 = vmatmul.mubr.f32.gmra.mxu0 %v1532
  %v1667 = vpop.f32.mrf.mxu0
  %v1668 = vadd.f32 0.0, %v1667
  %v1669 = vpop.f32.mrf.mxu0
  %1670 = vmatprep.mubr.f32.mxu0 0.0
  %1671 = vmatmul.mubr.f32.gmra.mxu0 %v1535
  %v1672 = vpop.f32.mrf.mxu0
  %v1673 = vadd.f32 0.0, %v1672
  %v1674 = vpop.f32.mrf.mxu0
  %1675 = vmatprep.mubr.f32.mxu0 0.0
  %1676 = vmatmul.mubr.f32.gmra.mxu0 %v1538
  %v1677 = vpop.f32.mrf.mxu0
  %v1678 = vadd.f32 0.0, %v1677
  %v1679 = vpop.f32.mrf.mxu0
  %1680 = vmatprep.mubr.f32.mxu0 0.0
  %1681 = vmatmul.mubr.f32.gmra.mxu0 %v1541
  %v1682 = vpop.f32.mrf.mxu0
  %v1683 = vadd.f32 0.0, %v1682
  %v1684 = vpop.f32.mrf.mxu0
  %1685 = vmatprep.mubr.f32.mxu0 0.0
  %1686 = vmatmul.mubr.f32.gmra.mxu0 %v1544
  %v1687 = vpop.f32.mrf.mxu0
  %v1688 = vadd.f32 0.0, %v1687
  %v1689 = vpop.f32.mrf.mxu0
  %1690 = vdwg.mxu0
  %v1691 = vadd.f32 %v1419, %v1613
  %v1692 = vadd.f32 %v1424, %v1618
  %v1693 = vadd.f32 %v1429, %v1623
  %v1694 = vadd.f32 %v1434, %v1628
  %v1695 = vadd.f32 %v1439, %v1633
  %v1696 = vadd.f32 %v1444, %v1638
  %v1697 = vadd.f32 %v1449, %v1643
  %v1698 = vadd.f32 %v1454, %v1648
  %v1699 = vadd.f32 %v1459, %v1653
  %v1700 = vadd.f32 %v1464, %v1658
  %v1701 = vadd.f32 %v1469, %v1663
  %v1702 = vadd.f32 %v1474, %v1668
  %v1703 = vadd.f32 %v1479, %v1673
  %v1704 = vadd.f32 %v1484, %v1678
  %v1705 = vadd.f32 %v1489, %v1683
  %v1706 = vadd.f32 %v1494, %v1688
  %v1707 = vld [vmem:[%s3 + $0x18] sm:$0xff]
  %v1709 = vsel %vm895, %v1012, 0
  %v1712 = vsel %vm895, %v1013, 0
  %v1715 = vsel %vm895, %v1014, 0
  %v1718 = vsel %vm895, %v1015, 0
  %v1721 = vsel %vm895, %v1016, 0
  %v1724 = vsel %vm895, %v1017, 0
  %v1727 = vsel %vm895, %v1018, 0
  %v1730 = vsel %vm895, %v1019, 0
  %v1733 = vsel %vm895, %v1020, 0
  %v1736 = vsel %vm895, %v1021, 0
  %v1739 = vsel %vm895, %v1022, 0
  %v1742 = vsel %vm895, %v1023, 0
  %v1745 = vsel %vm895, %v1024, 0
  %v1748 = vsel %vm895, %v1025, 0
  %v1751 = vsel %vm895, %v1026, 0
  %v1754 = vsel %vm895, %v1027, 0
  %1756 = vmatprep.subr.mxu0 0.0
  %1757 = vmatpush1.msra.mxu0 0.0
  %1758 = vmatprep.subr.mxu0 0.0
  %1759 = vmatpush1.msra.mxu0 0.0
  %1760 = vmatprep.subr.mxu0 0.0
  %1761 = vmatpush1.msra.mxu0 0.0
  %1762 = vmatprep.subr.mxu0 0.0
  %1763 = vmatpush1.msra.mxu0 0.0
  %1764 = vmatprep.subr.mxu0 0.0
  %1765 = vmatpush1.msra.mxu0 0.0
  %1766 = vmatprep.subr.mxu0 0.0
  %1767 = vmatpush1.msra.mxu0 0.0
  %1768 = vmatprep.subr.mxu0 0.0
  %1769 = vmatpush1.msra.mxu0 0.0
  %1770 = vmatprep.subr.mxu0 0.0
  %1771 = vmatpush1.msra.mxu0 0.0
  %1772 = vmatprep.subr.mxu0 0.0
  %1773 = vmatpush1.msra.mxu0 0.0
  %1774 = vmatprep.subr.mxu0 0.0
  %1775 = vmatpush1.msra.mxu0 0.0
  %1776 = vmatprep.subr.mxu0 0.0
  %1777 = vmatpush1.msra.mxu0 0.0
  %1778 = vmatprep.subr.mxu0 0.0
  %1779 = vmatpush1.msra.mxu0 0.0
  %1780 = vmatprep.subr.mxu0 0.0
  %1781 = vmatpush1.msra.mxu0 0.0
  %1782 = vmatprep.subr.mxu0 0.0
  %1783 = vmatpush1.msra.mxu0 0.0
  %1784 = vmatprep.subr.mxu0 0.0
  %1785 = vmatpush1.msra.mxu0 0.0
  %1786 = vmatprep.subr.mxu0 0.0
  %1787 = vmatpush1.msra.mxu0 %v1707
  %1788 = vmatprep.subr.mxu0 0.0
  %1789 = vmatpush2.msra.mxu0 0.0
  %1790 = vmatprep.subr.mxu0 0.0
  %1791 = vmatpush2.msra.mxu0 0.0
  %1792 = vmatprep.subr.mxu0 0.0
  %1793 = vmatpush2.msra.mxu0 0.0
  %1794 = vmatprep.subr.mxu0 0.0
  %1795 = vmatpush2.msra.mxu0 0.0
  %1796 = vmatprep.subr.mxu0 0.0
  %1797 = vmatpush2.msra.mxu0 0.0
  %1798 = vmatprep.subr.mxu0 0.0
  %1799 = vmatpush2.msra.mxu0 0.0
  %1800 = vmatprep.subr.mxu0 0.0
  %1801 = vmatpush2.msra.mxu0 0.0
  %1802 = vmatprep.subr.mxu0 0.0
  %1803 = vmatpush2.msra.mxu0 0.0
  %1804 = vmatprep.subr.mxu0 0.0
  %1805 = vmatpush2.msra.mxu0 0.0
  %1806 = vmatprep.subr.mxu0 0.0
  %1807 = vmatpush2.msra.mxu0 0.0
  %1808 = vmatprep.subr.mxu0 0.0
  %1809 = vmatpush2.msra.mxu0 0.0
  %1810 = vmatprep.subr.mxu0 0.0
  %1811 = vmatpush2.msra.mxu0 0.0
  %1812 = vmatprep.subr.mxu0 0.0
  %1813 = vmatpush2.msra.mxu0 0.0
  %1814 = vmatprep.subr.mxu0 0.0
  %1815 = vmatpush2.msra.mxu0 0.0
  %1816 = vmatprep.subr.mxu0 0.0
  %1817 = vmatpush2.msra.mxu0 0.0
  %1818 = vmatprep.subr.mxu0 0.0
  %1819 = vmatpush2.msra.mxu0 0.0
  %1820 = vmatprep.mubr.f32.mxu0 0.0
  %1821 = vmatmul.mubr.f32.gmra.mxu0 %v1709
  %v1822 = vpop.f32.mrf.mxu0
  %v1823 = vadd.f32 0.0, %v1822
  %v1824 = vpop.f32.mrf.mxu0
  %1825 = vmatprep.mubr.f32.mxu0 0.0
  %1826 = vmatmul.mubr.f32.gmra.mxu0 %v1712
  %v1827 = vpop.f32.mrf.mxu0
  %v1828 = vadd.f32 0.0, %v1827
  %v1829 = vpop.f32.mrf.mxu0
  %1830 = vmatprep.mubr.f32.mxu0 0.0
  %1831 = vmatmul.mubr.f32.gmra.mxu0 %v1715
  %v1832 = vpop.f32.mrf.mxu0
  %v1833 = vadd.f32 0.0, %v1832
  %v1834 = vpop.f32.mrf.mxu0
  %1835 = vmatprep.mubr.f32.mxu0 0.0
  %1836 = vmatmul.mubr.f32.gmra.mxu0 %v1718
  %v1837 = vpop.f32.mrf.mxu0
  %v1838 = vadd.f32 0.0, %v1837
  %v1839 = vpop.f32.mrf.mxu0
  %1840 = vmatprep.mubr.f32.mxu0 0.0
  %1841 = vmatmul.mubr.f32.gmra.mxu0 %v1721
  %v1842 = vpop.f32.mrf.mxu0
  %v1843 = vadd.f32 0.0, %v1842
  %v1844 = vpop.f32.mrf.mxu0
  %1845 = vmatprep.mubr.f32.mxu0 0.0
  %1846 = vmatmul.mubr.f32.gmra.mxu0 %v1724
  %v1847 = vpop.f32.mrf.mxu0
  %v1848 = vadd.f32 0.0, %v1847
  %v1849 = vpop.f32.mrf.mxu0
  %1850 = vmatprep.mubr.f32.mxu0 0.0
  %1851 = vmatmul.mubr.f32.gmra.mxu0 %v1727
  %v1852 = vpop.f32.mrf.mxu0
  %v1853 = vadd.f32 0.0, %v1852
  %v1854 = vpop.f32.mrf.mxu0
  %1855 = vmatprep.mubr.f32.mxu0 0.0
  %1856 = vmatmul.mubr.f32.gmra.mxu0 %v1730
  %v1857 = vpop.f32.mrf.mxu0
  %v1858 = vadd.f32 0.0, %v1857
  %v1859 = vpop.f32.mrf.mxu0
  %1860 = vmatprep.mubr.f32.mxu0 0.0
  %1861 = vmatmul.mubr.f32.gmra.mxu0 %v1733
  %v1862 = vpop.f32.mrf.mxu0
  %v1863 = vadd.f32 0.0, %v1862
  %v1864 = vpop.f32.mrf.mxu0
  %1865 = vmatprep.mubr.f32.mxu0 0.0
  %1866 = vmatmul.mubr.f32.gmra.mxu0 %v1736
  %v1867 = vpop.f32.mrf.mxu0
  %v1868 = vadd.f32 0.0, %v1867
  %v1869 = vpop.f32.mrf.mxu0
  %1870 = vmatprep.mubr.f32.mxu0 0.0
  %1871 = vmatmul.mubr.f32.gmra.mxu0 %v1739
  %v1872 = vpop.f32.mrf.mxu0
  %v1873 = vadd.f32 0.0, %v1872
  %v1874 = vpop.f32.mrf.mxu0
  %1875 = vmatprep.mubr.f32.mxu0 0.0
  %1876 = vmatmul.mubr.f32.gmra.mxu0 %v1742
  %v1877 = vpop.f32.mrf.mxu0
  %v1878 = vadd.f32 0.0, %v1877
  %v1879 = vpop.f32.mrf.mxu0
  %1880 = vmatprep.mubr.f32.mxu0 0.0
  %1881 = vmatmul.mubr.f32.gmra.mxu0 %v1745
  %v1882 = vpop.f32.mrf.mxu0
  %v1883 = vadd.f32 0.0, %v1882
  %v1884 = vpop.f32.mrf.mxu0
  %1885 = vmatprep.mubr.f32.mxu0 0.0
  %1886 = vmatmul.mubr.f32.gmra.mxu0 %v1748
  %v1887 = vpop.f32.mrf.mxu0
  %v1888 = vadd.f32 0.0, %v1887
  %v1889 = vpop.f32.mrf.mxu0
  %1890 = vmatprep.mubr.f32.mxu0 0.0
  %1891 = vmatmul.mubr.f32.gmra.mxu0 %v1751
  %v1892 = vpop.f32.mrf.mxu0
  %v1893 = vadd.f32 0.0, %v1892
  %v1894 = vpop.f32.mrf.mxu0
  %1895 = vmatprep.mubr.f32.mxu0 0.0
  %1896 = vmatmul.mubr.f32.gmra.mxu0 %v1754
  %v1897 = vpop.f32.mrf.mxu0
  %v1898 = vadd.f32 0.0, %v1897
  %v1899 = vpop.f32.mrf.mxu0
  %1900 = vdwg.mxu0
  %v1901 = vadd.f32 %v1691, %v1823
  %v1902 = vadd.f32 %v1692, %v1828
  %v1903 = vadd.f32 %v1693, %v1833
  %v1904 = vadd.f32 %v1694, %v1838
  %v1905 = vadd.f32 %v1695, %v1843
  %v1906 = vadd.f32 %v1696, %v1848
  %v1907 = vadd.f32 %v1697, %v1853
  %v1908 = vadd.f32 %v1698, %v1858
  %v1909 = vadd.f32 %v1699, %v1863
  %v1910 = vadd.f32 %v1700, %v1868
  %v1911 = vadd.f32 %v1701, %v1873
  %v1912 = vadd.f32 %v1702, %v1878
  %v1913 = vadd.f32 %v1703, %v1883
  %v1914 = vadd.f32 %v1704, %v1888
  %v1915 = vadd.f32 %v1705, %v1893
  %v1916 = vadd.f32 %v1706, %v1898
  %v1917 = vld [vmem:[%s3 + $0x20] sm:$0xff]
  %v1919 = vsel %vm895, %v1028, 0
  %v1922 = vsel %vm895, %v1029, 0
  %v1925 = vsel %vm895, %v1030, 0
  %v1928 = vsel %vm895, %v1031, 0
  %v1931 = vsel %vm895, %v1032, 0
  %v1934 = vsel %vm895, %v1033, 0
  %v1937 = vsel %vm895, %v1034, 0
  %v1940 = vsel %vm895, %v1035, 0
  %v1943 = vsel %vm895, %v1036, 0
  %v1946 = vsel %vm895, %v1037, 0
  %v1949 = vsel %vm895, %v1038, 0
  %v1952 = vsel %vm895, %v1039, 0
  %v1955 = vsel %vm895, %v1040, 0
  %v1958 = vsel %vm895, %v1041, 0
  %v1961 = vsel %vm895, %v1042, 0
  %v1964 = vsel %vm895, %v1043, 0
  %1966 = vmatprep.subr.mxu0 0.0
  %1967 = vmatpush1.msra.mxu0 0.0
  %1968 = vmatprep.subr.mxu0 0.0
  %1969 = vmatpush1.msra.mxu0 0.0
  %1970 = vmatprep.subr.mxu0 0.0
  %1971 = vmatpush1.msra.mxu0 0.0
  %1972 = vmatprep.subr.mxu0 0.0
  %1973 = vmatpush1.msra.mxu0 0.0
  %1974 = vmatprep.subr.mxu0 0.0
  %1975 = vmatpush1.msra.mxu0 0.0
  %1976 = vmatprep.subr.mxu0 0.0
  %1977 = vmatpush1.msra.mxu0 0.0
  %1978 = vmatprep.subr.mxu0 0.0
  %1979 = vmatpush1.msra.mxu0 0.0
  %1980 = vmatprep.subr.mxu0 0.0
  %1981 = vmatpush1.msra.mxu0 0.0
  %1982 = vmatprep.subr.mxu0 0.0
  %1983 = vmatpush1.msra.mxu0 0.0
  %1984 = vmatprep.subr.mxu0 0.0
  %1985 = vmatpush1.msra.mxu0 0.0
  %1986 = vmatprep.subr.mxu0 0.0
  %1987 = vmatpush1.msra.mxu0 0.0
  %1988 = vmatprep.subr.mxu0 0.0
  %1989 = vmatpush1.msra.mxu0 0.0
  %1990 = vmatprep.subr.mxu0 0.0
  %1991 = vmatpush1.msra.mxu0 0.0
  %1992 = vmatprep.subr.mxu0 0.0
  %1993 = vmatpush1.msra.mxu0 0.0
  %1994 = vmatprep.subr.mxu0 0.0
  %1995 = vmatpush1.msra.mxu0 0.0
  %1996 = vmatprep.subr.mxu0 0.0
  %1997 = vmatpush1.msra.mxu0 %v1917
  %1998 = vmatprep.subr.mxu0 0.0
  %1999 = vmatpush2.msra.mxu0 0.0
  %2000 = vmatprep.subr.mxu0 0.0
  %2001 = vmatpush2.msra.mxu0 0.0
  %2002 = vmatprep.subr.mxu0 0.0
  %2003 = vmatpush2.msra.mxu0 0.0
  %2004 = vmatprep.subr.mxu0 0.0
  %2005 = vmatpush2.msra.mxu0 0.0
  %2006 = vmatprep.subr.mxu0 0.0
  %2007 = vmatpush2.msra.mxu0 0.0
  %2008 = vmatprep.subr.mxu0 0.0
  %2009 = vmatpush2.msra.mxu0 0.0
  %2010 = vmatprep.subr.mxu0 0.0
  %2011 = vmatpush2.msra.mxu0 0.0
  %2012 = vmatprep.subr.mxu0 0.0
  %2013 = vmatpush2.msra.mxu0 0.0
  %2014 = vmatprep.subr.mxu0 0.0
  %2015 = vmatpush2.msra.mxu0 0.0
  %2016 = vmatprep.subr.mxu0 0.0
  %2017 = vmatpush2.msra.mxu0 0.0
  %2018 = vmatprep.subr.mxu0 0.0
  %2019 = vmatpush2.msra.mxu0 0.0
  %2020 = vmatprep.subr.mxu0 0.0
  %2021 = vmatpush2.msra.mxu0 0.0
  %2022 = vmatprep.subr.mxu0 0.0
  %2023 = vmatpush2.msra.mxu0 0.0
  %2024 = vmatprep.subr.mxu0 0.0
  %2025 = vmatpush2.msra.mxu0 0.0
  %2026 = vmatprep.subr.mxu0 0.0
  %2027 = vmatpush2.msra.mxu0 0.0
  %2028 = vmatprep.subr.mxu0 0.0
  %2029 = vmatpush2.msra.mxu0 0.0
  %2030 = vmatprep.mubr.f32.mxu0 0.0
  %2031 = vmatmul.mubr.f32.gmra.mxu0 %v1919
  %v2032 = vpop.f32.mrf.mxu0
  %v2033 = vadd.f32 0.0, %v2032
  %v2034 = vpop.f32.mrf.mxu0
  %2035 = vmatprep.mubr.f32.mxu0 0.0
  %2036 = vmatmul.mubr.f32.gmra.mxu0 %v1922
  %v2037 = vpop.f32.mrf.mxu0
  %v2038 = vadd.f32 0.0, %v2037
  %v2039 = vpop.f32.mrf.mxu0
  %2040 = vmatprep.mubr.f32.mxu0 0.0
  %2041 = vmatmul.mubr.f32.gmra.mxu0 %v1925
  %v2042 = vpop.f32.mrf.mxu0
  %v2043 = vadd.f32 0.0, %v2042
  %v2044 = vpop.f32.mrf.mxu0
  %2045 = vmatprep.mubr.f32.mxu0 0.0
  %2046 = vmatmul.mubr.f32.gmra.mxu0 %v1928
  %v2047 = vpop.f32.mrf.mxu0
  %v2048 = vadd.f32 0.0, %v2047
  %v2049 = vpop.f32.mrf.mxu0
  %2050 = vmatprep.mubr.f32.mxu0 0.0
  %2051 = vmatmul.mubr.f32.gmra.mxu0 %v1931
  %v2052 = vpop.f32.mrf.mxu0
  %v2053 = vadd.f32 0.0, %v2052
  %v2054 = vpop.f32.mrf.mxu0
  %2055 = vmatprep.mubr.f32.mxu0 0.0
  %2056 = vmatmul.mubr.f32.gmra.mxu0 %v1934
  %v2057 = vpop.f32.mrf.mxu0
  %v2058 = vadd.f32 0.0, %v2057
  %v2059 = vpop.f32.mrf.mxu0
  %2060 = vmatprep.mubr.f32.mxu0 0.0
  %2061 = vmatmul.mubr.f32.gmra.mxu0 %v1937
  %v2062 = vpop.f32.mrf.mxu0
  %v2063 = vadd.f32 0.0, %v2062
  %v2064 = vpop.f32.mrf.mxu0
  %2065 = vmatprep.mubr.f32.mxu0 0.0
  %2066 = vmatmul.mubr.f32.gmra.mxu0 %v1940
  %v2067 = vpop.f32.mrf.mxu0
  %v2068 = vadd.f32 0.0, %v2067
  %v2069 = vpop.f32.mrf.mxu0
  %2070 = vmatprep.mubr.f32.mxu0 0.0
  %2071 = vmatmul.mubr.f32.gmra.mxu0 %v1943
  %v2072 = vpop.f32.mrf.mxu0
  %v2073 = vadd.f32 0.0, %v2072
  %v2074 = vpop.f32.mrf.mxu0
  %2075 = vmatprep.mubr.f32.mxu0 0.0
  %2076 = vmatmul.mubr.f32.gmra.mxu0 %v1946
  %v2077 = vpop.f32.mrf.mxu0
  %v2078 = vadd.f32 0.0, %v2077
  %v2079 = vpop.f32.mrf.mxu0
  %2080 = vmatprep.mubr.f32.mxu0 0.0
  %2081 = vmatmul.mubr.f32.gmra.mxu0 %v1949
  %v2082 = vpop.f32.mrf.mxu0
  %v2083 = vadd.f32 0.0, %v2082
  %v2084 = vpop.f32.mrf.mxu0
  %2085 = vmatprep.mubr.f32.mxu0 0.0
  %2086 = vmatmul.mubr.f32.gmra.mxu0 %v1952
  %v2087 = vpop.f32.mrf.mxu0
  %v2088 = vadd.f32 0.0, %v2087
  %v2089 = vpop.f32.mrf.mxu0
  %2090 = vmatprep.mubr.f32.mxu0 0.0
  %2091 = vmatmul.mubr.f32.gmra.mxu0 %v1955
  %v2092 = vpop.f32.mrf.mxu0
  %v2093 = vadd.f32 0.0, %v2092
  %v2094 = vpop.f32.mrf.mxu0
  %2095 = vmatprep.mubr.f32.mxu0 0.0
  %2096 = vmatmul.mubr.f32.gmra.mxu0 %v1958
  %v2097 = vpop.f32.mrf.mxu0
  %v2098 = vadd.f32 0.0, %v2097
  %v2099 = vpop.f32.mrf.mxu0
  %2100 = vmatprep.mubr.f32.mxu0 0.0
  %2101 = vmatmul.mubr.f32.gmra.mxu0 %v1961
  %v2102 = vpop.f32.mrf.mxu0
  %v2103 = vadd.f32 0.0, %v2102
  %v2104 = vpop.f32.mrf.mxu0
  %2105 = vmatprep.mubr.f32.mxu0 0.0
  %2106 = vmatmul.mubr.f32.gmra.mxu0 %v1964
  %v2107 = vpop.f32.mrf.mxu0
  %v2108 = vadd.f32 0.0, %v2107
  %v2109 = vpop.f32.mrf.mxu0
  %2110 = vdwg.mxu0
  %v2111 = vadd.f32 %v1901, %v2033
  %v2112 = vadd.f32 %v1902, %v2038
  %v2113 = vadd.f32 %v1903, %v2043
  %v2114 = vadd.f32 %v1904, %v2048
  %v2115 = vadd.f32 %v1905, %v2053
  %v2116 = vadd.f32 %v1906, %v2058
  %v2117 = vadd.f32 %v1907, %v2063
  %v2118 = vadd.f32 %v1908, %v2068
  %v2119 = vadd.f32 %v1909, %v2073
  %v2120 = vadd.f32 %v1910, %v2078
  %v2121 = vadd.f32 %v1911, %v2083
  %v2122 = vadd.f32 %v1912, %v2088
  %v2123 = vadd.f32 %v1913, %v2093
  %v2124 = vadd.f32 %v1914, %v2098
  %v2125 = vadd.f32 %v1915, %v2103
  %v2126 = vadd.f32 %v1916, %v2108
  %v2127 = vld [vmem:[%s3 + $0x28] sm:$0xff]
  %v2129 = vsel %vm895, %v1044, 0
  %v2132 = vsel %vm895, %v1045, 0
  %v2135 = vsel %vm895, %v1046, 0
  %v2138 = vsel %vm895, %v1047, 0
  %v2141 = vsel %vm895, %v1048, 0
  %v2144 = vsel %vm895, %v1049, 0
  %v2147 = vsel %vm895, %v1050, 0
  %v2150 = vsel %vm895, %v1051, 0
  %v2153 = vsel %vm895, %v1052, 0
  %v2156 = vsel %vm895, %v1053, 0
  %v2159 = vsel %vm895, %v1054, 0
  %v2162 = vsel %vm895, %v1055, 0
  %v2165 = vsel %vm895, %v1056, 0
  %v2168 = vsel %vm895, %v1057, 0
  %v2171 = vsel %vm895, %v1058, 0
  %v2174 = vsel %vm895, %v1059, 0
  %2176 = vmatprep.subr.mxu0 0.0
  %2177 = vmatpush1.msra.mxu0 0.0
  %2178 = vmatprep.subr.mxu0 0.0
  %2179 = vmatpush1.msra.mxu0 0.0
  %2180 = vmatprep.subr.mxu0 0.0
  %2181 = vmatpush1.msra.mxu0 0.0
  %2182 = vmatprep.subr.mxu0 0.0
  %2183 = vmatpush1.msra.mxu0 0.0
  %2184 = vmatprep.subr.mxu0 0.0
  %2185 = vmatpush1.msra.mxu0 0.0
  %2186 = vmatprep.subr.mxu0 0.0
  %2187 = vmatpush1.msra.mxu0 0.0
  %2188 = vmatprep.subr.mxu0 0.0
  %2189 = vmatpush1.msra.mxu0 0.0
  %2190 = vmatprep.subr.mxu0 0.0
  %2191 = vmatpush1.msra.mxu0 0.0
  %2192 = vmatprep.subr.mxu0 0.0
  %2193 = vmatpush1.msra.mxu0 0.0
  %2194 = vmatprep.subr.mxu0 0.0
  %2195 = vmatpush1.msra.mxu0 0.0
  %2196 = vmatprep.subr.mxu0 0.0
  %2197 = vmatpush1.msra.mxu0 0.0
  %2198 = vmatprep.subr.mxu0 0.0
  %2199 = vmatpush1.msra.mxu0 0.0
  %2200 = vmatprep.subr.mxu0 0.0
  %2201 = vmatpush1.msra.mxu0 0.0
  %2202 = vmatprep.subr.mxu0 0.0
  %2203 = vmatpush1.msra.mxu0 0.0
  %2204 = vmatprep.subr.mxu0 0.0
  %2205 = vmatpush1.msra.mxu0 0.0
  %2206 = vmatprep.subr.mxu0 0.0
  %2207 = vmatpush1.msra.mxu0 %v2127
  %2208 = vmatprep.subr.mxu0 0.0
  %2209 = vmatpush2.msra.mxu0 0.0
  %2210 = vmatprep.subr.mxu0 0.0
  %2211 = vmatpush2.msra.mxu0 0.0
  %2212 = vmatprep.subr.mxu0 0.0
  %2213 = vmatpush2.msra.mxu0 0.0
  %2214 = vmatprep.subr.mxu0 0.0
  %2215 = vmatpush2.msra.mxu0 0.0
  %2216 = vmatprep.subr.mxu0 0.0
  %2217 = vmatpush2.msra.mxu0 0.0
  %2218 = vmatprep.subr.mxu0 0.0
  %2219 = vmatpush2.msra.mxu0 0.0
  %2220 = vmatprep.subr.mxu0 0.0
  %2221 = vmatpush2.msra.mxu0 0.0
  %2222 = vmatprep.subr.mxu0 0.0
  %2223 = vmatpush2.msra.mxu0 0.0
  %2224 = vmatprep.subr.mxu0 0.0
  %2225 = vmatpush2.msra.mxu0 0.0
  %2226 = vmatprep.subr.mxu0 0.0
  %2227 = vmatpush2.msra.mxu0 0.0
  %2228 = vmatprep.subr.mxu0 0.0
  %2229 = vmatpush2.msra.mxu0 0.0
  %2230 = vmatprep.subr.mxu0 0.0
  %2231 = vmatpush2.msra.mxu0 0.0
  %2232 = vmatprep.subr.mxu0 0.0
  %2233 = vmatpush2.msra.mxu0 0.0
  %2234 = vmatprep.subr.mxu0 0.0
  %2235 = vmatpush2.msra.mxu0 0.0
  %2236 = vmatprep.subr.mxu0 0.0
  %2237 = vmatpush2.msra.mxu0 0.0
  %2238 = vmatprep.subr.mxu0 0.0
  %2239 = vmatpush2.msra.mxu0 0.0
  %2240 = vmatprep.mubr.f32.mxu0 0.0
  %2241 = vmatmul.mubr.f32.gmra.mxu0 %v2129
  %v2242 = vpop.f32.mrf.mxu0
  %v2243 = vadd.f32 0.0, %v2242
  %v2244 = vpop.f32.mrf.mxu0
  %2245 = vmatprep.mubr.f32.mxu0 0.0
  %2246 = vmatmul.mubr.f32.gmra.mxu0 %v2132
  %v2247 = vpop.f32.mrf.mxu0
  %v2248 = vadd.f32 0.0, %v2247
  %v2249 = vpop.f32.mrf.mxu0
  %2250 = vmatprep.mubr.f32.mxu0 0.0
  %2251 = vmatmul.mubr.f32.gmra.mxu0 %v2135
  %v2252 = vpop.f32.mrf.mxu0
  %v2253 = vadd.f32 0.0, %v2252
  %v2254 = vpop.f32.mrf.mxu0
  %2255 = vmatprep.mubr.f32.mxu0 0.0
  %2256 = vmatmul.mubr.f32.gmra.mxu0 %v2138
  %v2257 = vpop.f32.mrf.mxu0
  %v2258 = vadd.f32 0.0, %v2257
  %v2259 = vpop.f32.mrf.mxu0
  %2260 = vmatprep.mubr.f32.mxu0 0.0
  %2261 = vmatmul.mubr.f32.gmra.mxu0 %v2141
  %v2262 = vpop.f32.mrf.mxu0
  %v2263 = vadd.f32 0.0, %v2262
  %v2264 = vpop.f32.mrf.mxu0
  %2265 = vmatprep.mubr.f32.mxu0 0.0
  %2266 = vmatmul.mubr.f32.gmra.mxu0 %v2144
  %v2267 = vpop.f32.mrf.mxu0
  %v2268 = vadd.f32 0.0, %v2267
  %v2269 = vpop.f32.mrf.mxu0
  %2270 = vmatprep.mubr.f32.mxu0 0.0
  %2271 = vmatmul.mubr.f32.gmra.mxu0 %v2147
  %v2272 = vpop.f32.mrf.mxu0
  %v2273 = vadd.f32 0.0, %v2272
  %v2274 = vpop.f32.mrf.mxu0
  %2275 = vmatprep.mubr.f32.mxu0 0.0
  %2276 = vmatmul.mubr.f32.gmra.mxu0 %v2150
  %v2277 = vpop.f32.mrf.mxu0
  %v2278 = vadd.f32 0.0, %v2277
  %v2279 = vpop.f32.mrf.mxu0
  %2280 = vmatprep.mubr.f32.mxu0 0.0
  %2281 = vmatmul.mubr.f32.gmra.mxu0 %v2153
  %v2282 = vpop.f32.mrf.mxu0
  %v2283 = vadd.f32 0.0, %v2282
  %v2284 = vpop.f32.mrf.mxu0
  %2285 = vmatprep.mubr.f32.mxu0 0.0
  %2286 = vmatmul.mubr.f32.gmra.mxu0 %v2156
  %v2287 = vpop.f32.mrf.mxu0
  %v2288 = vadd.f32 0.0, %v2287
  %v2289 = vpop.f32.mrf.mxu0
  %2290 = vmatprep.mubr.f32.mxu0 0.0
  %2291 = vmatmul.mubr.f32.gmra.mxu0 %v2159
  %v2292 = vpop.f32.mrf.mxu0
  %v2293 = vadd.f32 0.0, %v2292
  %v2294 = vpop.f32.mrf.mxu0
  %2295 = vmatprep.mubr.f32.mxu0 0.0
  %2296 = vmatmul.mubr.f32.gmra.mxu0 %v2162
  %v2297 = vpop.f32.mrf.mxu0
  %v2298 = vadd.f32 0.0, %v2297
  %v2299 = vpop.f32.mrf.mxu0
  %2300 = vmatprep.mubr.f32.mxu0 0.0
  %2301 = vmatmul.mubr.f32.gmra.mxu0 %v2165
  %v2302 = vpop.f32.mrf.mxu0
  %v2303 = vadd.f32 0.0, %v2302
  %v2304 = vpop.f32.mrf.mxu0
  %2305 = vmatprep.mubr.f32.mxu0 0.0
  %2306 = vmatmul.mubr.f32.gmra.mxu0 %v2168
  %v2307 = vpop.f32.mrf.mxu0
  %v2308 = vadd.f32 0.0, %v2307
  %v2309 = vpop.f32.mrf.mxu0
  %2310 = vmatprep.mubr.f32.mxu0 0.0
  %2311 = vmatmul.mubr.f32.gmra.mxu0 %v2171
  %v2312 = vpop.f32.mrf.mxu0
  %v2313 = vadd.f32 0.0, %v2312
  %v2314 = vpop.f32.mrf.mxu0
  %2315 = vmatprep.mubr.f32.mxu0 0.0
  %2316 = vmatmul.mubr.f32.gmra.mxu0 %v2174
  %v2317 = vpop.f32.mrf.mxu0
  %v2318 = vadd.f32 0.0, %v2317
  %v2319 = vpop.f32.mrf.mxu0
  %2320 = vdwg.mxu0
  %v2321 = vadd.f32 %v2111, %v2243
  %v2322 = vadd.f32 %v2112, %v2248
  %v2323 = vadd.f32 %v2113, %v2253
  %v2324 = vadd.f32 %v2114, %v2258
  %v2325 = vadd.f32 %v2115, %v2263
  %v2326 = vadd.f32 %v2116, %v2268
  %v2327 = vadd.f32 %v2117, %v2273
  %v2328 = vadd.f32 %v2118, %v2278
  %v2329 = vadd.f32 %v2119, %v2283
  %v2330 = vadd.f32 %v2120, %v2288
  %v2331 = vadd.f32 %v2121, %v2293
  %v2332 = vadd.f32 %v2122, %v2298
  %v2333 = vadd.f32 %v2123, %v2303
  %v2334 = vadd.f32 %v2124, %v2308
  %v2335 = vadd.f32 %v2125, %v2313
  %v2336 = vadd.f32 %v2126, %v2318
  %v2337 = vld [vmem:[%s3 + $0x30] sm:$0xff]
  %v2339 = vsel %vm895, %v1061, 0
  %v2342 = vsel %vm895, %v1062, 0
  %v2345 = vsel %vm895, %v1063, 0
  %v2348 = vsel %vm895, %v1064, 0
  %v2351 = vsel %vm895, %v1065, 0
  %v2354 = vsel %vm895, %v1066, 0
  %v2357 = vsel %vm895, %v1067, 0
  %v2360 = vsel %vm895, %v1068, 0
  %v2363 = vsel %vm895, %v1069, 0
  %v2366 = vsel %vm895, %v1070, 0
  %v2369 = vsel %vm895, %v1071, 0
  %v2372 = vsel %vm895, %v1072, 0
  %v2375 = vsel %vm895, %v1073, 0
  %v2378 = vsel %vm895, %v1074, 0
  %v2381 = vsel %vm895, %v1075, 0
  %v2384 = vsel %vm895, %v1076, 0
  %2386 = vmatprep.subr.mxu0 0.0
  %2387 = vmatpush1.msra.mxu0 0.0
  %2388 = vmatprep.subr.mxu0 0.0
  %2389 = vmatpush1.msra.mxu0 0.0
  %2390 = vmatprep.subr.mxu0 0.0
  %2391 = vmatpush1.msra.mxu0 0.0
  %2392 = vmatprep.subr.mxu0 0.0
  %2393 = vmatpush1.msra.mxu0 0.0
  %2394 = vmatprep.subr.mxu0 0.0
  %2395 = vmatpush1.msra.mxu0 0.0
  %2396 = vmatprep.subr.mxu0 0.0
  %2397 = vmatpush1.msra.mxu0 0.0
  %2398 = vmatprep.subr.mxu0 0.0
  %2399 = vmatpush1.msra.mxu0 0.0
  %2400 = vmatprep.subr.mxu0 0.0
  %2401 = vmatpush1.msra.mxu0 0.0
  %2402 = vmatprep.subr.mxu0 0.0
  %2403 = vmatpush1.msra.mxu0 0.0
  %2404 = vmatprep.subr.mxu0 0.0
  %2405 = vmatpush1.msra.mxu0 0.0
  %2406 = vmatprep.subr.mxu0 0.0
  %2407 = vmatpush1.msra.mxu0 0.0
  %2408 = vmatprep.subr.mxu0 0.0
  %2409 = vmatpush1.msra.mxu0 0.0
  %2410 = vmatprep.subr.mxu0 0.0
  %2411 = vmatpush1.msra.mxu0 0.0
  %2412 = vmatprep.subr.mxu0 0.0
  %2413 = vmatpush1.msra.mxu0 0.0
  %2414 = vmatprep.subr.mxu0 0.0
  %2415 = vmatpush1.msra.mxu0 0.0
  %2416 = vmatprep.subr.mxu0 0.0
  %2417 = vmatpush1.msra.mxu0 %v2337
  %2418 = vmatprep.subr.mxu0 0.0
  %2419 = vmatpush2.msra.mxu0 0.0
  %2420 = vmatprep.subr.mxu0 0.0
  %2421 = vmatpush2.msra.mxu0 0.0
  %2422 = vmatprep.subr.mxu0 0.0
  %2423 = vmatpush2.msra.mxu0 0.0
  %2424 = vmatprep.subr.mxu0 0.0
  %2425 = vmatpush2.msra.mxu0 0.0
  %2426 = vmatprep.subr.mxu0 0.0
  %2427 = vmatpush2.msra.mxu0 0.0
  %2428 = vmatprep.subr.mxu0 0.0
  %2429 = vmatpush2.msra.mxu0 0.0
  %2430 = vmatprep.subr.mxu0 0.0
  %2431 = vmatpush2.msra.mxu0 0.0
  %2432 = vmatprep.subr.mxu0 0.0
  %2433 = vmatpush2.msra.mxu0 0.0
  %2434 = vmatprep.subr.mxu0 0.0
  %2435 = vmatpush2.msra.mxu0 0.0
  %2436 = vmatprep.subr.mxu0 0.0
  %2437 = vmatpush2.msra.mxu0 0.0
  %2438 = vmatprep.subr.mxu0 0.0
  %2439 = vmatpush2.msra.mxu0 0.0
  %2440 = vmatprep.subr.mxu0 0.0
  %2441 = vmatpush2.msra.mxu0 0.0
  %2442 = vmatprep.subr.mxu0 0.0
  %2443 = vmatpush2.msra.mxu0 0.0
  %2444 = vmatprep.subr.mxu0 0.0
  %2445 = vmatpush2.msra.mxu0 0.0
  %2446 = vmatprep.subr.mxu0 0.0
  %2447 = vmatpush2.msra.mxu0 0.0
  %2448 = vmatprep.subr.mxu0 0.0
  %2449 = vmatpush2.msra.mxu0 0.0
  %2450 = vmatprep.mubr.f32.mxu0 0.0
  %2451 = vmatmul.mubr.f32.gmra.mxu0 %v2339
  %v2452 = vpop.f32.mrf.mxu0
  %v2453 = vadd.f32 0.0, %v2452
  %v2454 = vpop.f32.mrf.mxu0
  %2455 = vmatprep.mubr.f32.mxu0 0.0
  %2456 = vmatmul.mubr.f32.gmra.mxu0 %v2342
  %v2457 = vpop.f32.mrf.mxu0
  %v2458 = vadd.f32 0.0, %v2457
  %v2459 = vpop.f32.mrf.mxu0
  %2460 = vmatprep.mubr.f32.mxu0 0.0
  %2461 = vmatmul.mubr.f32.gmra.mxu0 %v2345
  %v2462 = vpop.f32.mrf.mxu0
  %v2463 = vadd.f32 0.0, %v2462
  %v2464 = vpop.f32.mrf.mxu0
  %2465 = vmatprep.mubr.f32.mxu0 0.0
  %2466 = vmatmul.mubr.f32.gmra.mxu0 %v2348
  %v2467 = vpop.f32.mrf.mxu0
  %v2468 = vadd.f32 0.0, %v2467
  %v2469 = vpop.f32.mrf.mxu0
  %2470 = vmatprep.mubr.f32.mxu0 0.0
  %2471 = vmatmul.mubr.f32.gmra.mxu0 %v2351
  %v2472 = vpop.f32.mrf.mxu0
  %v2473 = vadd.f32 0.0, %v2472
  %v2474 = vpop.f32.mrf.mxu0
  %2475 = vmatprep.mubr.f32.mxu0 0.0
  %2476 = vmatmul.mubr.f32.gmra.mxu0 %v2354
  %v2477 = vpop.f32.mrf.mxu0
  %v2478 = vadd.f32 0.0, %v2477
  %v2479 = vpop.f32.mrf.mxu0
  %2480 = vmatprep.mubr.f32.mxu0 0.0
  %2481 = vmatmul.mubr.f32.gmra.mxu0 %v2357
  %v2482 = vpop.f32.mrf.mxu0
  %v2483 = vadd.f32 0.0, %v2482
  %v2484 = vpop.f32.mrf.mxu0
  %2485 = vmatprep.mubr.f32.mxu0 0.0
  %2486 = vmatmul.mubr.f32.gmra.mxu0 %v2360
  %v2487 = vpop.f32.mrf.mxu0
  %v2488 = vadd.f32 0.0, %v2487
  %v2489 = vpop.f32.mrf.mxu0
  %2490 = vmatprep.mubr.f32.mxu0 0.0
  %2491 = vmatmul.mubr.f32.gmra.mxu0 %v2363
  %v2492 = vpop.f32.mrf.mxu0
  %v2493 = vadd.f32 0.0, %v2492
  %v2494 = vpop.f32.mrf.mxu0
  %2495 = vmatprep.mubr.f32.mxu0 0.0
  %2496 = vmatmul.mubr.f32.gmra.mxu0 %v2366
  %v2497 = vpop.f32.mrf.mxu0
  %v2498 = vadd.f32 0.0, %v2497
  %v2499 = vpop.f32.mrf.mxu0
  %2500 = vmatprep.mubr.f32.mxu0 0.0
  %2501 = vmatmul.mubr.f32.gmra.mxu0 %v2369
  %v2502 = vpop.f32.mrf.mxu0
  %v2503 = vadd.f32 0.0, %v2502
  %v2504 = vpop.f32.mrf.mxu0
  %2505 = vmatprep.mubr.f32.mxu0 0.0
  %2506 = vmatmul.mubr.f32.gmra.mxu0 %v2372
  %v2507 = vpop.f32.mrf.mxu0
  %v2508 = vadd.f32 0.0, %v2507
  %v2509 = vpop.f32.mrf.mxu0
  %2510 = vmatprep.mubr.f32.mxu0 0.0
  %2511 = vmatmul.mubr.f32.gmra.mxu0 %v2375
  %v2512 = vpop.f32.mrf.mxu0
  %v2513 = vadd.f32 0.0, %v2512
  %v2514 = vpop.f32.mrf.mxu0
  %2515 = vmatprep.mubr.f32.mxu0 0.0
  %2516 = vmatmul.mubr.f32.gmra.mxu0 %v2378
  %v2517 = vpop.f32.mrf.mxu0
  %v2518 = vadd.f32 0.0, %v2517
  %v2519 = vpop.f32.mrf.mxu0
  %2520 = vmatprep.mubr.f32.mxu0 0.0
  %2521 = vmatmul.mubr.f32.gmra.mxu0 %v2381
  %v2522 = vpop.f32.mrf.mxu0
  %v2523 = vadd.f32 0.0, %v2522
  %v2524 = vpop.f32.mrf.mxu0
  %2525 = vmatprep.mubr.f32.mxu0 0.0
  %2526 = vmatmul.mubr.f32.gmra.mxu0 %v2384
  %v2527 = vpop.f32.mrf.mxu0
  %v2528 = vadd.f32 0.0, %v2527
  %v2529 = vpop.f32.mrf.mxu0
  %2530 = vdwg.mxu0
  %v2531 = vadd.f32 %v2321, %v2453
  %v2532 = vadd.f32 %v2322, %v2458
  %v2533 = vadd.f32 %v2323, %v2463
  %v2534 = vadd.f32 %v2324, %v2468
  %v2535 = vadd.f32 %v2325, %v2473
  %v2536 = vadd.f32 %v2326, %v2478
  %v2537 = vadd.f32 %v2327, %v2483
  %v2538 = vadd.f32 %v2328, %v2488
  %v2539 = vadd.f32 %v2329, %v2493
  %v2540 = vadd.f32 %v2330, %v2498
  %v2541 = vadd.f32 %v2331, %v2503
  %v2542 = vadd.f32 %v2332, %v2508
  %v2543 = vadd.f32 %v2333, %v2513
  %v2544 = vadd.f32 %v2334, %v2518
  %v2545 = vadd.f32 %v2335, %v2523
  %v2546 = vadd.f32 %v2336, %v2528
  %v2547 = vld [vmem:[%s3 + $0x38] sm:$0xff]
  %v2549 = vsel %vm895, %v1077, 0
  %v2552 = vsel %vm895, %v1078, 0
  %v2555 = vsel %vm895, %v1079, 0
  %v2558 = vsel %vm895, %v1080, 0
  %v2561 = vsel %vm895, %v1081, 0
  %v2564 = vsel %vm895, %v1082, 0
  %v2567 = vsel %vm895, %v1083, 0
  %v2570 = vsel %vm895, %v1084, 0
  %v2573 = vsel %vm895, %v1085, 0
  %v2576 = vsel %vm895, %v1086, 0
  %v2579 = vsel %vm895, %v1087, 0
  %v2582 = vsel %vm895, %v1088, 0
  %v2585 = vsel %vm895, %v1089, 0
  %v2588 = vsel %vm895, %v1090, 0
  %v2591 = vsel %vm895, %v1091, 0
  %v2594 = vsel %vm895, %v1092, 0
  %2596 = vmatprep.subr.mxu0 0.0
  %2597 = vmatpush1.msra.mxu0 0.0
  %2598 = vmatprep.subr.mxu0 0.0
  %2599 = vmatpush1.msra.mxu0 0.0
  %2600 = vmatprep.subr.mxu0 0.0
  %2601 = vmatpush1.msra.mxu0 0.0
  %2602 = vmatprep.subr.mxu0 0.0
  %2603 = vmatpush1.msra.mxu0 0.0
  %2604 = vmatprep.subr.mxu0 0.0
  %2605 = vmatpush1.msra.mxu0 0.0
  %2606 = vmatprep.subr.mxu0 0.0
  %2607 = vmatpush1.msra.mxu0 0.0
  %2608 = vmatprep.subr.mxu0 0.0
  %2609 = vmatpush1.msra.mxu0 0.0
  %2610 = vmatprep.subr.mxu0 0.0
  %2611 = vmatpush1.msra.mxu0 0.0
  %2612 = vmatprep.subr.mxu0 0.0
  %2613 = vmatpush1.msra.mxu0 0.0
  %2614 = vmatprep.subr.mxu0 0.0
  %2615 = vmatpush1.msra.mxu0 0.0
  %2616 = vmatprep.subr.mxu0 0.0
  %2617 = vmatpush1.msra.mxu0 0.0
  %2618 = vmatprep.subr.mxu0 0.0
  %2619 = vmatpush1.msra.mxu0 0.0
  %2620 = vmatprep.subr.mxu0 0.0
  %2621 = vmatpush1.msra.mxu0 0.0
  %2622 = vmatprep.subr.mxu0 0.0
  %2623 = vmatpush1.msra.mxu0 0.0
  %2624 = vmatprep.subr.mxu0 0.0
  %2625 = vmatpush1.msra.mxu0 0.0
  %2626 = vmatprep.subr.mxu0 0.0
  %2627 = vmatpush1.msra.mxu0 %v2547
  %2628 = vmatprep.subr.mxu0 0.0
  %2629 = vmatpush2.msra.mxu0 0.0
  %2630 = vmatprep.subr.mxu0 0.0
  %2631 = vmatpush2.msra.mxu0 0.0
  %2632 = vmatprep.subr.mxu0 0.0
  %2633 = vmatpush2.msra.mxu0 0.0
  %2634 = vmatprep.subr.mxu0 0.0
  %2635 = vmatpush2.msra.mxu0 0.0
  %2636 = vmatprep.subr.mxu0 0.0
  %2637 = vmatpush2.msra.mxu0 0.0
  %2638 = vmatprep.subr.mxu0 0.0
  %2639 = vmatpush2.msra.mxu0 0.0
  %2640 = vmatprep.subr.mxu0 0.0
  %2641 = vmatpush2.msra.mxu0 0.0
  %2642 = vmatprep.subr.mxu0 0.0
  %2643 = vmatpush2.msra.mxu0 0.0
  %2644 = vmatprep.subr.mxu0 0.0
  %2645 = vmatpush2.msra.mxu0 0.0
  %2646 = vmatprep.subr.mxu0 0.0
  %2647 = vmatpush2.msra.mxu0 0.0
  %2648 = vmatprep.subr.mxu0 0.0
  %2649 = vmatpush2.msra.mxu0 0.0
  %2650 = vmatprep.subr.mxu0 0.0
  %2651 = vmatpush2.msra.mxu0 0.0
  %2652 = vmatprep.subr.mxu0 0.0
  %2653 = vmatpush2.msra.mxu0 0.0
  %2654 = vmatprep.subr.mxu0 0.0
  %2655 = vmatpush2.msra.mxu0 0.0
  %2656 = vmatprep.subr.mxu0 0.0
  %2657 = vmatpush2.msra.mxu0 0.0
  %2658 = vmatprep.subr.mxu0 0.0
  %2659 = vmatpush2.msra.mxu0 0.0
  %2660 = vmatprep.mubr.f32.mxu0 0.0
  %2661 = vmatmul.mubr.f32.gmra.mxu0 %v2549
  %v2662 = vpop.f32.mrf.mxu0
  %v2663 = vadd.f32 0.0, %v2662
  %v2664 = vpop.f32.mrf.mxu0
  %2665 = vmatprep.mubr.f32.mxu0 0.0
  %2666 = vmatmul.mubr.f32.gmra.mxu0 %v2552
  %v2667 = vpop.f32.mrf.mxu0
  %v2668 = vadd.f32 0.0, %v2667
  %v2669 = vpop.f32.mrf.mxu0
  %2670 = vmatprep.mubr.f32.mxu0 0.0
  %2671 = vmatmul.mubr.f32.gmra.mxu0 %v2555
  %v2672 = vpop.f32.mrf.mxu0
  %v2673 = vadd.f32 0.0, %v2672
  %v2674 = vpop.f32.mrf.mxu0
  %2675 = vmatprep.mubr.f32.mxu0 0.0
  %2676 = vmatmul.mubr.f32.gmra.mxu0 %v2558
  %v2677 = vpop.f32.mrf.mxu0
  %v2678 = vadd.f32 0.0, %v2677
  %v2679 = vpop.f32.mrf.mxu0
  %2680 = vmatprep.mubr.f32.mxu0 0.0
  %2681 = vmatmul.mubr.f32.gmra.mxu0 %v2561
  %v2682 = vpop.f32.mrf.mxu0
  %v2683 = vadd.f32 0.0, %v2682
  %v2684 = vpop.f32.mrf.mxu0
  %2685 = vmatprep.mubr.f32.mxu0 0.0
  %2686 = vmatmul.mubr.f32.gmra.mxu0 %v2564
  %v2687 = vpop.f32.mrf.mxu0
  %v2688 = vadd.f32 0.0, %v2687
  %v2689 = vpop.f32.mrf.mxu0
  %2690 = vmatprep.mubr.f32.mxu0 0.0
  %2691 = vmatmul.mubr.f32.gmra.mxu0 %v2567
  %v2692 = vpop.f32.mrf.mxu0
  %v2693 = vadd.f32 0.0, %v2692
  %v2694 = vpop.f32.mrf.mxu0
  %2695 = vmatprep.mubr.f32.mxu0 0.0
  %2696 = vmatmul.mubr.f32.gmra.mxu0 %v2570
  %v2697 = vpop.f32.mrf.mxu0
  %v2698 = vadd.f32 0.0, %v2697
  %v2699 = vpop.f32.mrf.mxu0
  %2700 = vmatprep.mubr.f32.mxu0 0.0
  %2701 = vmatmul.mubr.f32.gmra.mxu0 %v2573
  %v2702 = vpop.f32.mrf.mxu0
  %v2703 = vadd.f32 0.0, %v2702
  %v2704 = vpop.f32.mrf.mxu0
  %2705 = vmatprep.mubr.f32.mxu0 0.0
  %2706 = vmatmul.mubr.f32.gmra.mxu0 %v2576
  %v2707 = vpop.f32.mrf.mxu0
  %v2708 = vadd.f32 0.0, %v2707
  %v2709 = vpop.f32.mrf.mxu0
  %2710 = vmatprep.mubr.f32.mxu0 0.0
  %2711 = vmatmul.mubr.f32.gmra.mxu0 %v2579
  %v2712 = vpop.f32.mrf.mxu0
  %v2713 = vadd.f32 0.0, %v2712
  %v2714 = vpop.f32.mrf.mxu0
  %2715 = vmatprep.mubr.f32.mxu0 0.0
  %2716 = vmatmul.mubr.f32.gmra.mxu0 %v2582
  %v2717 = vpop.f32.mrf.mxu0
  %v2718 = vadd.f32 0.0, %v2717
  %v2719 = vpop.f32.mrf.mxu0
  %2720 = vmatprep.mubr.f32.mxu0 0.0
  %2721 = vmatmul.mubr.f32.gmra.mxu0 %v2585
  %v2722 = vpop.f32.mrf.mxu0
  %v2723 = vadd.f32 0.0, %v2722
  %v2724 = vpop.f32.mrf.mxu0
  %2725 = vmatprep.mubr.f32.mxu0 0.0
  %2726 = vmatmul.mubr.f32.gmra.mxu0 %v2588
  %v2727 = vpop.f32.mrf.mxu0
  %v2728 = vadd.f32 0.0, %v2727
  %v2729 = vpop.f32.mrf.mxu0
  %2730 = vmatprep.mubr.f32.mxu0 0.0
  %2731 = vmatmul.mubr.f32.gmra.mxu0 %v2591
  %v2732 = vpop.f32.mrf.mxu0
  %v2733 = vadd.f32 0.0, %v2732
  %v2734 = vpop.f32.mrf.mxu0
  %2735 = vmatprep.mubr.f32.mxu0 0.0
  %2736 = vmatmul.mubr.f32.gmra.mxu0 %v2594
  %v2737 = vpop.f32.mrf.mxu0
  %v2738 = vadd.f32 0.0, %v2737
  %v2739 = vpop.f32.mrf.mxu0
  %2740 = vdwg.mxu0
  %v2741 = vadd.f32 %v2531, %v2663
  %v2742 = vadd.f32 %v2532, %v2668
  %v2743 = vadd.f32 %v2533, %v2673
  %v2744 = vadd.f32 %v2534, %v2678
  %v2745 = vadd.f32 %v2535, %v2683
  %v2746 = vadd.f32 %v2536, %v2688
  %v2747 = vadd.f32 %v2537, %v2693
  %v2748 = vadd.f32 %v2538, %v2698
  %v2749 = vadd.f32 %v2539, %v2703
  %v2750 = vadd.f32 %v2540, %v2708
  %v2751 = vadd.f32 %v2541, %v2713
  %v2752 = vadd.f32 %v2542, %v2718
  %v2753 = vadd.f32 %v2543, %v2723
  %v2754 = vadd.f32 %v2544, %v2728
  %v2755 = vadd.f32 %v2545, %v2733
  %v2756 = vadd.f32 %v2546, %v2738
  %v2757 = vld [vmem:[%s3 + $0x40] sm:$0xff]
  %v2759 = vsel %vm895, %v1093, 0
  %v2762 = vsel %vm895, %v1094, 0
  %v2765 = vsel %vm895, %v1095, 0
  %v2768 = vsel %vm895, %v1096, 0
  %v2771 = vsel %vm895, %v1097, 0
  %v2774 = vsel %vm895, %v1098, 0
  %v2777 = vsel %vm895, %v1099, 0
  %v2780 = vsel %vm895, %v1100, 0
  %v2783 = vsel %vm895, %v1101, 0
  %v2786 = vsel %vm895, %v1102, 0
  %v2789 = vsel %vm895, %v1103, 0
  %v2792 = vsel %vm895, %v1104, 0
  %v2795 = vsel %vm895, %v1105, 0
  %v2798 = vsel %vm895, %v1106, 0
  %v2801 = vsel %vm895, %v1107, 0
  %v2804 = vsel %vm895, %v1108, 0
  %2806 = vmatprep.subr.mxu0 0.0
  %2807 = vmatpush1.msra.mxu0 0.0
  %2808 = vmatprep.subr.mxu0 0.0
  %2809 = vmatpush1.msra.mxu0 0.0
  %2810 = vmatprep.subr.mxu0 0.0
  %2811 = vmatpush1.msra.mxu0 0.0
  %2812 = vmatprep.subr.mxu0 0.0
  %2813 = vmatpush1.msra.mxu0 0.0
  %2814 = vmatprep.subr.mxu0 0.0
  %2815 = vmatpush1.msra.mxu0 0.0
  %2816 = vmatprep.subr.mxu0 0.0
  %2817 = vmatpush1.msra.mxu0 0.0
  %2818 = vmatprep.subr.mxu0 0.0
  %2819 = vmatpush1.msra.mxu0 0.0
  %2820 = vmatprep.subr.mxu0 0.0
  %2821 = vmatpush1.msra.mxu0 0.0
  %2822 = vmatprep.subr.mxu0 0.0
  %2823 = vmatpush1.msra.mxu0 0.0
  %2824 = vmatprep.subr.mxu0 0.0
  %2825 = vmatpush1.msra.mxu0 0.0
  %2826 = vmatprep.subr.mxu0 0.0
  %2827 = vmatpush1.msra.mxu0 0.0
  %2828 = vmatprep.subr.mxu0 0.0
  %2829 = vmatpush1.msra.mxu0 0.0
  %2830 = vmatprep.subr.mxu0 0.0
  %2831 = vmatpush1.msra.mxu0 0.0
  %2832 = vmatprep.subr.mxu0 0.0
  %2833 = vmatpush1.msra.mxu0 0.0
  %2834 = vmatprep.subr.mxu0 0.0
  %2835 = vmatpush1.msra.mxu0 0.0
  %2836 = vmatprep.subr.mxu0 0.0
  %2837 = vmatpush1.msra.mxu0 %v2757
  %2838 = vmatprep.subr.mxu0 0.0
  %2839 = vmatpush2.msra.mxu0 0.0
  %2840 = vmatprep.subr.mxu0 0.0
  %2841 = vmatpush2.msra.mxu0 0.0
  %2842 = vmatprep.subr.mxu0 0.0
  %2843 = vmatpush2.msra.mxu0 0.0
  %2844 = vmatprep.subr.mxu0 0.0
  %2845 = vmatpush2.msra.mxu0 0.0
  %2846 = vmatprep.subr.mxu0 0.0
  %2847 = vmatpush2.msra.mxu0 0.0
  %2848 = vmatprep.subr.mxu0 0.0
  %2849 = vmatpush2.msra.mxu0 0.0
  %2850 = vmatprep.subr.mxu0 0.0
  %2851 = vmatpush2.msra.mxu0 0.0
  %2852 = vmatprep.subr.mxu0 0.0
  %2853 = vmatpush2.msra.mxu0 0.0
  %2854 = vmatprep.subr.mxu0 0.0
  %2855 = vmatpush2.msra.mxu0 0.0
  %2856 = vmatprep.subr.mxu0 0.0
  %2857 = vmatpush2.msra.mxu0 0.0
  %2858 = vmatprep.subr.mxu0 0.0
  %2859 = vmatpush2.msra.mxu0 0.0
  %2860 = vmatprep.subr.mxu0 0.0
  %2861 = vmatpush2.msra.mxu0 0.0
  %2862 = vmatprep.subr.mxu0 0.0
  %2863 = vmatpush2.msra.mxu0 0.0
  %2864 = vmatprep.subr.mxu0 0.0
  %2865 = vmatpush2.msra.mxu0 0.0
  %2866 = vmatprep.subr.mxu0 0.0
  %2867 = vmatpush2.msra.mxu0 0.0
  %2868 = vmatprep.subr.mxu0 0.0
  %2869 = vmatpush2.msra.mxu0 0.0
  %2870 = vmatprep.mubr.f32.mxu0 0.0
  %2871 = vmatmul.mubr.f32.gmra.mxu0 %v2759
  %v2872 = vpop.f32.mrf.mxu0
  %v2873 = vadd.f32 0.0, %v2872
  %v2874 = vpop.f32.mrf.mxu0
  %2875 = vmatprep.mubr.f32.mxu0 0.0
  %2876 = vmatmul.mubr.f32.gmra.mxu0 %v2762
  %v2877 = vpop.f32.mrf.mxu0
  %v2878 = vadd.f32 0.0, %v2877
  %v2879 = vpop.f32.mrf.mxu0
  %2880 = vmatprep.mubr.f32.mxu0 0.0
  %2881 = vmatmul.mubr.f32.gmra.mxu0 %v2765
  %v2882 = vpop.f32.mrf.mxu0
  %v2883 = vadd.f32 0.0, %v2882
  %v2884 = vpop.f32.mrf.mxu0
  %2885 = vmatprep.mubr.f32.mxu0 0.0
  %2886 = vmatmul.mubr.f32.gmra.mxu0 %v2768
  %v2887 = vpop.f32.mrf.mxu0
  %v2888 = vadd.f32 0.0, %v2887
  %v2889 = vpop.f32.mrf.mxu0
  %2890 = vmatprep.mubr.f32.mxu0 0.0
  %2891 = vmatmul.mubr.f32.gmra.mxu0 %v2771
  %v2892 = vpop.f32.mrf.mxu0
  %v2893 = vadd.f32 0.0, %v2892
  %v2894 = vpop.f32.mrf.mxu0
  %2895 = vmatprep.mubr.f32.mxu0 0.0
  %2896 = vmatmul.mubr.f32.gmra.mxu0 %v2774
  %v2897 = vpop.f32.mrf.mxu0
  %v2898 = vadd.f32 0.0, %v2897
  %v2899 = vpop.f32.mrf.mxu0
  %2900 = vmatprep.mubr.f32.mxu0 0.0
  %2901 = vmatmul.mubr.f32.gmra.mxu0 %v2777
  %v2902 = vpop.f32.mrf.mxu0
  %v2903 = vadd.f32 0.0, %v2902
  %v2904 = vpop.f32.mrf.mxu0
  %2905 = vmatprep.mubr.f32.mxu0 0.0
  %2906 = vmatmul.mubr.f32.gmra.mxu0 %v2780
  %v2907 = vpop.f32.mrf.mxu0
  %v2908 = vadd.f32 0.0, %v2907
  %v2909 = vpop.f32.mrf.mxu0
  %2910 = vmatprep.mubr.f32.mxu0 0.0
  %2911 = vmatmul.mubr.f32.gmra.mxu0 %v2783
  %v2912 = vpop.f32.mrf.mxu0
  %v2913 = vadd.f32 0.0, %v2912
  %v2914 = vpop.f32.mrf.mxu0
  %2915 = vmatprep.mubr.f32.mxu0 0.0
  %2916 = vmatmul.mubr.f32.gmra.mxu0 %v2786
  %v2917 = vpop.f32.mrf.mxu0
  %v2918 = vadd.f32 0.0, %v2917
  %v2919 = vpop.f32.mrf.mxu0
  %2920 = vmatprep.mubr.f32.mxu0 0.0
  %2921 = vmatmul.mubr.f32.gmra.mxu0 %v2789
  %v2922 = vpop.f32.mrf.mxu0
  %v2923 = vadd.f32 0.0, %v2922
  %v2924 = vpop.f32.mrf.mxu0
  %2925 = vmatprep.mubr.f32.mxu0 0.0
  %2926 = vmatmul.mubr.f32.gmra.mxu0 %v2792
  %v2927 = vpop.f32.mrf.mxu0
  %v2928 = vadd.f32 0.0, %v2927
  %v2929 = vpop.f32.mrf.mxu0
  %2930 = vmatprep.mubr.f32.mxu0 0.0
  %2931 = vmatmul.mubr.f32.gmra.mxu0 %v2795
  %v2932 = vpop.f32.mrf.mxu0
  %v2933 = vadd.f32 0.0, %v2932
  %v2934 = vpop.f32.mrf.mxu0
  %2935 = vmatprep.mubr.f32.mxu0 0.0
  %2936 = vmatmul.mubr.f32.gmra.mxu0 %v2798
  %v2937 = vpop.f32.mrf.mxu0
  %v2938 = vadd.f32 0.0, %v2937
  %v2939 = vpop.f32.mrf.mxu0
  %2940 = vmatprep.mubr.f32.mxu0 0.0
  %2941 = vmatmul.mubr.f32.gmra.mxu0 %v2801
  %v2942 = vpop.f32.mrf.mxu0
  %v2943 = vadd.f32 0.0, %v2942
  %v2944 = vpop.f32.mrf.mxu0
  %2945 = vmatprep.mubr.f32.mxu0 0.0
  %2946 = vmatmul.mubr.f32.gmra.mxu0 %v2804
  %v2947 = vpop.f32.mrf.mxu0
  %v2948 = vadd.f32 0.0, %v2947
  %v2949 = vpop.f32.mrf.mxu0
  %2950 = vdwg.mxu0
  %v2951 = vadd.f32 %v2741, %v2873
  %v2952 = vadd.f32 %v2742, %v2878
  %v2953 = vadd.f32 %v2743, %v2883
  %v2954 = vadd.f32 %v2744, %v2888
  %v2955 = vadd.f32 %v2745, %v2893
  %v2956 = vadd.f32 %v2746, %v2898
  %v2957 = vadd.f32 %v2747, %v2903
  %v2958 = vadd.f32 %v2748, %v2908
  %v2959 = vadd.f32 %v2749, %v2913
  %v2960 = vadd.f32 %v2750, %v2918
  %v2961 = vadd.f32 %v2751, %v2923
  %v2962 = vadd.f32 %v2752, %v2928
  %v2963 = vadd.f32 %v2753, %v2933
  %v2964 = vadd.f32 %v2754, %v2938
  %v2965 = vadd.f32 %v2755, %v2943
  %v2966 = vadd.f32 %v2756, %v2948
  %vm2967 = vcmp.gt.f32.partialorder %v2951, 0.0
  %vm2968 = vcmp.gt.f32.partialorder %v2952, 0.0
  %vm2969 = vcmp.gt.f32.partialorder %v2953, 0.0
  %vm2970 = vcmp.gt.f32.partialorder %v2954, 0.0
  %vm2971 = vcmp.gt.f32.partialorder %v2955, 0.0
  %vm2972 = vcmp.gt.f32.partialorder %v2956, 0.0
  %vm2973 = vcmp.gt.f32.partialorder %v2957, 0.0
  %vm2974 = vcmp.gt.f32.partialorder %v2958, 0.0
  %vm2975 = vcmp.gt.f32.partialorder %v2959, 0.0
  %vm2976 = vcmp.gt.f32.partialorder %v2960, 0.0
  %vm2977 = vcmp.gt.f32.partialorder %v2961, 0.0
  %vm2978 = vcmp.gt.f32.partialorder %v2962, 0.0
  %vm2979 = vcmp.gt.f32.partialorder %v2963, 0.0
  %vm2980 = vcmp.gt.f32.partialorder %v2964, 0.0
  %vm2981 = vcmp.gt.f32.partialorder %v2965, 0.0
  %vm2982 = vcmp.gt.f32.partialorder %v2966, 0.0
  %v2983 = vmul.f32 %v2951, 0.2
  %v2984 = vmul.f32 %v2952, 0.2
  %v2985 = vmul.f32 %v2953, 0.2
  %v2986 = vmul.f32 %v2954, 0.2
  %v2987 = vmul.f32 %v2955, 0.2
  %v2988 = vmul.f32 %v2956, 0.2
  %v2989 = vmul.f32 %v2957, 0.2
  %v2990 = vmul.f32 %v2958, 0.2
  %v2991 = vmul.f32 %v2959, 0.2
  %v2992 = vmul.f32 %v2960, 0.2
  %v2993 = vmul.f32 %v2961, 0.2
  %v2994 = vmul.f32 %v2962, 0.2
  %v2995 = vmul.f32 %v2963, 0.2
  %v2996 = vmul.f32 %v2964, 0.2
  %v2997 = vmul.f32 %v2965, 0.2
  %v2998 = vmul.f32 %v2966, 0.2
  %v2999 = vsel %vm2967, %v2951, %v2983
  %v3000 = vsel %vm2968, %v2952, %v2984
  %v3001 = vsel %vm2969, %v2953, %v2985
  %v3002 = vsel %vm2970, %v2954, %v2986
  %v3003 = vsel %vm2971, %v2955, %v2987
  %v3004 = vsel %vm2972, %v2956, %v2988
  %v3005 = vsel %vm2973, %v2957, %v2989
  %v3006 = vsel %vm2974, %v2958, %v2990
  %v3007 = vsel %vm2975, %v2959, %v2991
  %v3008 = vsel %vm2976, %v2960, %v2992
  %v3009 = vsel %vm2977, %v2961, %v2993
  %v3010 = vsel %vm2978, %v2962, %v2994
  %v3011 = vsel %vm2979, %v2963, %v2995
  %v3012 = vsel %vm2980, %v2964, %v2996
  %v3013 = vsel %vm2981, %v2965, %v2997
  %v3014 = vsel %vm2982, %v2966, %v2998
  %v3015 = vld [vmem:[%s1] sm:$0xff]
  %v3016 = vld [vmem:[%s1 + $0x8] sm:$0xff]
  %v3017 = vld [vmem:[%s1 + $0x10] sm:$0xff]
  %v3018 = vld [vmem:[%s1 + $0x18] sm:$0xff]
  %v3019 = vld [vmem:[%s1 + $0x20] sm:$0xff]
  %v3020 = vld [vmem:[%s1 + $0x28] sm:$0xff]
  %v3021 = vld [vmem:[%s1 + $0x30] sm:$0xff]
  %v3022 = vld [vmem:[%s1 + $0x38] sm:$0xff]
  %v3023 = vld [vmem:[%s1 + $0x40] sm:$0xff]
  %v3024 = vld [vmem:[%s1 + $0x48] sm:$0xff]
  %v3025 = vld [vmem:[%s1 + $0x50] sm:$0xff]
  %v3026 = vld [vmem:[%s1 + $0x58] sm:$0xff]
  %v3027 = vld [vmem:[%s1 + $0x60] sm:$0xff]
  %v3028 = vld [vmem:[%s1 + $0x68] sm:$0xff]
  %v3029 = vld [vmem:[%s1 + $0x70] sm:$0xff]
  %v3030 = vld [vmem:[%s1 + $0x78] sm:$0xff]
  %v3031 = vld [vmem:[%s4] sm:$0xf]
  %v3032 = vld [vmem:[%s5] sm:$0x1]
  %v3034 = vlaneseq
  %v3035 = vshrl.u32 %v3034, 7
  %v3036 = vsub.s32 0, %v3035
  %v3037 = vrot.slane %v3032, %v3036
  %vm3039 = vcmask 31744
  %v3041 = vsel %vm3039, %v3015, 0
  %v3044 = vsel %vm3039, %v3016, 0
  %v3047 = vsel %vm3039, %v3017, 0
  %v3050 = vsel %vm3039, %v3018, 0
  %v3053 = vsel %vm3039, %v3019, 0
  %v3056 = vsel %vm3039, %v3020, 0
  %v3059 = vsel %vm3039, %v3021, 0
  %v3062 = vsel %vm3039, %v3022, 0
  %v3065 = vsel %vm3039, %v3023, 0
  %v3068 = vsel %vm3039, %v3024, 0
  %v3071 = vsel %vm3039, %v3025, 0
  %v3074 = vsel %vm3039, %v3026, 0
  %v3077 = vsel %vm3039, %v3027, 0
  %v3080 = vsel %vm3039, %v3028, 0
  %v3083 = vsel %vm3039, %v3029, 0
  %v3086 = vsel %vm3039, %v3030, 0
  %vm3088 = vcmask 1043456
  %v3090 = vsel %vm3088, %v3031, 0
  %3092 = vmatprep.subr.mxu0 0.0
  %3093 = vmatpush1.msra.mxu0 0.0
  %3094 = vmatprep.subr.mxu0 0.0
  %3095 = vmatpush1.msra.mxu0 0.0
  %3096 = vmatprep.subr.mxu0 0.0
  %3097 = vmatpush1.msra.mxu0 0.0
  %3098 = vmatprep.subr.mxu0 0.0
  %3099 = vmatpush1.msra.mxu0 0.0
  %3100 = vmatprep.subr.mxu0 0.0
  %3101 = vmatpush1.msra.mxu0 0.0
  %3102 = vmatprep.subr.mxu0 0.0
  %3103 = vmatpush1.msra.mxu0 0.0
  %3104 = vmatprep.subr.mxu0 0.0
  %3105 = vmatpush1.msra.mxu0 0.0
  %3106 = vmatprep.subr.mxu0 0.0
  %3107 = vmatpush1.msra.mxu0 0.0
  %3108 = vmatprep.subr.mxu0 0.0
  %3109 = vmatpush1.msra.mxu0 0.0
  %3110 = vmatprep.subr.mxu0 0.0
  %3111 = vmatpush1.msra.mxu0 0.0
  %3112 = vmatprep.subr.mxu0 0.0
  %3113 = vmatpush1.msra.mxu0 0.0
  %3114 = vmatprep.subr.mxu0 0.0
  %3115 = vmatpush1.msra.mxu0 0.0
  %3116 = vmatprep.subr.mxu0 0.0
  %3117 = vmatpush1.msra.mxu0 0.0
  %3118 = vmatprep.subr.mxu0 0.0
  %3119 = vmatpush1.msra.mxu0 0.0
  %3120 = vmatprep.subr.mxu0 0.0
  %3121 = vmatpush1.msra.mxu0 0.0
  %3122 = vmatprep.subr.mxu0 0.0
  %3123 = vmatpush1.msra.mxu0 %v3090
  %3124 = vmatprep.subr.mxu0 0.0
  %3125 = vmatpush2.msra.mxu0 0.0
  %3126 = vmatprep.subr.mxu0 0.0
  %3127 = vmatpush2.msra.mxu0 0.0
  %3128 = vmatprep.subr.mxu0 0.0
  %3129 = vmatpush2.msra.mxu0 0.0
  %3130 = vmatprep.subr.mxu0 0.0
  %3131 = vmatpush2.msra.mxu0 0.0
  %3132 = vmatprep.subr.mxu0 0.0
  %3133 = vmatpush2.msra.mxu0 0.0
  %3134 = vmatprep.subr.mxu0 0.0
  %3135 = vmatpush2.msra.mxu0 0.0
  %3136 = vmatprep.subr.mxu0 0.0
  %3137 = vmatpush2.msra.mxu0 0.0
  %3138 = vmatprep.subr.mxu0 0.0
  %3139 = vmatpush2.msra.mxu0 0.0
  %3140 = vmatprep.subr.mxu0 0.0
  %3141 = vmatpush2.msra.mxu0 0.0
  %3142 = vmatprep.subr.mxu0 0.0
  %3143 = vmatpush2.msra.mxu0 0.0
  %3144 = vmatprep.subr.mxu0 0.0
  %3145 = vmatpush2.msra.mxu0 0.0
  %3146 = vmatprep.subr.mxu0 0.0
  %3147 = vmatpush2.msra.mxu0 0.0
  %3148 = vmatprep.subr.mxu0 0.0
  %3149 = vmatpush2.msra.mxu0 0.0
  %3150 = vmatprep.subr.mxu0 0.0
  %3151 = vmatpush2.msra.mxu0 0.0
  %3152 = vmatprep.subr.mxu0 0.0
  %3153 = vmatpush2.msra.mxu0 0.0
  %3154 = vmatprep.subr.mxu0 0.0
  %3155 = vmatpush2.msra.mxu0 0.0
  %3156 = vmatprep.mubr.f32.mxu0 0.0
  %3157 = vmatmul.mubr.f32.gmra.mxu0 %v3041
  %v3158 = vpop.f32.mrf.mxu0
  %v3159 = vadd.f32 %v3037, %v3158
  %v3160 = vpop.f32.mrf.mxu0
  %3161 = vmatprep.mubr.f32.mxu0 0.0
  %3162 = vmatmul.mubr.f32.gmra.mxu0 %v3044
  %v3163 = vpop.f32.mrf.mxu0
  %v3164 = vadd.f32 %v3037, %v3163
  %v3165 = vpop.f32.mrf.mxu0
  %3166 = vmatprep.mubr.f32.mxu0 0.0
  %3167 = vmatmul.mubr.f32.gmra.mxu0 %v3047
  %v3168 = vpop.f32.mrf.mxu0
  %v3169 = vadd.f32 %v3037, %v3168
  %v3170 = vpop.f32.mrf.mxu0
  %3171 = vmatprep.mubr.f32.mxu0 0.0
  %3172 = vmatmul.mubr.f32.gmra.mxu0 %v3050
  %v3173 = vpop.f32.mrf.mxu0
  %v3174 = vadd.f32 %v3037, %v3173
  %v3175 = vpop.f32.mrf.mxu0
  %3176 = vmatprep.mubr.f32.mxu0 0.0
  %3177 = vmatmul.mubr.f32.gmra.mxu0 %v3053
  %v3178 = vpop.f32.mrf.mxu0
  %v3179 = vadd.f32 %v3037, %v3178
  %v3180 = vpop.f32.mrf.mxu0
  %3181 = vmatprep.mubr.f32.mxu0 0.0
  %3182 = vmatmul.mubr.f32.gmra.mxu0 %v3056
  %v3183 = vpop.f32.mrf.mxu0
  %v3184 = vadd.f32 %v3037, %v3183
  %v3185 = vpop.f32.mrf.mxu0
  %3186 = vmatprep.mubr.f32.mxu0 0.0
  %3187 = vmatmul.mubr.f32.gmra.mxu0 %v3059
  %v3188 = vpop.f32.mrf.mxu0
  %v3189 = vadd.f32 %v3037, %v3188
  %v3190 = vpop.f32.mrf.mxu0
  %3191 = vmatprep.mubr.f32.mxu0 0.0
  %3192 = vmatmul.mubr.f32.gmra.mxu0 %v3062
  %v3193 = vpop.f32.mrf.mxu0
  %v3194 = vadd.f32 %v3037, %v3193
  %v3195 = vpop.f32.mrf.mxu0
  %3196 = vmatprep.mubr.f32.mxu0 0.0
  %3197 = vmatmul.mubr.f32.gmra.mxu0 %v3065
  %v3198 = vpop.f32.mrf.mxu0
  %v3199 = vadd.f32 %v3037, %v3198
  %v3200 = vpop.f32.mrf.mxu0
  %3201 = vmatprep.mubr.f32.mxu0 0.0
  %3202 = vmatmul.mubr.f32.gmra.mxu0 %v3068
  %v3203 = vpop.f32.mrf.mxu0
  %v3204 = vadd.f32 %v3037, %v3203
  %v3205 = vpop.f32.mrf.mxu0
  %3206 = vmatprep.mubr.f32.mxu0 0.0
  %3207 = vmatmul.mubr.f32.gmra.mxu0 %v3071
  %v3208 = vpop.f32.mrf.mxu0
  %v3209 = vadd.f32 %v3037, %v3208
  %v3210 = vpop.f32.mrf.mxu0
  %3211 = vmatprep.mubr.f32.mxu0 0.0
  %3212 = vmatmul.mubr.f32.gmra.mxu0 %v3074
  %v3213 = vpop.f32.mrf.mxu0
  %v3214 = vadd.f32 %v3037, %v3213
  %v3215 = vpop.f32.mrf.mxu0
  %3216 = vmatprep.mubr.f32.mxu0 0.0
  %3217 = vmatmul.mubr.f32.gmra.mxu0 %v3077
  %v3218 = vpop.f32.mrf.mxu0
  %v3219 = vadd.f32 %v3037, %v3218
  %v3220 = vpop.f32.mrf.mxu0
  %3221 = vmatprep.mubr.f32.mxu0 0.0
  %3222 = vmatmul.mubr.f32.gmra.mxu0 %v3080
  %v3223 = vpop.f32.mrf.mxu0
  %v3224 = vadd.f32 %v3037, %v3223
  %v3225 = vpop.f32.mrf.mxu0
  %3226 = vmatprep.mubr.f32.mxu0 0.0
  %3227 = vmatmul.mubr.f32.gmra.mxu0 %v3083
  %v3228 = vpop.f32.mrf.mxu0
  %v3229 = vadd.f32 %v3037, %v3228
  %v3230 = vpop.f32.mrf.mxu0
  %3231 = vmatprep.mubr.f32.mxu0 0.0
  %3232 = vmatmul.mubr.f32.gmra.mxu0 %v3086
  %v3233 = vpop.f32.mrf.mxu0
  %v3234 = vadd.f32 %v3037, %v3233
  %v3235 = vpop.f32.mrf.mxu0
  %3236 = vdwg.mxu0
  %s3237 = sld [smem:[#allocation3]]
  %v3238 = vstv %s3237
  %v3239 = vmul.f32 %v3238, %v2999
  %v3240 = vmul.f32 %v3238, %v3000
  %v3241 = vmul.f32 %v3238, %v3001
  %v3242 = vmul.f32 %v3238, %v3002
  %v3243 = vmul.f32 %v3238, %v3003
  %v3244 = vmul.f32 %v3238, %v3004
  %v3245 = vmul.f32 %v3238, %v3005
  %v3246 = vmul.f32 %v3238, %v3006
  %v3247 = vmul.f32 %v3238, %v3007
  %v3248 = vmul.f32 %v3238, %v3008
  %v3249 = vmul.f32 %v3238, %v3009
  %v3250 = vmul.f32 %v3238, %v3010
  %v3251 = vmul.f32 %v3238, %v3011
  %v3252 = vmul.f32 %v3238, %v3012
  %v3253 = vmul.f32 %v3238, %v3013
  %v3254 = vmul.f32 %v3238, %v3014
  %v3255 = vadd.f32 %v3159, %v3239
  %v3256 = vadd.f32 %v3164, %v3240
  %v3257 = vadd.f32 %v3169, %v3241
  %v3258 = vadd.f32 %v3174, %v3242
  %v3259 = vadd.f32 %v3179, %v3243
  %v3260 = vadd.f32 %v3184, %v3244
  %v3261 = vadd.f32 %v3189, %v3245
  %v3262 = vadd.f32 %v3194, %v3246
  %v3263 = vadd.f32 %v3199, %v3247
  %v3264 = vadd.f32 %v3204, %v3248
  %v3265 = vadd.f32 %v3209, %v3249
  %v3266 = vadd.f32 %v3214, %v3250
  %v3267 = vadd.f32 %v3219, %v3251
  %v3268 = vadd.f32 %v3224, %v3252
  %v3269 = vadd.f32 %v3229, %v3253
  %v3270 = vadd.f32 %v3234, %v3254
  %3271 = vst.msk [vmem:[%s7] sm:$0xff] %vm895, %v3255
  %3272 = vst.msk [vmem:[%s7 + $0x8] sm:$0xff] %vm895, %v3256
  %3273 = vst.msk [vmem:[%s7 + $0x10] sm:$0xff] %vm895, %v3257
  %3274 = vst.msk [vmem:[%s7 + $0x18] sm:$0xff] %vm895, %v3258
  %3275 = vst.msk [vmem:[%s7 + $0x20] sm:$0xff] %vm895, %v3259
  %3276 = vst.msk [vmem:[%s7 + $0x28] sm:$0xff] %vm895, %v3260
  %3277 = vst.msk [vmem:[%s7 + $0x30] sm:$0xff] %vm895, %v3261
  %3278 = vst.msk [vmem:[%s7 + $0x38] sm:$0xff] %vm895, %v3262
  %3279 = vst.msk [vmem:[%s7 + $0x40] sm:$0xff] %vm895, %v3263
  %3280 = vst.msk [vmem:[%s7 + $0x48] sm:$0xff] %vm895, %v3264
  %3281 = vst.msk [vmem:[%s7 + $0x50] sm:$0xff] %vm895, %v3265
  %3282 = vst.msk [vmem:[%s7 + $0x58] sm:$0xff] %vm895, %v3266
  %3283 = vst.msk [vmem:[%s7 + $0x60] sm:$0xff] %vm895, %v3267
  %3284 = vst.msk [vmem:[%s7 + $0x68] sm:$0xff] %vm895, %v3268
  %3285 = vst.msk [vmem:[%s7 + $0x70] sm:$0xff] %vm895, %v3269
  %3286 = vst.msk [vmem:[%s7 + $0x78] sm:$0xff] %vm895, %v3270
  // Predicated region
  $region30: #{resd_forward.1} parent=0 // pred_check
    _
  $region31: #{resd_forward.1} parent=0 // pred_check_branch
    %3288 = sbr.rel (0) target = $region33
  $region32: #{resd_forward.1} parent=0 // pred_region
    _
  $region33: #{resd_forward.1} parent=0 // pred_fallthru
    _
  // Predicated region
  $region34: #{resd_forward.1} parent=0 // pred_check
    _
  $region35: #{resd_forward.1} parent=0 // pred_check_branch
    %3290 = sbr.rel (0) target = $region37
  $region36: #{resd_forward.1} parent=0 // pred_region
    _
  $region37: #{resd_forward.1} parent=0 // pred_fallthru
    _

</llo_original>
